<compile_context>
chip_gen: v6e
topology: v6e:2x2x1
jax: 0.10.0
libtpu: 0.0.40
codegen_flags: <defaults>
</compile_context>

<pallas_src>
import functools

import jax
import jax.numpy as jnp
from jax import lax
from jax.experimental import pallas as pl
from jax.experimental.pallas import tpu as pltpu

EPS = 1e-5


def _round_up(x, m):
    return ((x + m - 1) // m) * m


# ----------------------------------------------------------------------------
# Fused residual-block kernel (single grid step, everything VMEM resident)
# ----------------------------------------------------------------------------
def _fused_resblock_kernel(x_ref, mask_ref, w1_ref, w2_ref, bn_ref, o_ref, *,
                           tap_offsets, inv_count, mt, cop, has_projection):
    x = x_ref[...]                       # (Cin_p, MT) f32, padded spatial flattened on lanes
    mask = mask_ref[...]                 # (1, MT)     f32, 1.0 on real voxels, 0.0 elsewhere

    def stack_taps(a):
        # (C, MT) f32 -> (27*C, MT) bf16: 27 constant lane shifts stacked on the contraction
        # axis.  Margins >= max|offset| guarantee roll wrap-around never reaches a valid lane;
        # garbage only lands on pad/margin lanes which are masked / never read back.
        parts = [a if off == 0 else pltpu.roll(a, shift=(-off) % mt, axis=1)
                 for off in tap_offsets]
        return jnp.concatenate(parts, axis=0).astype(jnp.bfloat16)

    def batchnorm(y, gamma, beta):
        # Single-pass masked batch stats (biased variance): var = E[y^2] - mean^2, all f32.
        ym = y * mask
        mean = jnp.sum(ym, axis=1, keepdims=True) * inv_count
        ex2 = jnp.sum(ym * y, axis=1, keepdims=True) * inv_count
        inv_std = lax.rsqrt(ex2 - mean * mean + EPS)
        return (y - mean) * (gamma * inv_std) + beta

    # conv1 (+ folded 1x1x1 shortcut projection) as one big-K bf16 MXU matmul, f32 accumulate.
    y1sc = jnp.dot(w1_ref[...], stack_taps(x), preferred_element_type=jnp.float32)
    if has_projection:
        y1, ysc = y1sc[:cop], y1sc[cop:]
        res = batchnorm(ysc, bn_ref[4], bn_ref[5])        # shortcut conv -> BN
    else:
        y1, res = y1sc, x                                 # identity shortcut (Cin == Cout)

    # bn1 -> relu (masked so pad/margin lanes feed zeros into conv2, matching zero padding).
    t1 = jnp.maximum(batchnorm(y1, bn_ref[0], bn_ref[1]), 0.0) * mask

    # conv2 as one big-K bf16 MXU matmul -> bn2 -> +residual -> relu.
    y2 = jnp.dot(w2_ref[...], stack_taps(t1), preferred_element_type=jnp.float32)
    o_ref[...] = jnp.maximum(batchnorm(y2, bn_ref[2], bn_ref[3]) + res, 0.0)


# ----------------------------------------------------------------------------
# Wrapper: layout plumbing (tiny tensors) + single pallas_call
# ----------------------------------------------------------------------------
@jax.jit
def residual_block_forward(x_ncdhw, params):
    N, Cin, D, H, W = x_ncdhw.shape
    Cout = params["conv1_w"].shape[0]
    has_projection = "sc_w" in params
    # Roll-trick invariants (review concern): 3x3x3 kernels with padding 1 only.
    assert params["conv1_w"].shape[2:] == (3, 3, 3)
    assert params["conv2_w"].shape[2:] == (3, 3, 3)
    if not has_projection:
        assert Cin == Cout

    Dp, Hp, Wp = D + 2, H + 2, W + 2
    S = N * Dp * Hp * Wp                        # padded-spatial flattened length
    Cip, Cop = _round_up(Cin, 8), _round_up(Cout, 8)

    max_off = Hp * Wp + Wp + 1                  # largest |tap shift| in padded flat coords
    lpad = _round_up(max_off, 128)              # left margin (also 128-aligns the valid region)
    mt = _round_up(lpad + S + max_off, 128)     # total lane width (multiple of 128)
    assert lpad >= max_off and (mt - lpad - S) >= max_off  # wrap never reaches a valid lane

    # ---- activation slab (Cin_p, MT) f32 + validity mask (all host tensors here are tiny) ----
    xp = jnp.pad(x_ncdhw.astype(jnp.float32), ((0, 0), (0, 0), (1, 1), (1, 1), (1, 1)))
    x2 = jnp.transpose(xp, (1, 0, 2, 3, 4)).reshape(Cin, S)
    x_buf = jnp.pad(x2, ((0, Cip - Cin), (lpad, mt - lpad - S)))

    valid = jnp.pad(jnp.ones((N, D, H, W), jnp.float32), ((0, 0), (1, 1), (1, 1), (1, 1)))
    mask = jnp.pad(valid.reshape(1, S), ((0, 0), (lpad, mt - lpad - S)))

    # ---- weights: lane-dense, tap-major stacked (Cout_p, 27*Cin_p), K index = t*Cin_p + ci ----
    def stack_w(w, ci, ci_p):
        co = w.shape[0]
        wt = w.astype(jnp.float32).reshape(co, ci, 27)        # t = kd*9 + kh*3 + kw
        wt = jnp.pad(wt, ((0, Cop - co), (0, ci_p - ci), (0, 0)))
        return jnp.transpose(wt, (0, 2, 1)).reshape(Cop, 27 * ci_p)

    w1 = stack_w(params["conv1_w"], Cin, Cip)
    if has_projection:
        sc = jnp.zeros((Cop, 27, Cip), jnp.float32)           # shortcut rows: center tap (t=13)
        sc = sc.at[:Cout, 13, :Cin].set(params["sc_w"].reshape(Cout, Cin).astype(jnp.float32))
        w1 = jnp.concatenate([w1, sc.reshape(Cop, 27 * Cip)], axis=0)   # (2*Cop, 27*Cip)
    w1 = w1.astype(jnp.bfloat16)
    w2 = stack_w(params["conv2_w"], Cout, Cop).astype(jnp.bfloat16)     # (Cop, 27*Cop)

    ones = jnp.ones((Cout,), jnp.float32)
    zeros = jnp.zeros((Cout,), jnp.float32)
    bn_par = jnp.stack([params["bn1_g"], params["bn1_b"],
                        params["bn2_g"], params["bn2_b"],
                        params.get("sc_bn_g", ones),
                        params.get("sc_bn_b", zeros)]).astype(jnp.float32)
    bn_par = jnp.pad(bn_par, ((0, 0), (0, Cop - Cout))).reshape(6, Cop, 1)

    # tap index t = kd*9 + kh*3 + kw  ->  constant lane offset in padded flat coordinates
    tap_offsets = tuple((kd - 1) * Hp * Wp + (kh - 1) * Wp + (kw - 1)
                        for kd in range(3) for kh in range(3) for kw in range(3))

    kernel = functools.partial(_fused_resblock_kernel,
                               tap_offsets=tap_offsets,
                               inv_count=1.0 / float(N * D * H * W),
                               mt=mt, cop=Cop, has_projection=has_projection)

    w1_rows = 2 * Cop if has_projection else Cop
    out2d = pl.pallas_call(
        kernel,
        out_shape=jax.ShapeDtypeStruct((Cop, mt), jnp.float32),
        grid=(1,),
        in_specs=[
            pl.BlockSpec((Cip, mt), lambda i: (0, 0)),
            pl.BlockSpec((1, mt), lambda i: (0, 0)),
            pl.BlockSpec((w1_rows, 27 * Cip), lambda i: (0, 0)),
            pl.BlockSpec((Cop, 27 * Cop), lambda i: (0, 0)),
            pl.BlockSpec((6, Cop, 1), lambda i: (0, 0, 0)),
        ],
        out_specs=pl.BlockSpec((Cop, mt), lambda i: (0, 0)),
        compiler_params=pltpu.CompilerParams(
            dimension_semantics=("arbitrary",),
            vmem_limit_bytes=48 * 1024 * 1024),
    )(x_buf, mask, w1, w2, bn_par)

    # ---- back to NCDHW, real channels / voxels only (tiny slice + transpose) ----
    out = out2d[:Cout, lpad:lpad + S].reshape(Cout, N, Dp, Hp, Wp)
    out = out[:, :, 1:1 + D, 1:1 + H, 1:1 + W]
    return jnp.transpose(out, (1, 0, 2, 3, 4))


# ----------------------------------------------------------------------------
# Pure-JAX reference (mirrors the PyTorch forward, training-mode BN, with biases)
# ----------------------------------------------------------------------------
def ref_forward(x, params):
    def conv3d(x, w, b, pad):
        out = lax.conv_general_dilated(
            x, w, window_strides=(1, 1, 1), padding=[(pad, pad)] * 3,
            dimension_numbers=("NCDHW", "OIDHW", "NCDHW"),
            precision=lax.Precision.HIGHEST)
        return out + b.reshape(1, -1, 1, 1, 1)

    def bn(x, g, bta):
        mean = jnp.mean(x, axis=(0, 2, 3, 4), keepdims=True)
        var = jnp.mean(jnp.square(x - mean), axis=(0, 2, 3, 4), keepdims=True)
        return ((x - mean) * lax.rsqrt(var + EPS) * g.reshape(1, -1, 1, 1, 1)
                + bta.reshape(1, -1, 1, 1, 1))

    res = bn(conv3d(x, params["sc_w"], params["sc_b"], 0),
             params["sc_bn_g"], params["sc_bn_b"])
    h = jax.nn.relu(bn(conv3d(x, params["conv1_w"], params["conv1_b"], 1),
                       params["bn1_g"], params["bn1_b"]))
    h = bn(conv3d(h, params["conv2_w"], params["conv2_b"], 1),
           params["bn2_g"], params["bn2_b"])
    return jax.nn.relu(h + res)


# ----------------------------------------------------------------------------
if __name__ == "__main__":
    key = jax.random.PRNGKey(0)
    ks = jax.random.split(key, 10)
    N, Cin, Cout, D, H, W = 2, 4, 8, 8, 8, 8  # in_channels != out_channels -> projection shortcut

    x = jax.random.normal(ks[0], (N, Cin, D, H, W), jnp.float32)
    params = dict(
        conv1_w=0.1 * jax.random.normal(ks[1], (Cout, Cin, 3, 3, 3), jnp.float32),
        conv1_b=0.1 * jax.random.normal(ks[2], (Cout,), jnp.float32),
        conv2_w=0.1 * jax.random.normal(ks[3], (Cout, Cout, 3, 3, 3), jnp.float32),
        conv2_b=0.1 * jax.random.normal(ks[4], (Cout,), jnp.float32),
        sc_w=0.1 * jax.random.normal(ks[5], (Cout, Cin, 1, 1, 1), jnp.float32),
        sc_b=0.1 * jax.random.normal(ks[6], (Cout,), jnp.float32),
        bn1_g=jnp.ones((Cout,), jnp.float32) + 0.1 * jax.random.normal(ks[7], (Cout,), jnp.float32),
        bn1_b=0.1 * jax.random.normal(ks[8], (Cout,), jnp.float32),
        bn2_g=jnp.ones((Cout,), jnp.float32),
        bn2_b=jnp.zeros((Cout,), jnp.float32),
        sc_bn_g=jnp.ones((Cout,), jnp.float32) + 0.05 * jax.random.normal(ks[9], (Cout,), jnp.float32),
        sc_bn_b=jnp.zeros((Cout,), jnp.float32),
    )

    out = jax.block_until_ready(residual_block_forward(x, params))
    assert out.shape == (N, Cout, D, H, W)

    ref = ref_forward(x, params)
    max_err = float(jnp.max(jnp.abs(out - ref)))
    # bf16 MXU operands (per perf review) vs the f32 HIGHEST-precision reference: expected
    # max-abs deviation is ~1e-2 at these shapes; structural bugs would produce O(1) errors.
    assert jnp.allclose(out, ref, atol=5e-2, rtol=5e-2), f"max_err={max_err}"

    print("KERNEL_OK")
</pallas_src>

<mosaic_0001>
module attributes {stable_mosaic.version = 11 : i64} {
  func.func @_fused_resblock_kernel(%arg0: i32, %arg1: memref<8x2304xf32, #tpu.memory_space<vmem>>, %arg2: memref<1x2304xf32, #tpu.memory_space<vmem>>, %arg3: memref<16x216xbf16, #tpu.memory_space<vmem>>, %arg4: memref<8x216xbf16, #tpu.memory_space<vmem>>, %arg5: memref<6x8x1xf32, #tpu.memory_space<vmem>>, %arg6: memref<8x2304xf32, #tpu.memory_space<vmem>>) attributes {dimension_semantics = [#tpu.dimension_semantics<arbitrary>], iteration_bounds = array<i64: 1>, scalar_prefetch = 0 : i64, scratch_operands = 0 : i64, tpu.core_type = #tpu.core_type<tc>, window_params = [{pipeline_mode = #tpu.pipeline_mode<synchronous>, transform_indices = @transform_0, window_bounds = array<i64: 8, 2304>}, {pipeline_mode = #tpu.pipeline_mode<synchronous>, transform_indices = @transform_1, window_bounds = array<i64: 1, 2304>}, {pipeline_mode = #tpu.pipeline_mode<synchronous>, transform_indices = @transform_2, window_bounds = array<i64: 16, 216>}, {pipeline_mode = #tpu.pipeline_mode<synchronous>, transform_indices = @transform_3, window_bounds = array<i64: 8, 216>}, {pipeline_mode = #tpu.pipeline_mode<synchronous>, transform_indices = @transform_4, window_bounds = array<i64: 6, 8, 1>}, {pipeline_mode = #tpu.pipeline_mode<synchronous>, transform_indices = @transform_5, window_bounds = array<i64: 8, 2304>}]} {
    %c0 = arith.constant 0 : index
    %c0_0 = arith.constant 0 : index
    %0 = vector.load %arg1[%c0, %c0_0] : memref<8x2304xf32, #tpu.memory_space<vmem>>, vector<8x2304xf32>
    %c0_1 = arith.constant 0 : index
    %c0_2 = arith.constant 0 : index
    %1 = vector.load %arg2[%c0_1, %c0_2] : memref<1x2304xf32, #tpu.memory_space<vmem>>, vector<1x2304xf32>
    %c0_3 = arith.constant 0 : index
    %c0_4 = arith.constant 0 : index
    %2 = vector.load %arg3[%c0_3, %c0_4] : memref<16x216xbf16, #tpu.memory_space<vmem>>, vector<16x216xbf16>
    %c111_i32 = arith.constant 111 : i32
    %3 = tpu.dynamic_rotate %0 by %c111_i32 dim 1 : vector<8x2304xf32>, i32 -> vector<8x2304xf32>
    %c110_i32 = arith.constant 110 : i32
    %4 = tpu.dynamic_rotate %0 by %c110_i32 dim 1 : vector<8x2304xf32>, i32 -> vector<8x2304xf32>
    %c109_i32 = arith.constant 109 : i32
    %5 = tpu.dynamic_rotate %0 by %c109_i32 dim 1 : vector<8x2304xf32>, i32 -> vector<8x2304xf32>
    %c101_i32 = arith.constant 101 : i32
    %6 = tpu.dynamic_rotate %0 by %c101_i32 dim 1 : vector<8x2304xf32>, i32 -> vector<8x2304xf32>
    %c100_i32 = arith.constant 100 : i32
    %7 = tpu.dynamic_rotate %0 by %c100_i32 dim 1 : vector<8x2304xf32>, i32 -> vector<8x2304xf32>
    %c99_i32 = arith.constant 99 : i32
    %8 = tpu.dynamic_rotate %0 by %c99_i32 dim 1 : vector<8x2304xf32>, i32 -> vector<8x2304xf32>
    %c91_i32 = arith.constant 91 : i32
    %9 = tpu.dynamic_rotate %0 by %c91_i32 dim 1 : vector<8x2304xf32>, i32 -> vector<8x2304xf32>
    %c90_i32 = arith.constant 90 : i32
    %10 = tpu.dynamic_rotate %0 by %c90_i32 dim 1 : vector<8x2304xf32>, i32 -> vector<8x2304xf32>
    %c89_i32 = arith.constant 89 : i32
    %11 = tpu.dynamic_rotate %0 by %c89_i32 dim 1 : vector<8x2304xf32>, i32 -> vector<8x2304xf32>
    %c11_i32 = arith.constant 11 : i32
    %12 = tpu.dynamic_rotate %0 by %c11_i32 dim 1 : vector<8x2304xf32>, i32 -> vector<8x2304xf32>
    %c10_i32 = arith.constant 10 : i32
    %13 = tpu.dynamic_rotate %0 by %c10_i32 dim 1 : vector<8x2304xf32>, i32 -> vector<8x2304xf32>
    %c9_i32 = arith.constant 9 : i32
    %14 = tpu.dynamic_rotate %0 by %c9_i32 dim 1 : vector<8x2304xf32>, i32 -> vector<8x2304xf32>
    %c1_i32 = arith.constant 1 : i32
    %15 = tpu.dynamic_rotate %0 by %c1_i32 dim 1 : vector<8x2304xf32>, i32 -> vector<8x2304xf32>
    %c2303_i32 = arith.constant 2303 : i32
    %16 = tpu.dynamic_rotate %0 by %c2303_i32 dim 1 : vector<8x2304xf32>, i32 -> vector<8x2304xf32>
    %c2295_i32 = arith.constant 2295 : i32
    %17 = tpu.dynamic_rotate %0 by %c2295_i32 dim 1 : vector<8x2304xf32>, i32 -> vector<8x2304xf32>
    %c2294_i32 = arith.constant 2294 : i32
    %18 = tpu.dynamic_rotate %0 by %c2294_i32 dim 1 : vector<8x2304xf32>, i32 -> vector<8x2304xf32>
    %c2293_i32 = arith.constant 2293 : i32
    %19 = tpu.dynamic_rotate %0 by %c2293_i32 dim 1 : vector<8x2304xf32>, i32 -> vector<8x2304xf32>
    %c2215_i32 = arith.constant 2215 : i32
    %20 = tpu.dynamic_rotate %0 by %c2215_i32 dim 1 : vector<8x2304xf32>, i32 -> vector<8x2304xf32>
    %c2214_i32 = arith.constant 2214 : i32
    %21 = tpu.dynamic_rotate %0 by %c2214_i32 dim 1 : vector<8x2304xf32>, i32 -> vector<8x2304xf32>
    %c2213_i32 = arith.constant 2213 : i32
    %22 = tpu.dynamic_rotate %0 by %c2213_i32 dim 1 : vector<8x2304xf32>, i32 -> vector<8x2304xf32>
    %c2205_i32 = arith.constant 2205 : i32
    %23 = tpu.dynamic_rotate %0 by %c2205_i32 dim 1 : vector<8x2304xf32>, i32 -> vector<8x2304xf32>
    %c2204_i32 = arith.constant 2204 : i32
    %24 = tpu.dynamic_rotate %0 by %c2204_i32 dim 1 : vector<8x2304xf32>, i32 -> vector<8x2304xf32>
    %c2203_i32 = arith.constant 2203 : i32
    %25 = tpu.dynamic_rotate %0 by %c2203_i32 dim 1 : vector<8x2304xf32>, i32 -> vector<8x2304xf32>
    %c2195_i32 = arith.constant 2195 : i32
    %26 = tpu.dynamic_rotate %0 by %c2195_i32 dim 1 : vector<8x2304xf32>, i32 -> vector<8x2304xf32>
    %c2194_i32 = arith.constant 2194 : i32
    %27 = tpu.dynamic_rotate %0 by %c2194_i32 dim 1 : vector<8x2304xf32>, i32 -> vector<8x2304xf32>
    %c2193_i32 = arith.constant 2193 : i32
    %28 = tpu.dynamic_rotate %0 by %c2193_i32 dim 1 : vector<8x2304xf32>, i32 -> vector<8x2304xf32>
    %29 = tpu.concatenate %3, %4, %5, %6, %7, %8, %9, %10, %11, %12, %13, %14, %15, %0, %16, %17 in 0 : vector<8x2304xf32>, vector<8x2304xf32>, vector<8x2304xf32>, vector<8x2304xf32>, vector<8x2304xf32>, vector<8x2304xf32>, vector<8x2304xf32>, vector<8x2304xf32>, vector<8x2304xf32>, vector<8x2304xf32>, vector<8x2304xf32>, vector<8x2304xf32>, vector<8x2304xf32>, vector<8x2304xf32>, vector<8x2304xf32>, vector<8x2304xf32> -> vector<128x2304xf32>
    %30 = tpu.concatenate %18, %19, %20, %21, %22, %23, %24, %25, %26, %27, %28 in 0 : vector<8x2304xf32>, vector<8x2304xf32>, vector<8x2304xf32>, vector<8x2304xf32>, vector<8x2304xf32>, vector<8x2304xf32>, vector<8x2304xf32>, vector<8x2304xf32>, vector<8x2304xf32>, vector<8x2304xf32>, vector<8x2304xf32> -> vector<88x2304xf32>
    %31 = tpu.concatenate %29, %30 in 0 : vector<128x2304xf32>, vector<88x2304xf32> -> vector<216x2304xf32>
    %32 = arith.truncf %31 : vector<216x2304xf32> to vector<216x2304xbf16>
    %cst = arith.constant dense<0.000000e+00> : vector<16x2304xf32>
    %33 = tpu.matmul %2, %32, %cst {dimension_numbers = #tpu.dot_dimension_numbers<[1], [0], [0], [1], [0, 0, 1, 1], [], []>} : vector<16x216xbf16>, vector<216x2304xbf16>, vector<16x2304xf32> -> vector<16x2304xf32>
    %34 = vector.extract_strided_slice %33 {offsets = [0, 0], sizes = [8, 2304], strides = [1, 1]} : vector<16x2304xf32> to vector<8x2304xf32>
    %35 = vector.extract_strided_slice %33 {offsets = [8, 0], sizes = [8, 2304], strides = [1, 1]} : vector<16x2304xf32> to vector<8x2304xf32>
    %c4 = arith.constant 4 : index
    %c0_5 = arith.constant 0 : index
    %c0_6 = arith.constant 0 : index
    %36 = vector.load %arg5[%c4, %c0_5, %c0_6] : memref<6x8x1xf32, #tpu.memory_space<vmem>>, vector<1x8x1xf32>
    %37 = vector.shape_cast %36 : vector<1x8x1xf32> to vector<8x1xf32>
    %c5 = arith.constant 5 : index
    %c0_7 = arith.constant 0 : index
    %c0_8 = arith.constant 0 : index
    %38 = vector.load %arg5[%c5, %c0_7, %c0_8] : memref<6x8x1xf32, #tpu.memory_space<vmem>>, vector<1x8x1xf32>
    %39 = vector.shape_cast %38 : vector<1x8x1xf32> to vector<8x1xf32>
    %40 = vector.broadcast %1 : vector<1x2304xf32> to vector<8x2304xf32>
    %41 = arith.mulf %35, %40 : vector<8x2304xf32>
    %cst_9 = arith.constant dense<0.000000e+00> : vector<8xf32>
    %42 = vector.multi_reduction <add>, %41, %cst_9 [1] : vector<8x2304xf32> to vector<8xf32>
    %43 = vector.shape_cast %42 : vector<8xf32> to vector<8x1xf32>
    %cst_10 = arith.constant 9.765625E-4 : f32
    %44 = vector.broadcast %cst_10 : f32 to vector<8x1xf32>
    %45 = arith.mulf %43, %44 : vector<8x1xf32>
    %46 = arith.mulf %41, %35 : vector<8x2304xf32>
    %cst_11 = arith.constant dense<0.000000e+00> : vector<8xf32>
    %47 = vector.multi_reduction <add>, %46, %cst_11 [1] : vector<8x2304xf32> to vector<8xf32>
    %48 = vector.shape_cast %47 : vector<8xf32> to vector<8x1xf32>
    %cst_12 = arith.constant 9.765625E-4 : f32
    %49 = vector.broadcast %cst_12 : f32 to vector<8x1xf32>
    %50 = arith.mulf %48, %49 : vector<8x1xf32>
    %51 = arith.mulf %45, %45 : vector<8x1xf32>
    %52 = arith.subf %50, %51 : vector<8x1xf32>
    %cst_13 = arith.constant 9.99999974E-6 : f32
    %53 = vector.broadcast %cst_13 : f32 to vector<8x1xf32>
    %54 = arith.addf %52, %53 : vector<8x1xf32>
    %55 = math.rsqrt %54 : vector<8x1xf32>
    %56 = vector.broadcast %45 : vector<8x1xf32> to vector<8x2304xf32>
    %57 = arith.subf %35, %56 : vector<8x2304xf32>
    %58 = arith.mulf %37, %55 : vector<8x1xf32>
    %59 = vector.broadcast %58 : vector<8x1xf32> to vector<8x2304xf32>
    %60 = arith.mulf %57, %59 : vector<8x2304xf32>
    %61 = vector.broadcast %39 : vector<8x1xf32> to vector<8x2304xf32>
    %62 = arith.addf %60, %61 : vector<8x2304xf32>
    %c0_14 = arith.constant 0 : index
    %c0_15 = arith.constant 0 : index
    %c0_16 = arith.constant 0 : index
    %63 = vector.load %arg5[%c0_14, %c0_15, %c0_16] : memref<6x8x1xf32, #tpu.memory_space<vmem>>, vector<1x8x1xf32>
    %64 = vector.shape_cast %63 : vector<1x8x1xf32> to vector<8x1xf32>
    %c1 = arith.constant 1 : index
    %c0_17 = arith.constant 0 : index
    %c0_18 = arith.constant 0 : index
    %65 = vector.load %arg5[%c1, %c0_17, %c0_18] : memref<6x8x1xf32, #tpu.memory_space<vmem>>, vector<1x8x1xf32>
    %66 = vector.shape_cast %65 : vector<1x8x1xf32> to vector<8x1xf32>
    %67 = vector.broadcast %1 : vector<1x2304xf32> to vector<8x2304xf32>
    %68 = arith.mulf %34, %67 : vector<8x2304xf32>
    %cst_19 = arith.constant dense<0.000000e+00> : vector<8xf32>
    %69 = vector.multi_reduction <add>, %68, %cst_19 [1] : vector<8x2304xf32> to vector<8xf32>
    %70 = vector.shape_cast %69 : vector<8xf32> to vector<8x1xf32>
    %cst_20 = arith.constant 9.765625E-4 : f32
    %71 = vector.broadcast %cst_20 : f32 to vector<8x1xf32>
    %72 = arith.mulf %70, %71 : vector<8x1xf32>
    %73 = arith.mulf %68, %34 : vector<8x2304xf32>
    %cst_21 = arith.constant dense<0.000000e+00> : vector<8xf32>
    %74 = vector.multi_reduction <add>, %73, %cst_21 [1] : vector<8x2304xf32> to vector<8xf32>
    %75 = vector.shape_cast %74 : vector<8xf32> to vector<8x1xf32>
    %cst_22 = arith.constant 9.765625E-4 : f32
    %76 = vector.broadcast %cst_22 : f32 to vector<8x1xf32>
    %77 = arith.mulf %75, %76 : vector<8x1xf32>
    %78 = arith.mulf %72, %72 : vector<8x1xf32>
    %79 = arith.subf %77, %78 : vector<8x1xf32>
    %cst_23 = arith.constant 9.99999974E-6 : f32
    %80 = vector.broadcast %cst_23 : f32 to vector<8x1xf32>
    %81 = arith.addf %79, %80 : vector<8x1xf32>
    %82 = math.rsqrt %81 : vector<8x1xf32>
    %83 = vector.broadcast %72 : vector<8x1xf32> to vector<8x2304xf32>
    %84 = arith.subf %34, %83 : vector<8x2304xf32>
    %85 = arith.mulf %64, %82 : vector<8x1xf32>
    %86 = vector.broadcast %85 : vector<8x1xf32> to vector<8x2304xf32>
    %87 = arith.mulf %84, %86 : vector<8x2304xf32>
    %88 = vector.broadcast %66 : vector<8x1xf32> to vector<8x2304xf32>
    %89 = arith.addf %87, %88 : vector<8x2304xf32>
    %cst_24 = arith.constant 0.000000e+00 : f32
    %90 = vector.broadcast %cst_24 : f32 to vector<8x2304xf32>
    %91 = arith.maximumf %89, %90 : vector<8x2304xf32>
    %92 = vector.broadcast %1 : vector<1x2304xf32> to vector<8x2304xf32>
    %93 = arith.mulf %91, %92 : vector<8x2304xf32>
    %c0_25 = arith.constant 0 : index
    %c0_26 = arith.constant 0 : index
    %94 = vector.load %arg4[%c0_25, %c0_26] : memref<8x216xbf16, #tpu.memory_space<vmem>>, vector<8x216xbf16>
    %c111_i32_27 = arith.constant 111 : i32
    %95 = tpu.dynamic_rotate %93 by %c111_i32_27 dim 1 : vector<8x2304xf32>, i32 -> vector<8x2304xf32>
    %c110_i32_28 = arith.constant 110 : i32
    %96 = tpu.dynamic_rotate %93 by %c110_i32_28 dim 1 : vector<8x2304xf32>, i32 -> vector<8x2304xf32>
    %c109_i32_29 = arith.constant 109 : i32
    %97 = tpu.dynamic_rotate %93 by %c109_i32_29 dim 1 : vector<8x2304xf32>, i32 -> vector<8x2304xf32>
    %c101_i32_30 = arith.constant 101 : i32
    %98 = tpu.dynamic_rotate %93 by %c101_i32_30 dim 1 : vector<8x2304xf32>, i32 -> vector<8x2304xf32>
    %c100_i32_31 = arith.constant 100 : i32
    %99 = tpu.dynamic_rotate %93 by %c100_i32_31 dim 1 : vector<8x2304xf32>, i32 -> vector<8x2304xf32>
    %c99_i32_32 = arith.constant 99 : i32
    %100 = tpu.dynamic_rotate %93 by %c99_i32_32 dim 1 : vector<8x2304xf32>, i32 -> vector<8x2304xf32>
    %c91_i32_33 = arith.constant 91 : i32
    %101 = tpu.dynamic_rotate %93 by %c91_i32_33 dim 1 : vector<8x2304xf32>, i32 -> vector<8x2304xf32>
    %c90_i32_34 = arith.constant 90 : i32
    %102 = tpu.dynamic_rotate %93 by %c90_i32_34 dim 1 : vector<8x2304xf32>, i32 -> vector<8x2304xf32>
    %c89_i32_35 = arith.constant 89 : i32
    %103 = tpu.dynamic_rotate %93 by %c89_i32_35 dim 1 : vector<8x2304xf32>, i32 -> vector<8x2304xf32>
    %c11_i32_36 = arith.constant 11 : i32
    %104 = tpu.dynamic_rotate %93 by %c11_i32_36 dim 1 : vector<8x2304xf32>, i32 -> vector<8x2304xf32>
    %c10_i32_37 = arith.constant 10 : i32
    %105 = tpu.dynamic_rotate %93 by %c10_i32_37 dim 1 : vector<8x2304xf32>, i32 -> vector<8x2304xf32>
    %c9_i32_38 = arith.constant 9 : i32
    %106 = tpu.dynamic_rotate %93 by %c9_i32_38 dim 1 : vector<8x2304xf32>, i32 -> vector<8x2304xf32>
    %c1_i32_39 = arith.constant 1 : i32
    %107 = tpu.dynamic_rotate %93 by %c1_i32_39 dim 1 : vector<8x2304xf32>, i32 -> vector<8x2304xf32>
    %c2303_i32_40 = arith.constant 2303 : i32
    %108 = tpu.dynamic_rotate %93 by %c2303_i32_40 dim 1 : vector<8x2304xf32>, i32 -> vector<8x2304xf32>
    %c2295_i32_41 = arith.constant 2295 : i32
    %109 = tpu.dynamic_rotate %93 by %c2295_i32_41 dim 1 : vector<8x2304xf32>, i32 -> vector<8x2304xf32>
    %c2294_i32_42 = arith.constant 2294 : i32
    %110 = tpu.dynamic_rotate %93 by %c2294_i32_42 dim 1 : vector<8x2304xf32>, i32 -> vector<8x2304xf32>
    %c2293_i32_43 = arith.constant 2293 : i32
    %111 = tpu.dynamic_rotate %93 by %c2293_i32_43 dim 1 : vector<8x2304xf32>, i32 -> vector<8x2304xf32>
    %c2215_i32_44 = arith.constant 2215 : i32
    %112 = tpu.dynamic_rotate %93 by %c2215_i32_44 dim 1 : vector<8x2304xf32>, i32 -> vector<8x2304xf32>
    %c2214_i32_45 = arith.constant 2214 : i32
    %113 = tpu.dynamic_rotate %93 by %c2214_i32_45 dim 1 : vector<8x2304xf32>, i32 -> vector<8x2304xf32>
    %c2213_i32_46 = arith.constant 2213 : i32
    %114 = tpu.dynamic_rotate %93 by %c2213_i32_46 dim 1 : vector<8x2304xf32>, i32 -> vector<8x2304xf32>
    %c2205_i32_47 = arith.constant 2205 : i32
    %115 = tpu.dynamic_rotate %93 by %c2205_i32_47 dim 1 : vector<8x2304xf32>, i32 -> vector<8x2304xf32>
    %c2204_i32_48 = arith.constant 2204 : i32
    %116 = tpu.dynamic_rotate %93 by %c2204_i32_48 dim 1 : vector<8x2304xf32>, i32 -> vector<8x2304xf32>
    %c2203_i32_49 = arith.constant 2203 : i32
    %117 = tpu.dynamic_rotate %93 by %c2203_i32_49 dim 1 : vector<8x2304xf32>, i32 -> vector<8x2304xf32>
    %c2195_i32_50 = arith.constant 2195 : i32
    %118 = tpu.dynamic_rotate %93 by %c2195_i32_50 dim 1 : vector<8x2304xf32>, i32 -> vector<8x2304xf32>
    %c2194_i32_51 = arith.constant 2194 : i32
    %119 = tpu.dynamic_rotate %93 by %c2194_i32_51 dim 1 : vector<8x2304xf32>, i32 -> vector<8x2304xf32>
    %c2193_i32_52 = arith.constant 2193 : i32
    %120 = tpu.dynamic_rotate %93 by %c2193_i32_52 dim 1 : vector<8x2304xf32>, i32 -> vector<8x2304xf32>
    %121 = tpu.concatenate %95, %96, %97, %98, %99, %100, %101, %102, %103, %104, %105, %106, %107, %93, %108, %109 in 0 : vector<8x2304xf32>, vector<8x2304xf32>, vector<8x2304xf32>, vector<8x2304xf32>, vector<8x2304xf32>, vector<8x2304xf32>, vector<8x2304xf32>, vector<8x2304xf32>, vector<8x2304xf32>, vector<8x2304xf32>, vector<8x2304xf32>, vector<8x2304xf32>, vector<8x2304xf32>, vector<8x2304xf32>, vector<8x2304xf32>, vector<8x2304xf32> -> vector<128x2304xf32>
    %122 = tpu.concatenate %110, %111, %112, %113, %114, %115, %116, %117, %118, %119, %120 in 0 : vector<8x2304xf32>, vector<8x2304xf32>, vector<8x2304xf32>, vector<8x2304xf32>, vector<8x2304xf32>, vector<8x2304xf32>, vector<8x2304xf32>, vector<8x2304xf32>, vector<8x2304xf32>, vector<8x2304xf32>, vector<8x2304xf32> -> vector<88x2304xf32>
    %123 = tpu.concatenate %121, %122 in 0 : vector<128x2304xf32>, vector<88x2304xf32> -> vector<216x2304xf32>
    %124 = arith.truncf %123 : vector<216x2304xf32> to vector<216x2304xbf16>
    %cst_53 = arith.constant dense<0.000000e+00> : vector<8x2304xf32>
    %125 = tpu.matmul %94, %124, %cst_53 {dimension_numbers = #tpu.dot_dimension_numbers<[1], [0], [0], [1], [0, 0, 1, 1], [], []>} : vector<8x216xbf16>, vector<216x2304xbf16>, vector<8x2304xf32> -> vector<8x2304xf32>
    %c2 = arith.constant 2 : index
    %c0_54 = arith.constant 0 : index
    %c0_55 = arith.constant 0 : index
    %126 = vector.load %arg5[%c2, %c0_54, %c0_55] : memref<6x8x1xf32, #tpu.memory_space<vmem>>, vector<1x8x1xf32>
    %127 = vector.shape_cast %126 : vector<1x8x1xf32> to vector<8x1xf32>
    %c3 = arith.constant 3 : index
    %c0_56 = arith.constant 0 : index
    %c0_57 = arith.constant 0 : index
    %128 = vector.load %arg5[%c3, %c0_56, %c0_57] : memref<6x8x1xf32, #tpu.memory_space<vmem>>, vector<1x8x1xf32>
    %129 = vector.shape_cast %128 : vector<1x8x1xf32> to vector<8x1xf32>
    %130 = vector.broadcast %1 : vector<1x2304xf32> to vector<8x2304xf32>
    %131 = arith.mulf %125, %130 : vector<8x2304xf32>
    %cst_58 = arith.constant dense<0.000000e+00> : vector<8xf32>
    %132 = vector.multi_reduction <add>, %131, %cst_58 [1] : vector<8x2304xf32> to vector<8xf32>
    %133 = vector.shape_cast %132 : vector<8xf32> to vector<8x1xf32>
    %cst_59 = arith.constant 9.765625E-4 : f32
    %134 = vector.broadcast %cst_59 : f32 to vector<8x1xf32>
    %135 = arith.mulf %133, %134 : vector<8x1xf32>
    %136 = arith.mulf %131, %125 : vector<8x2304xf32>
    %cst_60 = arith.constant dense<0.000000e+00> : vector<8xf32>
    %137 = vector.multi_reduction <add>, %136, %cst_60 [1] : vector<8x2304xf32> to vector<8xf32>
    %138 = vector.shape_cast %137 : vector<8xf32> to vector<8x1xf32>
    %cst_61 = arith.constant 9.765625E-4 : f32
    %139 = vector.broadcast %cst_61 : f32 to vector<8x1xf32>
    %140 = arith.mulf %138, %139 : vector<8x1xf32>
    %141 = arith.mulf %135, %135 : vector<8x1xf32>
    %142 = arith.subf %140, %141 : vector<8x1xf32>
    %cst_62 = arith.constant 9.99999974E-6 : f32
    %143 = vector.broadcast %cst_62 : f32 to vector<8x1xf32>
    %144 = arith.addf %142, %143 : vector<8x1xf32>
    %145 = math.rsqrt %144 : vector<8x1xf32>
    %146 = vector.broadcast %135 : vector<8x1xf32> to vector<8x2304xf32>
    %147 = arith.subf %125, %146 : vector<8x2304xf32>
    %148 = arith.mulf %127, %145 : vector<8x1xf32>
    %149 = vector.broadcast %148 : vector<8x1xf32> to vector<8x2304xf32>
    %150 = arith.mulf %147, %149 : vector<8x2304xf32>
    %151 = vector.broadcast %129 : vector<8x1xf32> to vector<8x2304xf32>
    %152 = arith.addf %150, %151 : vector<8x2304xf32>
    %153 = arith.addf %152, %62 : vector<8x2304xf32>
    %cst_63 = arith.constant 0.000000e+00 : f32
    %154 = vector.broadcast %cst_63 : f32 to vector<8x2304xf32>
    %155 = arith.maximumf %153, %154 : vector<8x2304xf32>
    %c0_64 = arith.constant 0 : index
    %c0_65 = arith.constant 0 : index
    %156 = vector.load %arg6[%c0_64, %c0_65] : memref<8x2304xf32, #tpu.memory_space<vmem>>, vector<8x2304xf32>
    tpu.vector_store %arg6[%c0_64, %c0_65], %155 {strides = array<i32>} : memref<8x2304xf32, #tpu.memory_space<vmem>>, vector<8x2304xf32>,
    return
  }
  func.func @transform_0(%arg0: i32) -> (i32, i32) {
    %c0_i32 = arith.constant 0 : i32
    %c0_i32_0 = arith.constant 0 : i32
    %c0_i32_1 = arith.constant 0 : i32
    return %c0_i32, %c0_i32_0 : i32, i32
  }
  func.func @transform_1(%arg0: i32) -> (i32, i32) {
    %c0_i32 = arith.constant 0 : i32
    %c0_i32_0 = arith.constant 0 : i32
    %c0_i32_1 = arith.constant 0 : i32
    return %c0_i32, %c0_i32_0 : i32, i32
  }
  func.func @transform_2(%arg0: i32) -> (i32, i32) {
    %c0_i32 = arith.constant 0 : i32
    %c0_i32_0 = arith.constant 0 : i32
    %c0_i32_1 = arith.constant 0 : i32
    return %c0_i32, %c0_i32_0 : i32, i32
  }
  func.func @transform_3(%arg0: i32) -> (i32, i32) {
    %c0_i32 = arith.constant 0 : i32
    %c0_i32_0 = arith.constant 0 : i32
    %c0_i32_1 = arith.constant 0 : i32
    return %c0_i32, %c0_i32_0 : i32, i32
  }
  func.func @transform_4(%arg0: i32) -> (i32, i32, i32) {
    %c0_i32 = arith.constant 0 : i32
    %c0_i32_0 = arith.constant 0 : i32
    %c0_i32_1 = arith.constant 0 : i32
    %c0_i32_2 = arith.constant 0 : i32
    return %c0_i32, %c0_i32_0, %c0_i32_1 : i32, i32, i32
  }
  func.func @transform_5(%arg0: i32) -> (i32, i32) {
    %c0_i32 = arith.constant 0 : i32
    %c0_i32_0 = arith.constant 0 : i32
    %c0_i32_1 = arith.constant 0 : i32
    return %c0_i32, %c0_i32_0 : i32, i32
  }
}

</mosaic_0001>

<llo_original>
// kernel: residual_block_forward.1
$region0: #{residual_block_forward.1}
  #allocation0 [shape = 'u32[]', space=smem, size = 0x4, offset = 0x4, fixed_abs, tag = 'smem constant byte address 0x4 - core index']
  #allocation1 [shape = 'u32[144,128]{1,0:T(1,128)}', space=vmem, size = 0x12000, scoped, tag = 'internal scratch']
  %s0 = inlined_call_operand.vmem [shape: f32[8,2304], index: 0, kind: input, shape index: {}]
  %s1 = inlined_call_operand.vmem [shape: f32[1,2304], index: 1, kind: input, shape index: {}]
  %s2 = inlined_call_operand.vmem [shape: bf16[16,216], index: 2, kind: input, shape index: {}]
  %s3 = inlined_call_operand.vmem [shape: bf16[8,216], index: 3, kind: input, shape index: {}]
  %s4 = inlined_call_operand.vmem [shape: f32[6,8,1], index: 4, kind: input, shape index: {}]
  %s5 = inlined_call_operand.vmem [shape: f32[8,2304], index: 5, kind: output, shape index: {}]
  %s6 = sld [smem:[#allocation0]]
  $region30: #{residual_block_forward.1} parent=0
    _
  %s8 = ssub.s32 1, %s6
  %s9 = scalar_select 0, %s8, %s6
  // Predicated region
  $region2: #{residual_block_forward.1} parent=0 // pred_check
    _
  $region3: #{residual_block_forward.1} parent=0 // pred_check_branch
    %11 = sbr.rel (0) target = $region5
  $region4: #{residual_block_forward.1} parent=0 // pred_region
    _
  $region5: #{residual_block_forward.1} parent=0 // pred_fallthru
    _
  // Predicated region
  $region6: #{residual_block_forward.1} parent=0 // pred_check
    _
  $region7: #{residual_block_forward.1} parent=0 // pred_check_branch
    %13 = sbr.rel (0) target = $region9
  $region8: #{residual_block_forward.1} parent=0 // pred_region
    _
  $region9: #{residual_block_forward.1} parent=0 // pred_fallthru
    _
  // Predicated region
  $region10: #{residual_block_forward.1} parent=0 // pred_check
    _
  $region11: #{residual_block_forward.1} parent=0 // pred_check_branch
    %15 = sbr.rel (0) target = $region13
  $region12: #{residual_block_forward.1} parent=0 // pred_region
    _
  $region13: #{residual_block_forward.1} parent=0 // pred_fallthru
    _
  // Predicated region
  $region14: #{residual_block_forward.1} parent=0 // pred_check
    _
  $region15: #{residual_block_forward.1} parent=0 // pred_check_branch
    %17 = sbr.rel (0) target = $region17
  $region16: #{residual_block_forward.1} parent=0 // pred_region
    _
  $region17: #{residual_block_forward.1} parent=0 // pred_fallthru
    _
  // Predicated region
  $region18: #{residual_block_forward.1} parent=0 // pred_check
    _
  $region19: #{residual_block_forward.1} parent=0 // pred_check_branch
    %19 = sbr.rel (0) target = $region21
  $region20: #{residual_block_forward.1} parent=0 // pred_region
    _
  $region21: #{residual_block_forward.1} parent=0 // pred_fallthru
    _
  %v21 = vld [vmem:[%s0] sm:$0xff]
  %v22 = vld [vmem:[%s0 + $0x8] sm:$0xff]
  %v23 = vld [vmem:[%s0 + $0x10] sm:$0xff]
  %v24 = vld [vmem:[%s0 + $0x18] sm:$0xff]
  %v25 = vld [vmem:[%s0 + $0x20] sm:$0xff]
  %v26 = vld [vmem:[%s0 + $0x28] sm:$0xff]
  %v27 = vld [vmem:[%s0 + $0x30] sm:$0xff]
  %v28 = vld [vmem:[%s0 + $0x38] sm:$0xff]
  %v29 = vld [vmem:[%s0 + $0x40] sm:$0xff]
  %v30 = vld [vmem:[%s0 + $0x48] sm:$0xff]
  %v31 = vld [vmem:[%s0 + $0x50] sm:$0xff]
  %v32 = vld [vmem:[%s0 + $0x58] sm:$0xff]
  %v33 = vld [vmem:[%s0 + $0x60] sm:$0xff]
  %v34 = vld [vmem:[%s0 + $0x68] sm:$0xff]
  %v35 = vld [vmem:[%s0 + $0x70] sm:$0xff]
  %v36 = vld [vmem:[%s0 + $0x78] sm:$0xff]
  %v37 = vld [vmem:[%s0 + $0x80] sm:$0xff]
  %v38 = vld [vmem:[%s0 + $0x88] sm:$0xff]
  %v39 = vld [vmem:[%s1] sm:$0xff]
  %v40 = vld [vmem:[%s1 + $0x8] sm:$0xff]
  %v41 = vld [vmem:[%s1 + $0x10] sm:$0x3]
  %v42 = vld [vmem:[%s2] sm:$0xff]
  %v43 = vld [vmem:[%s2 + $0x8] sm:$0xff]
  %44 = vrot.lane.b32.xlu0 %v21, 111
  %v45 = vpop.permute.xlu0 %44
  %46 = vrot.lane.b32.xlu0 %v22, 111
  %v47 = vpop.permute.xlu0 %46
  %48 = vrot.lane.b32.xlu0 %v23, 111
  %v49 = vpop.permute.xlu0 %48
  %50 = vrot.lane.b32.xlu0 %v24, 111
  %v51 = vpop.permute.xlu0 %50
  %52 = vrot.lane.b32.xlu0 %v25, 111
  %v53 = vpop.permute.xlu0 %52
  %54 = vrot.lane.b32.xlu0 %v26, 111
  %v55 = vpop.permute.xlu0 %54
  %56 = vrot.lane.b32.xlu0 %v27, 111
  %v57 = vpop.permute.xlu0 %56
  %58 = vrot.lane.b32.xlu0 %v28, 111
  %v59 = vpop.permute.xlu0 %58
  %60 = vrot.lane.b32.xlu0 %v29, 111
  %v61 = vpop.permute.xlu0 %60
  %62 = vrot.lane.b32.xlu0 %v30, 111
  %v63 = vpop.permute.xlu0 %62
  %64 = vrot.lane.b32.xlu0 %v31, 111
  %v65 = vpop.permute.xlu0 %64
  %66 = vrot.lane.b32.xlu0 %v32, 111
  %v67 = vpop.permute.xlu0 %66
  %68 = vrot.lane.b32.xlu0 %v33, 111
  %v69 = vpop.permute.xlu0 %68
  %70 = vrot.lane.b32.xlu0 %v34, 111
  %v71 = vpop.permute.xlu0 %70
  %72 = vrot.lane.b32.xlu0 %v35, 111
  %v73 = vpop.permute.xlu0 %72
  %74 = vrot.lane.b32.xlu0 %v36, 111
  %v75 = vpop.permute.xlu0 %74
  %76 = vrot.lane.b32.xlu0 %v37, 111
  %v77 = vpop.permute.xlu0 %76
  %78 = vrot.lane.b32.xlu0 %v38, 111
  %v79 = vpop.permute.xlu0 %78
  %v80 = vlaneseq
  %v81 = vand.u32 %v80, 127
  %vm82 = vcmp.lt.s32.totalorder %v81, 111
  %v83 = vsel %vm82, %v77, %v79
  %v84 = vsel %vm82, %v75, %v77
  %v85 = vsel %vm82, %v73, %v75
  %v86 = vsel %vm82, %v71, %v73
  %v87 = vsel %vm82, %v69, %v71
  %v88 = vsel %vm82, %v67, %v69
  %v89 = vsel %vm82, %v65, %v67
  %v90 = vsel %vm82, %v63, %v65
  %v91 = vsel %vm82, %v61, %v63
  %v92 = vsel %vm82, %v59, %v61
  %v93 = vsel %vm82, %v57, %v59
  %v94 = vsel %vm82, %v55, %v57
  %v95 = vsel %vm82, %v53, %v55
  %v96 = vsel %vm82, %v51, %v53
  %v97 = vsel %vm82, %v49, %v51
  %v98 = vsel %vm82, %v47, %v49
  %v99 = vsel %vm82, %v45, %v47
  %v100 = vsel %vm82, %v79, %v45
  %101 = vrot.lane.b32.xlu0 %v21, 110
  %v102 = vpop.permute.xlu0 %101
  %103 = vrot.lane.b32.xlu0 %v22, 110
  %v104 = vpop.permute.xlu0 %103
  %105 = vrot.lane.b32.xlu0 %v23, 110
  %v106 = vpop.permute.xlu0 %105
  %107 = vrot.lane.b32.xlu0 %v24, 110
  %v108 = vpop.permute.xlu0 %107
  %109 = vrot.lane.b32.xlu0 %v25, 110
  %v110 = vpop.permute.xlu0 %109
  %111 = vrot.lane.b32.xlu0 %v26, 110
  %v112 = vpop.permute.xlu0 %111
  %113 = vrot.lane.b32.xlu0 %v27, 110
  %v114 = vpop.permute.xlu0 %113
  %115 = vrot.lane.b32.xlu0 %v28, 110
  %v116 = vpop.permute.xlu0 %115
  %117 = vrot.lane.b32.xlu0 %v29, 110
  %v118 = vpop.permute.xlu0 %117
  %119 = vrot.lane.b32.xlu0 %v30, 110
  %v120 = vpop.permute.xlu0 %119
  %121 = vrot.lane.b32.xlu0 %v31, 110
  %v122 = vpop.permute.xlu0 %121
  %123 = vrot.lane.b32.xlu0 %v32, 110
  %v124 = vpop.permute.xlu0 %123
  %125 = vrot.lane.b32.xlu0 %v33, 110
  %v126 = vpop.permute.xlu0 %125
  %127 = vrot.lane.b32.xlu0 %v34, 110
  %v128 = vpop.permute.xlu0 %127
  %129 = vrot.lane.b32.xlu0 %v35, 110
  %v130 = vpop.permute.xlu0 %129
  %131 = vrot.lane.b32.xlu0 %v36, 110
  %v132 = vpop.permute.xlu0 %131
  %133 = vrot.lane.b32.xlu0 %v37, 110
  %v134 = vpop.permute.xlu0 %133
  %135 = vrot.lane.b32.xlu0 %v38, 110
  %v136 = vpop.permute.xlu0 %135
  %vm137 = vcmp.lt.s32.totalorder %v81, 110
  %v138 = vsel %vm137, %v134, %v136
  %v139 = vsel %vm137, %v132, %v134
  %v140 = vsel %vm137, %v130, %v132
  %v141 = vsel %vm137, %v128, %v130
  %v142 = vsel %vm137, %v126, %v128
  %v143 = vsel %vm137, %v124, %v126
  %v144 = vsel %vm137, %v122, %v124
  %v145 = vsel %vm137, %v120, %v122
  %v146 = vsel %vm137, %v118, %v120
  %v147 = vsel %vm137, %v116, %v118
  %v148 = vsel %vm137, %v114, %v116
  %v149 = vsel %vm137, %v112, %v114
  %v150 = vsel %vm137, %v110, %v112
  %v151 = vsel %vm137, %v108, %v110
  %v152 = vsel %vm137, %v106, %v108
  %v153 = vsel %vm137, %v104, %v106
  %v154 = vsel %vm137, %v102, %v104
  %v155 = vsel %vm137, %v136, %v102
  %156 = vrot.lane.b32.xlu0 %v21, 109
  %v157 = vpop.permute.xlu0 %156
  %158 = vrot.lane.b32.xlu0 %v22, 109
  %v159 = vpop.permute.xlu0 %158
  %160 = vrot.lane.b32.xlu0 %v23, 109
  %v161 = vpop.permute.xlu0 %160
  %162 = vrot.lane.b32.xlu0 %v24, 109
  %v163 = vpop.permute.xlu0 %162
  %164 = vrot.lane.b32.xlu0 %v25, 109
  %v165 = vpop.permute.xlu0 %164
  %166 = vrot.lane.b32.xlu0 %v26, 109
  %v167 = vpop.permute.xlu0 %166
  %168 = vrot.lane.b32.xlu0 %v27, 109
  %v169 = vpop.permute.xlu0 %168
  %170 = vrot.lane.b32.xlu0 %v28, 109
  %v171 = vpop.permute.xlu0 %170
  %172 = vrot.lane.b32.xlu0 %v29, 109
  %v173 = vpop.permute.xlu0 %172
  %174 = vrot.lane.b32.xlu0 %v30, 109
  %v175 = vpop.permute.xlu0 %174
  %176 = vrot.lane.b32.xlu0 %v31, 109
  %v177 = vpop.permute.xlu0 %176
  %178 = vrot.lane.b32.xlu0 %v32, 109
  %v179 = vpop.permute.xlu0 %178
  %180 = vrot.lane.b32.xlu0 %v33, 109
  %v181 = vpop.permute.xlu0 %180
  %182 = vrot.lane.b32.xlu0 %v34, 109
  %v183 = vpop.permute.xlu0 %182
  %184 = vrot.lane.b32.xlu0 %v35, 109
  %v185 = vpop.permute.xlu0 %184
  %186 = vrot.lane.b32.xlu0 %v36, 109
  %v187 = vpop.permute.xlu0 %186
  %188 = vrot.lane.b32.xlu0 %v37, 109
  %v189 = vpop.permute.xlu0 %188
  %190 = vrot.lane.b32.xlu0 %v38, 109
  %v191 = vpop.permute.xlu0 %190
  %vm192 = vcmp.lt.s32.totalorder %v81, 109
  %v193 = vsel %vm192, %v189, %v191
  %v194 = vsel %vm192, %v187, %v189
  %v195 = vsel %vm192, %v185, %v187
  %v196 = vsel %vm192, %v183, %v185
  %v197 = vsel %vm192, %v181, %v183
  %v198 = vsel %vm192, %v179, %v181
  %v199 = vsel %vm192, %v177, %v179
  %v200 = vsel %vm192, %v175, %v177
  %v201 = vsel %vm192, %v173, %v175
  %v202 = vsel %vm192, %v171, %v173
  %v203 = vsel %vm192, %v169, %v171
  %v204 = vsel %vm192, %v167, %v169
  %v205 = vsel %vm192, %v165, %v167
  %v206 = vsel %vm192, %v163, %v165
  %v207 = vsel %vm192, %v161, %v163
  %v208 = vsel %vm192, %v159, %v161
  %v209 = vsel %vm192, %v157, %v159
  %v210 = vsel %vm192, %v191, %v157
  %211 = vrot.lane.b32.xlu0 %v21, 101
  %v212 = vpop.permute.xlu0 %211
  %213 = vrot.lane.b32.xlu0 %v22, 101
  %v214 = vpop.permute.xlu0 %213
  %215 = vrot.lane.b32.xlu0 %v23, 101
  %v216 = vpop.permute.xlu0 %215
  %217 = vrot.lane.b32.xlu0 %v24, 101
  %v218 = vpop.permute.xlu0 %217
  %219 = vrot.lane.b32.xlu0 %v25, 101
  %v220 = vpop.permute.xlu0 %219
  %221 = vrot.lane.b32.xlu0 %v26, 101
  %v222 = vpop.permute.xlu0 %221
  %223 = vrot.lane.b32.xlu0 %v27, 101
  %v224 = vpop.permute.xlu0 %223
  %225 = vrot.lane.b32.xlu0 %v28, 101
  %v226 = vpop.permute.xlu0 %225
  %227 = vrot.lane.b32.xlu0 %v29, 101
  %v228 = vpop.permute.xlu0 %227
  %229 = vrot.lane.b32.xlu0 %v30, 101
  %v230 = vpop.permute.xlu0 %229
  %231 = vrot.lane.b32.xlu0 %v31, 101
  %v232 = vpop.permute.xlu0 %231
  %233 = vrot.lane.b32.xlu0 %v32, 101
  %v234 = vpop.permute.xlu0 %233
  %235 = vrot.lane.b32.xlu0 %v33, 101
  %v236 = vpop.permute.xlu0 %235
  %237 = vrot.lane.b32.xlu0 %v34, 101
  %v238 = vpop.permute.xlu0 %237
  %239 = vrot.lane.b32.xlu0 %v35, 101
  %v240 = vpop.permute.xlu0 %239
  %241 = vrot.lane.b32.xlu0 %v36, 101
  %v242 = vpop.permute.xlu0 %241
  %243 = vrot.lane.b32.xlu0 %v37, 101
  %v244 = vpop.permute.xlu0 %243
  %245 = vrot.lane.b32.xlu0 %v38, 101
  %v246 = vpop.permute.xlu0 %245
  %vm247 = vcmp.lt.s32.totalorder %v81, 101
  %v248 = vsel %vm247, %v244, %v246
  %v249 = vsel %vm247, %v242, %v244
  %v250 = vsel %vm247, %v240, %v242
  %v251 = vsel %vm247, %v238, %v240
  %v252 = vsel %vm247, %v236, %v238
  %v253 = vsel %vm247, %v234, %v236
  %v254 = vsel %vm247, %v232, %v234
  %v255 = vsel %vm247, %v230, %v232
  %v256 = vsel %vm247, %v228, %v230
  %v257 = vsel %vm247, %v226, %v228
  %v258 = vsel %vm247, %v224, %v226
  %v259 = vsel %vm247, %v222, %v224
  %v260 = vsel %vm247, %v220, %v222
  %v261 = vsel %vm247, %v218, %v220
  %v262 = vsel %vm247, %v216, %v218
  %v263 = vsel %vm247, %v214, %v216
  %v264 = vsel %vm247, %v212, %v214
  %v265 = vsel %vm247, %v246, %v212
  %266 = vrot.lane.b32.xlu0 %v21, 100
  %v267 = vpop.permute.xlu0 %266
  %268 = vrot.lane.b32.xlu0 %v22, 100
  %v269 = vpop.permute.xlu0 %268
  %270 = vrot.lane.b32.xlu0 %v23, 100
  %v271 = vpop.permute.xlu0 %270
  %272 = vrot.lane.b32.xlu0 %v24, 100
  %v273 = vpop.permute.xlu0 %272
  %274 = vrot.lane.b32.xlu0 %v25, 100
  %v275 = vpop.permute.xlu0 %274
  %276 = vrot.lane.b32.xlu0 %v26, 100
  %v277 = vpop.permute.xlu0 %276
  %278 = vrot.lane.b32.xlu0 %v27, 100
  %v279 = vpop.permute.xlu0 %278
  %280 = vrot.lane.b32.xlu0 %v28, 100
  %v281 = vpop.permute.xlu0 %280
  %282 = vrot.lane.b32.xlu0 %v29, 100
  %v283 = vpop.permute.xlu0 %282
  %284 = vrot.lane.b32.xlu0 %v30, 100
  %v285 = vpop.permute.xlu0 %284
  %286 = vrot.lane.b32.xlu0 %v31, 100
  %v287 = vpop.permute.xlu0 %286
  %288 = vrot.lane.b32.xlu0 %v32, 100
  %v289 = vpop.permute.xlu0 %288
  %290 = vrot.lane.b32.xlu0 %v33, 100
  %v291 = vpop.permute.xlu0 %290
  %292 = vrot.lane.b32.xlu0 %v34, 100
  %v293 = vpop.permute.xlu0 %292
  %294 = vrot.lane.b32.xlu0 %v35, 100
  %v295 = vpop.permute.xlu0 %294
  %296 = vrot.lane.b32.xlu0 %v36, 100
  %v297 = vpop.permute.xlu0 %296
  %298 = vrot.lane.b32.xlu0 %v37, 100
  %v299 = vpop.permute.xlu0 %298
  %300 = vrot.lane.b32.xlu0 %v38, 100
  %v301 = vpop.permute.xlu0 %300
  %vm302 = vcmp.lt.s32.totalorder %v81, 100
  %v303 = vsel %vm302, %v299, %v301
  %v304 = vsel %vm302, %v297, %v299
  %v305 = vsel %vm302, %v295, %v297
  %v306 = vsel %vm302, %v293, %v295
  %v307 = vsel %vm302, %v291, %v293
  %v308 = vsel %vm302, %v289, %v291
  %v309 = vsel %vm302, %v287, %v289
  %v310 = vsel %vm302, %v285, %v287
  %v311 = vsel %vm302, %v283, %v285
  %v312 = vsel %vm302, %v281, %v283
  %v313 = vsel %vm302, %v279, %v281
  %v314 = vsel %vm302, %v277, %v279
  %v315 = vsel %vm302, %v275, %v277
  %v316 = vsel %vm302, %v273, %v275
  %v317 = vsel %vm302, %v271, %v273
  %v318 = vsel %vm302, %v269, %v271
  %v319 = vsel %vm302, %v267, %v269
  %v320 = vsel %vm302, %v301, %v267
  %321 = vrot.lane.b32.xlu0 %v21, 99
  %v322 = vpop.permute.xlu0 %321
  %323 = vrot.lane.b32.xlu0 %v22, 99
  %v324 = vpop.permute.xlu0 %323
  %325 = vrot.lane.b32.xlu0 %v23, 99
  %v326 = vpop.permute.xlu0 %325
  %327 = vrot.lane.b32.xlu0 %v24, 99
  %v328 = vpop.permute.xlu0 %327
  %329 = vrot.lane.b32.xlu0 %v25, 99
  %v330 = vpop.permute.xlu0 %329
  %331 = vrot.lane.b32.xlu0 %v26, 99
  %v332 = vpop.permute.xlu0 %331
  %333 = vrot.lane.b32.xlu0 %v27, 99
  %v334 = vpop.permute.xlu0 %333
  %335 = vrot.lane.b32.xlu0 %v28, 99
  %v336 = vpop.permute.xlu0 %335
  %337 = vrot.lane.b32.xlu0 %v29, 99
  %v338 = vpop.permute.xlu0 %337
  %339 = vrot.lane.b32.xlu0 %v30, 99
  %v340 = vpop.permute.xlu0 %339
  %341 = vrot.lane.b32.xlu0 %v31, 99
  %v342 = vpop.permute.xlu0 %341
  %343 = vrot.lane.b32.xlu0 %v32, 99
  %v344 = vpop.permute.xlu0 %343
  %345 = vrot.lane.b32.xlu0 %v33, 99
  %v346 = vpop.permute.xlu0 %345
  %347 = vrot.lane.b32.xlu0 %v34, 99
  %v348 = vpop.permute.xlu0 %347
  %349 = vrot.lane.b32.xlu0 %v35, 99
  %v350 = vpop.permute.xlu0 %349
  %351 = vrot.lane.b32.xlu0 %v36, 99
  %v352 = vpop.permute.xlu0 %351
  %353 = vrot.lane.b32.xlu0 %v37, 99
  %v354 = vpop.permute.xlu0 %353
  %355 = vrot.lane.b32.xlu0 %v38, 99
  %v356 = vpop.permute.xlu0 %355
  %vm357 = vcmp.lt.s32.totalorder %v81, 99
  %v358 = vsel %vm357, %v354, %v356
  %v359 = vsel %vm357, %v352, %v354
  %v360 = vsel %vm357, %v350, %v352
  %v361 = vsel %vm357, %v348, %v350
  %v362 = vsel %vm357, %v346, %v348
  %v363 = vsel %vm357, %v344, %v346
  %v364 = vsel %vm357, %v342, %v344
  %v365 = vsel %vm357, %v340, %v342
  %v366 = vsel %vm357, %v338, %v340
  %v367 = vsel %vm357, %v336, %v338
  %v368 = vsel %vm357, %v334, %v336
  %v369 = vsel %vm357, %v332, %v334
  %v370 = vsel %vm357, %v330, %v332
  %v371 = vsel %vm357, %v328, %v330
  %v372 = vsel %vm357, %v326, %v328
  %v373 = vsel %vm357, %v324, %v326
  %v374 = vsel %vm357, %v322, %v324
  %v375 = vsel %vm357, %v356, %v322
  %376 = vrot.lane.b32.xlu0 %v21, 91
  %v377 = vpop.permute.xlu0 %376
  %378 = vrot.lane.b32.xlu0 %v22, 91
  %v379 = vpop.permute.xlu0 %378
  %380 = vrot.lane.b32.xlu0 %v23, 91
  %v381 = vpop.permute.xlu0 %380
  %382 = vrot.lane.b32.xlu0 %v24, 91
  %v383 = vpop.permute.xlu0 %382
  %384 = vrot.lane.b32.xlu0 %v25, 91
  %v385 = vpop.permute.xlu0 %384
  %386 = vrot.lane.b32.xlu0 %v26, 91
  %v387 = vpop.permute.xlu0 %386
  %388 = vrot.lane.b32.xlu0 %v27, 91
  %v389 = vpop.permute.xlu0 %388
  %390 = vrot.lane.b32.xlu0 %v28, 91
  %v391 = vpop.permute.xlu0 %390
  %392 = vrot.lane.b32.xlu0 %v29, 91
  %v393 = vpop.permute.xlu0 %392
  %394 = vrot.lane.b32.xlu0 %v30, 91
  %v395 = vpop.permute.xlu0 %394
  %396 = vrot.lane.b32.xlu0 %v31, 91
  %v397 = vpop.permute.xlu0 %396
  %398 = vrot.lane.b32.xlu0 %v32, 91
  %v399 = vpop.permute.xlu0 %398
  %400 = vrot.lane.b32.xlu0 %v33, 91
  %v401 = vpop.permute.xlu0 %400
  %402 = vrot.lane.b32.xlu0 %v34, 91
  %v403 = vpop.permute.xlu0 %402
  %404 = vrot.lane.b32.xlu0 %v35, 91
  %v405 = vpop.permute.xlu0 %404
  %406 = vrot.lane.b32.xlu0 %v36, 91
  %v407 = vpop.permute.xlu0 %406
  %408 = vrot.lane.b32.xlu0 %v37, 91
  %v409 = vpop.permute.xlu0 %408
  %410 = vrot.lane.b32.xlu0 %v38, 91
  %v411 = vpop.permute.xlu0 %410
  %vm412 = vcmp.lt.s32.totalorder %v81, 91
  %v413 = vsel %vm412, %v409, %v411
  %v414 = vsel %vm412, %v407, %v409
  %v415 = vsel %vm412, %v405, %v407
  %v416 = vsel %vm412, %v403, %v405
  %v417 = vsel %vm412, %v401, %v403
  %v418 = vsel %vm412, %v399, %v401
  %v419 = vsel %vm412, %v397, %v399
  %v420 = vsel %vm412, %v395, %v397
  %v421 = vsel %vm412, %v393, %v395
  %v422 = vsel %vm412, %v391, %v393
  %v423 = vsel %vm412, %v389, %v391
  %v424 = vsel %vm412, %v387, %v389
  %v425 = vsel %vm412, %v385, %v387
  %v426 = vsel %vm412, %v383, %v385
  %v427 = vsel %vm412, %v381, %v383
  %v428 = vsel %vm412, %v379, %v381
  %v429 = vsel %vm412, %v377, %v379
  %v430 = vsel %vm412, %v411, %v377
  %431 = vrot.lane.b32.xlu0 %v21, 90
  %v432 = vpop.permute.xlu0 %431
  %433 = vrot.lane.b32.xlu0 %v22, 90
  %v434 = vpop.permute.xlu0 %433
  %435 = vrot.lane.b32.xlu0 %v23, 90
  %v436 = vpop.permute.xlu0 %435
  %437 = vrot.lane.b32.xlu0 %v24, 90
  %v438 = vpop.permute.xlu0 %437
  %439 = vrot.lane.b32.xlu0 %v25, 90
  %v440 = vpop.permute.xlu0 %439
  %441 = vrot.lane.b32.xlu0 %v26, 90
  %v442 = vpop.permute.xlu0 %441
  %443 = vrot.lane.b32.xlu0 %v27, 90
  %v444 = vpop.permute.xlu0 %443
  %445 = vrot.lane.b32.xlu0 %v28, 90
  %v446 = vpop.permute.xlu0 %445
  %447 = vrot.lane.b32.xlu0 %v29, 90
  %v448 = vpop.permute.xlu0 %447
  %449 = vrot.lane.b32.xlu0 %v30, 90
  %v450 = vpop.permute.xlu0 %449
  %451 = vrot.lane.b32.xlu0 %v31, 90
  %v452 = vpop.permute.xlu0 %451
  %453 = vrot.lane.b32.xlu0 %v32, 90
  %v454 = vpop.permute.xlu0 %453
  %455 = vrot.lane.b32.xlu0 %v33, 90
  %v456 = vpop.permute.xlu0 %455
  %457 = vrot.lane.b32.xlu0 %v34, 90
  %v458 = vpop.permute.xlu0 %457
  %459 = vrot.lane.b32.xlu0 %v35, 90
  %v460 = vpop.permute.xlu0 %459
  %461 = vrot.lane.b32.xlu0 %v36, 90
  %v462 = vpop.permute.xlu0 %461
  %463 = vrot.lane.b32.xlu0 %v37, 90
  %v464 = vpop.permute.xlu0 %463
  %465 = vrot.lane.b32.xlu0 %v38, 90
  %v466 = vpop.permute.xlu0 %465
  %vm467 = vcmp.lt.s32.totalorder %v81, 90
  %v468 = vsel %vm467, %v464, %v466
  %v469 = vsel %vm467, %v462, %v464
  %v470 = vsel %vm467, %v460, %v462
  %v471 = vsel %vm467, %v458, %v460
  %v472 = vsel %vm467, %v456, %v458
  %v473 = vsel %vm467, %v454, %v456
  %v474 = vsel %vm467, %v452, %v454
  %v475 = vsel %vm467, %v450, %v452
  %v476 = vsel %vm467, %v448, %v450
  %v477 = vsel %vm467, %v446, %v448
  %v478 = vsel %vm467, %v444, %v446
  %v479 = vsel %vm467, %v442, %v444
  %v480 = vsel %vm467, %v440, %v442
  %v481 = vsel %vm467, %v438, %v440
  %v482 = vsel %vm467, %v436, %v438
  %v483 = vsel %vm467, %v434, %v436
  %v484 = vsel %vm467, %v432, %v434
  %v485 = vsel %vm467, %v466, %v432
  %486 = vrot.lane.b32.xlu0 %v21, 89
  %v487 = vpop.permute.xlu0 %486
  %488 = vrot.lane.b32.xlu0 %v22, 89
  %v489 = vpop.permute.xlu0 %488
  %490 = vrot.lane.b32.xlu0 %v23, 89
  %v491 = vpop.permute.xlu0 %490
  %492 = vrot.lane.b32.xlu0 %v24, 89
  %v493 = vpop.permute.xlu0 %492
  %494 = vrot.lane.b32.xlu0 %v25, 89
  %v495 = vpop.permute.xlu0 %494
  %496 = vrot.lane.b32.xlu0 %v26, 89
  %v497 = vpop.permute.xlu0 %496
  %498 = vrot.lane.b32.xlu0 %v27, 89
  %v499 = vpop.permute.xlu0 %498
  %500 = vrot.lane.b32.xlu0 %v28, 89
  %v501 = vpop.permute.xlu0 %500
  %502 = vrot.lane.b32.xlu0 %v29, 89
  %v503 = vpop.permute.xlu0 %502
  %504 = vrot.lane.b32.xlu0 %v30, 89
  %v505 = vpop.permute.xlu0 %504
  %506 = vrot.lane.b32.xlu0 %v31, 89
  %v507 = vpop.permute.xlu0 %506
  %508 = vrot.lane.b32.xlu0 %v32, 89
  %v509 = vpop.permute.xlu0 %508
  %510 = vrot.lane.b32.xlu0 %v33, 89
  %v511 = vpop.permute.xlu0 %510
  %512 = vrot.lane.b32.xlu0 %v34, 89
  %v513 = vpop.permute.xlu0 %512
  %514 = vrot.lane.b32.xlu0 %v35, 89
  %v515 = vpop.permute.xlu0 %514
  %516 = vrot.lane.b32.xlu0 %v36, 89
  %v517 = vpop.permute.xlu0 %516
  %518 = vrot.lane.b32.xlu0 %v37, 89
  %v519 = vpop.permute.xlu0 %518
  %520 = vrot.lane.b32.xlu0 %v38, 89
  %v521 = vpop.permute.xlu0 %520
  %vm522 = vcmp.lt.s32.totalorder %v81, 89
  %v523 = vsel %vm522, %v519, %v521
  %v524 = vsel %vm522, %v517, %v519
  %v525 = vsel %vm522, %v515, %v517
  %v526 = vsel %vm522, %v513, %v515
  %v527 = vsel %vm522, %v511, %v513
  %v528 = vsel %vm522, %v509, %v511
  %v529 = vsel %vm522, %v507, %v509
  %v530 = vsel %vm522, %v505, %v507
  %v531 = vsel %vm522, %v503, %v505
  %v532 = vsel %vm522, %v501, %v503
  %v533 = vsel %vm522, %v499, %v501
  %v534 = vsel %vm522, %v497, %v499
  %v535 = vsel %vm522, %v495, %v497
  %v536 = vsel %vm522, %v493, %v495
  %v537 = vsel %vm522, %v491, %v493
  %v538 = vsel %vm522, %v489, %v491
  %v539 = vsel %vm522, %v487, %v489
  %v540 = vsel %vm522, %v521, %v487
  %541 = vrot.lane.b32.xlu0 %v21, 11
  %v542 = vpop.permute.xlu0 %541
  %543 = vrot.lane.b32.xlu0 %v22, 11
  %v544 = vpop.permute.xlu0 %543
  %545 = vrot.lane.b32.xlu0 %v23, 11
  %v546 = vpop.permute.xlu0 %545
  %547 = vrot.lane.b32.xlu0 %v24, 11
  %v548 = vpop.permute.xlu0 %547
  %549 = vrot.lane.b32.xlu0 %v25, 11
  %v550 = vpop.permute.xlu0 %549
  %551 = vrot.lane.b32.xlu0 %v26, 11
  %v552 = vpop.permute.xlu0 %551
  %553 = vrot.lane.b32.xlu0 %v27, 11
  %v554 = vpop.permute.xlu0 %553
  %555 = vrot.lane.b32.xlu0 %v28, 11
  %v556 = vpop.permute.xlu0 %555
  %557 = vrot.lane.b32.xlu0 %v29, 11
  %v558 = vpop.permute.xlu0 %557
  %559 = vrot.lane.b32.xlu0 %v30, 11
  %v560 = vpop.permute.xlu0 %559
  %561 = vrot.lane.b32.xlu0 %v31, 11
  %v562 = vpop.permute.xlu0 %561
  %563 = vrot.lane.b32.xlu0 %v32, 11
  %v564 = vpop.permute.xlu0 %563
  %565 = vrot.lane.b32.xlu0 %v33, 11
  %v566 = vpop.permute.xlu0 %565
  %567 = vrot.lane.b32.xlu0 %v34, 11
  %v568 = vpop.permute.xlu0 %567
  %569 = vrot.lane.b32.xlu0 %v35, 11
  %v570 = vpop.permute.xlu0 %569
  %571 = vrot.lane.b32.xlu0 %v36, 11
  %v572 = vpop.permute.xlu0 %571
  %573 = vrot.lane.b32.xlu0 %v37, 11
  %v574 = vpop.permute.xlu0 %573
  %575 = vrot.lane.b32.xlu0 %v38, 11
  %v576 = vpop.permute.xlu0 %575
  %vm577 = vcmp.lt.s32.totalorder %v81, 11
  %v578 = vsel %vm577, %v574, %v576
  %v579 = vsel %vm577, %v572, %v574
  %v580 = vsel %vm577, %v570, %v572
  %v581 = vsel %vm577, %v568, %v570
  %v582 = vsel %vm577, %v566, %v568
  %v583 = vsel %vm577, %v564, %v566
  %v584 = vsel %vm577, %v562, %v564
  %v585 = vsel %vm577, %v560, %v562
  %v586 = vsel %vm577, %v558, %v560
  %v587 = vsel %vm577, %v556, %v558
  %v588 = vsel %vm577, %v554, %v556
  %v589 = vsel %vm577, %v552, %v554
  %v590 = vsel %vm577, %v550, %v552
  %v591 = vsel %vm577, %v548, %v550
  %v592 = vsel %vm577, %v546, %v548
  %v593 = vsel %vm577, %v544, %v546
  %v594 = vsel %vm577, %v542, %v544
  %v595 = vsel %vm577, %v576, %v542
  %596 = vrot.lane.b32.xlu0 %v21, 10
  %v597 = vpop.permute.xlu0 %596
  %598 = vrot.lane.b32.xlu0 %v22, 10
  %v599 = vpop.permute.xlu0 %598
  %600 = vrot.lane.b32.xlu0 %v23, 10
  %v601 = vpop.permute.xlu0 %600
  %602 = vrot.lane.b32.xlu0 %v24, 10
  %v603 = vpop.permute.xlu0 %602
  %604 = vrot.lane.b32.xlu0 %v25, 10
  %v605 = vpop.permute.xlu0 %604
  %606 = vrot.lane.b32.xlu0 %v26, 10
  %v607 = vpop.permute.xlu0 %606
  %608 = vrot.lane.b32.xlu0 %v27, 10
  %v609 = vpop.permute.xlu0 %608
  %610 = vrot.lane.b32.xlu0 %v28, 10
  %v611 = vpop.permute.xlu0 %610
  %612 = vrot.lane.b32.xlu0 %v29, 10
  %v613 = vpop.permute.xlu0 %612
  %614 = vrot.lane.b32.xlu0 %v30, 10
  %v615 = vpop.permute.xlu0 %614
  %616 = vrot.lane.b32.xlu0 %v31, 10
  %v617 = vpop.permute.xlu0 %616
  %618 = vrot.lane.b32.xlu0 %v32, 10
  %v619 = vpop.permute.xlu0 %618
  %620 = vrot.lane.b32.xlu0 %v33, 10
  %v621 = vpop.permute.xlu0 %620
  %622 = vrot.lane.b32.xlu0 %v34, 10
  %v623 = vpop.permute.xlu0 %622
  %624 = vrot.lane.b32.xlu0 %v35, 10
  %v625 = vpop.permute.xlu0 %624
  %626 = vrot.lane.b32.xlu0 %v36, 10
  %v627 = vpop.permute.xlu0 %626
  %628 = vrot.lane.b32.xlu0 %v37, 10
  %v629 = vpop.permute.xlu0 %628
  %630 = vrot.lane.b32.xlu0 %v38, 10
  %v631 = vpop.permute.xlu0 %630
  %vm632 = vcmp.lt.s32.totalorder %v81, 10
  %v633 = vsel %vm632, %v629, %v631
  %v634 = vsel %vm632, %v627, %v629
  %v635 = vsel %vm632, %v625, %v627
  %v636 = vsel %vm632, %v623, %v625
  %v637 = vsel %vm632, %v621, %v623
  %v638 = vsel %vm632, %v619, %v621
  %v639 = vsel %vm632, %v617, %v619
  %v640 = vsel %vm632, %v615, %v617
  %v641 = vsel %vm632, %v613, %v615
  %v642 = vsel %vm632, %v611, %v613
  %v643 = vsel %vm632, %v609, %v611
  %v644 = vsel %vm632, %v607, %v609
  %v645 = vsel %vm632, %v605, %v607
  %v646 = vsel %vm632, %v603, %v605
  %v647 = vsel %vm632, %v601, %v603
  %v648 = vsel %vm632, %v599, %v601
  %v649 = vsel %vm632, %v597, %v599
  %v650 = vsel %vm632, %v631, %v597
  %651 = vrot.lane.b32.xlu0 %v21, 9
  %v652 = vpop.permute.xlu0 %651
  %653 = vrot.lane.b32.xlu0 %v22, 9
  %v654 = vpop.permute.xlu0 %653
  %655 = vrot.lane.b32.xlu0 %v23, 9
  %v656 = vpop.permute.xlu0 %655
  %657 = vrot.lane.b32.xlu0 %v24, 9
  %v658 = vpop.permute.xlu0 %657
  %659 = vrot.lane.b32.xlu0 %v25, 9
  %v660 = vpop.permute.xlu0 %659
  %661 = vrot.lane.b32.xlu0 %v26, 9
  %v662 = vpop.permute.xlu0 %661
  %663 = vrot.lane.b32.xlu0 %v27, 9
  %v664 = vpop.permute.xlu0 %663
  %665 = vrot.lane.b32.xlu0 %v28, 9
  %v666 = vpop.permute.xlu0 %665
  %667 = vrot.lane.b32.xlu0 %v29, 9
  %v668 = vpop.permute.xlu0 %667
  %669 = vrot.lane.b32.xlu0 %v30, 9
  %v670 = vpop.permute.xlu0 %669
  %671 = vrot.lane.b32.xlu0 %v31, 9
  %v672 = vpop.permute.xlu0 %671
  %673 = vrot.lane.b32.xlu0 %v32, 9
  %v674 = vpop.permute.xlu0 %673
  %675 = vrot.lane.b32.xlu0 %v33, 9
  %v676 = vpop.permute.xlu0 %675
  %677 = vrot.lane.b32.xlu0 %v34, 9
  %v678 = vpop.permute.xlu0 %677
  %679 = vrot.lane.b32.xlu0 %v35, 9
  %v680 = vpop.permute.xlu0 %679
  %681 = vrot.lane.b32.xlu0 %v36, 9
  %v682 = vpop.permute.xlu0 %681
  %683 = vrot.lane.b32.xlu0 %v37, 9
  %v684 = vpop.permute.xlu0 %683
  %685 = vrot.lane.b32.xlu0 %v38, 9
  %v686 = vpop.permute.xlu0 %685
  %vm687 = vcmp.lt.s32.totalorder %v81, 9
  %v688 = vsel %vm687, %v684, %v686
  %v689 = vsel %vm687, %v682, %v684
  %v690 = vsel %vm687, %v680, %v682
  %v691 = vsel %vm687, %v678, %v680
  %v692 = vsel %vm687, %v676, %v678
  %v693 = vsel %vm687, %v674, %v676
  %v694 = vsel %vm687, %v672, %v674
  %v695 = vsel %vm687, %v670, %v672
  %v696 = vsel %vm687, %v668, %v670
  %v697 = vsel %vm687, %v666, %v668
  %v698 = vsel %vm687, %v664, %v666
  %v699 = vsel %vm687, %v662, %v664
  %v700 = vsel %vm687, %v660, %v662
  %v701 = vsel %vm687, %v658, %v660
  %v702 = vsel %vm687, %v656, %v658
  %v703 = vsel %vm687, %v654, %v656
  %v704 = vsel %vm687, %v652, %v654
  %v705 = vsel %vm687, %v686, %v652
  %706 = vrot.lane.b32.xlu0 %v21, 1
  %v707 = vpop.permute.xlu0 %706
  %708 = vrot.lane.b32.xlu0 %v22, 1
  %v709 = vpop.permute.xlu0 %708
  %710 = vrot.lane.b32.xlu0 %v23, 1
  %v711 = vpop.permute.xlu0 %710
  %712 = vrot.lane.b32.xlu0 %v24, 1
  %v713 = vpop.permute.xlu0 %712
  %714 = vrot.lane.b32.xlu0 %v25, 1
  %v715 = vpop.permute.xlu0 %714
  %716 = vrot.lane.b32.xlu0 %v26, 1
  %v717 = vpop.permute.xlu0 %716
  %718 = vrot.lane.b32.xlu0 %v27, 1
  %v719 = vpop.permute.xlu0 %718
  %720 = vrot.lane.b32.xlu0 %v28, 1
  %v721 = vpop.permute.xlu0 %720
  %722 = vrot.lane.b32.xlu0 %v29, 1
  %v723 = vpop.permute.xlu0 %722
  %724 = vrot.lane.b32.xlu0 %v30, 1
  %v725 = vpop.permute.xlu0 %724
  %726 = vrot.lane.b32.xlu0 %v31, 1
  %v727 = vpop.permute.xlu0 %726
  %728 = vrot.lane.b32.xlu0 %v32, 1
  %v729 = vpop.permute.xlu0 %728
  %730 = vrot.lane.b32.xlu0 %v33, 1
  %v731 = vpop.permute.xlu0 %730
  %732 = vrot.lane.b32.xlu0 %v34, 1
  %v733 = vpop.permute.xlu0 %732
  %734 = vrot.lane.b32.xlu0 %v35, 1
  %v735 = vpop.permute.xlu0 %734
  %736 = vrot.lane.b32.xlu0 %v36, 1
  %v737 = vpop.permute.xlu0 %736
  %738 = vrot.lane.b32.xlu0 %v37, 1
  %v739 = vpop.permute.xlu0 %738
  %740 = vrot.lane.b32.xlu0 %v38, 1
  %v741 = vpop.permute.xlu0 %740
  %vm742 = vcmp.lt.s32.totalorder %v81, 1
  %v743 = vsel %vm742, %v739, %v741
  %v744 = vsel %vm742, %v737, %v739
  %v745 = vsel %vm742, %v735, %v737
  %v746 = vsel %vm742, %v733, %v735
  %v747 = vsel %vm742, %v731, %v733
  %v748 = vsel %vm742, %v729, %v731
  %v749 = vsel %vm742, %v727, %v729
  %v750 = vsel %vm742, %v725, %v727
  %v751 = vsel %vm742, %v723, %v725
  %v752 = vsel %vm742, %v721, %v723
  %v753 = vsel %vm742, %v719, %v721
  %v754 = vsel %vm742, %v717, %v719
  %v755 = vsel %vm742, %v715, %v717
  %v756 = vsel %vm742, %v713, %v715
  %v757 = vsel %vm742, %v711, %v713
  %v758 = vsel %vm742, %v709, %v711
  %v759 = vsel %vm742, %v707, %v709
  %v760 = vsel %vm742, %v741, %v707
  %761 = vrot.lane.b32.xlu0 %v21, 127
  %v762 = vpop.permute.xlu0 %761
  %763 = vrot.lane.b32.xlu0 %v22, 127
  %v764 = vpop.permute.xlu0 %763
  %765 = vrot.lane.b32.xlu0 %v23, 127
  %v766 = vpop.permute.xlu0 %765
  %767 = vrot.lane.b32.xlu0 %v24, 127
  %v768 = vpop.permute.xlu0 %767
  %769 = vrot.lane.b32.xlu0 %v25, 127
  %v770 = vpop.permute.xlu0 %769
  %771 = vrot.lane.b32.xlu0 %v26, 127
  %v772 = vpop.permute.xlu0 %771
  %773 = vrot.lane.b32.xlu0 %v27, 127
  %v774 = vpop.permute.xlu0 %773
  %775 = vrot.lane.b32.xlu0 %v28, 127
  %v776 = vpop.permute.xlu0 %775
  %777 = vrot.lane.b32.xlu0 %v29, 127
  %v778 = vpop.permute.xlu0 %777
  %779 = vrot.lane.b32.xlu0 %v30, 127
  %v780 = vpop.permute.xlu0 %779
  %781 = vrot.lane.b32.xlu0 %v31, 127
  %v782 = vpop.permute.xlu0 %781
  %783 = vrot.lane.b32.xlu0 %v32, 127
  %v784 = vpop.permute.xlu0 %783
  %785 = vrot.lane.b32.xlu0 %v33, 127
  %v786 = vpop.permute.xlu0 %785
  %787 = vrot.lane.b32.xlu0 %v34, 127
  %v788 = vpop.permute.xlu0 %787
  %789 = vrot.lane.b32.xlu0 %v35, 127
  %v790 = vpop.permute.xlu0 %789
  %791 = vrot.lane.b32.xlu0 %v36, 127
  %v792 = vpop.permute.xlu0 %791
  %793 = vrot.lane.b32.xlu0 %v37, 127
  %v794 = vpop.permute.xlu0 %793
  %795 = vrot.lane.b32.xlu0 %v38, 127
  %v796 = vpop.permute.xlu0 %795
  %vm797 = vcmp.lt.s32.totalorder %v81, 127
  %v798 = vsel %vm797, %v794, %v796
  %v799 = vsel %vm797, %v792, %v794
  %v800 = vsel %vm797, %v790, %v792
  %v801 = vsel %vm797, %v788, %v790
  %v802 = vsel %vm797, %v786, %v788
  %v803 = vsel %vm797, %v784, %v786
  %v804 = vsel %vm797, %v782, %v784
  %v805 = vsel %vm797, %v780, %v782
  %v806 = vsel %vm797, %v778, %v780
  %v807 = vsel %vm797, %v776, %v778
  %v808 = vsel %vm797, %v774, %v776
  %v809 = vsel %vm797, %v772, %v774
  %v810 = vsel %vm797, %v770, %v772
  %v811 = vsel %vm797, %v768, %v770
  %v812 = vsel %vm797, %v766, %v768
  %v813 = vsel %vm797, %v764, %v766
  %v814 = vsel %vm797, %v762, %v764
  %v815 = vsel %vm797, %v796, %v762
  %816 = vrot.lane.b32.xlu0 %v21, 119
  %v817 = vpop.permute.xlu0 %816
  %818 = vrot.lane.b32.xlu0 %v22, 119
  %v819 = vpop.permute.xlu0 %818
  %820 = vrot.lane.b32.xlu0 %v23, 119
  %v821 = vpop.permute.xlu0 %820
  %822 = vrot.lane.b32.xlu0 %v24, 119
  %v823 = vpop.permute.xlu0 %822
  %824 = vrot.lane.b32.xlu0 %v25, 119
  %v825 = vpop.permute.xlu0 %824
  %826 = vrot.lane.b32.xlu0 %v26, 119
  %v827 = vpop.permute.xlu0 %826
  %828 = vrot.lane.b32.xlu0 %v27, 119
  %v829 = vpop.permute.xlu0 %828
  %830 = vrot.lane.b32.xlu0 %v28, 119
  %v831 = vpop.permute.xlu0 %830
  %832 = vrot.lane.b32.xlu0 %v29, 119
  %v833 = vpop.permute.xlu0 %832
  %834 = vrot.lane.b32.xlu0 %v30, 119
  %v835 = vpop.permute.xlu0 %834
  %836 = vrot.lane.b32.xlu0 %v31, 119
  %v837 = vpop.permute.xlu0 %836
  %838 = vrot.lane.b32.xlu0 %v32, 119
  %v839 = vpop.permute.xlu0 %838
  %840 = vrot.lane.b32.xlu0 %v33, 119
  %v841 = vpop.permute.xlu0 %840
  %842 = vrot.lane.b32.xlu0 %v34, 119
  %v843 = vpop.permute.xlu0 %842
  %844 = vrot.lane.b32.xlu0 %v35, 119
  %v845 = vpop.permute.xlu0 %844
  %846 = vrot.lane.b32.xlu0 %v36, 119
  %v847 = vpop.permute.xlu0 %846
  %848 = vrot.lane.b32.xlu0 %v37, 119
  %v849 = vpop.permute.xlu0 %848
  %850 = vrot.lane.b32.xlu0 %v38, 119
  %v851 = vpop.permute.xlu0 %850
  %vm852 = vcmp.lt.s32.totalorder %v81, 119
  %v853 = vsel %vm852, %v849, %v851
  %v854 = vsel %vm852, %v847, %v849
  %v855 = vsel %vm852, %v845, %v847
  %v856 = vsel %vm852, %v843, %v845
  %v857 = vsel %vm852, %v841, %v843
  %v858 = vsel %vm852, %v839, %v841
  %v859 = vsel %vm852, %v837, %v839
  %v860 = vsel %vm852, %v835, %v837
  %v861 = vsel %vm852, %v833, %v835
  %v862 = vsel %vm852, %v831, %v833
  %v863 = vsel %vm852, %v829, %v831
  %v864 = vsel %vm852, %v827, %v829
  %v865 = vsel %vm852, %v825, %v827
  %v866 = vsel %vm852, %v823, %v825
  %v867 = vsel %vm852, %v821, %v823
  %v868 = vsel %vm852, %v819, %v821
  %v869 = vsel %vm852, %v817, %v819
  %v870 = vsel %vm852, %v851, %v817
  %871 = vrot.lane.b32.xlu0 %v21, 118
  %v872 = vpop.permute.xlu0 %871
  %873 = vrot.lane.b32.xlu0 %v22, 118
  %v874 = vpop.permute.xlu0 %873
  %875 = vrot.lane.b32.xlu0 %v23, 118
  %v876 = vpop.permute.xlu0 %875
  %877 = vrot.lane.b32.xlu0 %v24, 118
  %v878 = vpop.permute.xlu0 %877
  %879 = vrot.lane.b32.xlu0 %v25, 118
  %v880 = vpop.permute.xlu0 %879
  %881 = vrot.lane.b32.xlu0 %v26, 118
  %v882 = vpop.permute.xlu0 %881
  %883 = vrot.lane.b32.xlu0 %v27, 118
  %v884 = vpop.permute.xlu0 %883
  %885 = vrot.lane.b32.xlu0 %v28, 118
  %v886 = vpop.permute.xlu0 %885
  %887 = vrot.lane.b32.xlu0 %v29, 118
  %v888 = vpop.permute.xlu0 %887
  %889 = vrot.lane.b32.xlu0 %v30, 118
  %v890 = vpop.permute.xlu0 %889
  %891 = vrot.lane.b32.xlu0 %v31, 118
  %v892 = vpop.permute.xlu0 %891
  %893 = vrot.lane.b32.xlu0 %v32, 118
  %v894 = vpop.permute.xlu0 %893
  %895 = vrot.lane.b32.xlu0 %v33, 118
  %v896 = vpop.permute.xlu0 %895
  %897 = vrot.lane.b32.xlu0 %v34, 118
  %v898 = vpop.permute.xlu0 %897
  %899 = vrot.lane.b32.xlu0 %v35, 118
  %v900 = vpop.permute.xlu0 %899
  %901 = vrot.lane.b32.xlu0 %v36, 118
  %v902 = vpop.permute.xlu0 %901
  %903 = vrot.lane.b32.xlu0 %v37, 118
  %v904 = vpop.permute.xlu0 %903
  %905 = vrot.lane.b32.xlu0 %v38, 118
  %v906 = vpop.permute.xlu0 %905
  %vm907 = vcmp.lt.s32.totalorder %v81, 118
  %v908 = vsel %vm907, %v904, %v906
  %v909 = vsel %vm907, %v902, %v904
  %v910 = vsel %vm907, %v900, %v902
  %v911 = vsel %vm907, %v898, %v900
  %v912 = vsel %vm907, %v896, %v898
  %v913 = vsel %vm907, %v894, %v896
  %v914 = vsel %vm907, %v892, %v894
  %v915 = vsel %vm907, %v890, %v892
  %v916 = vsel %vm907, %v888, %v890
  %v917 = vsel %vm907, %v886, %v888
  %v918 = vsel %vm907, %v884, %v886
  %v919 = vsel %vm907, %v882, %v884
  %v920 = vsel %vm907, %v880, %v882
  %v921 = vsel %vm907, %v878, %v880
  %v922 = vsel %vm907, %v876, %v878
  %v923 = vsel %vm907, %v874, %v876
  %v924 = vsel %vm907, %v872, %v874
  %v925 = vsel %vm907, %v906, %v872
  %926 = vrot.lane.b32.xlu0 %v21, 117
  %v927 = vpop.permute.xlu0 %926
  %928 = vrot.lane.b32.xlu0 %v22, 117
  %v929 = vpop.permute.xlu0 %928
  %930 = vrot.lane.b32.xlu0 %v23, 117
  %v931 = vpop.permute.xlu0 %930
  %932 = vrot.lane.b32.xlu0 %v24, 117
  %v933 = vpop.permute.xlu0 %932
  %934 = vrot.lane.b32.xlu0 %v25, 117
  %v935 = vpop.permute.xlu0 %934
  %936 = vrot.lane.b32.xlu0 %v26, 117
  %v937 = vpop.permute.xlu0 %936
  %938 = vrot.lane.b32.xlu0 %v27, 117
  %v939 = vpop.permute.xlu0 %938
  %940 = vrot.lane.b32.xlu0 %v28, 117
  %v941 = vpop.permute.xlu0 %940
  %942 = vrot.lane.b32.xlu0 %v29, 117
  %v943 = vpop.permute.xlu0 %942
  %944 = vrot.lane.b32.xlu0 %v30, 117
  %v945 = vpop.permute.xlu0 %944
  %946 = vrot.lane.b32.xlu0 %v31, 117
  %v947 = vpop.permute.xlu0 %946
  %948 = vrot.lane.b32.xlu0 %v32, 117
  %v949 = vpop.permute.xlu0 %948
  %950 = vrot.lane.b32.xlu0 %v33, 117
  %v951 = vpop.permute.xlu0 %950
  %952 = vrot.lane.b32.xlu0 %v34, 117
  %v953 = vpop.permute.xlu0 %952
  %954 = vrot.lane.b32.xlu0 %v35, 117
  %v955 = vpop.permute.xlu0 %954
  %956 = vrot.lane.b32.xlu0 %v36, 117
  %v957 = vpop.permute.xlu0 %956
  %958 = vrot.lane.b32.xlu0 %v37, 117
  %v959 = vpop.permute.xlu0 %958
  %960 = vrot.lane.b32.xlu0 %v38, 117
  %v961 = vpop.permute.xlu0 %960
  %vm962 = vcmp.lt.s32.totalorder %v81, 117
  %v963 = vsel %vm962, %v959, %v961
  %v964 = vsel %vm962, %v957, %v959
  %v965 = vsel %vm962, %v955, %v957
  %v966 = vsel %vm962, %v953, %v955
  %v967 = vsel %vm962, %v951, %v953
  %v968 = vsel %vm962, %v949, %v951
  %v969 = vsel %vm962, %v947, %v949
  %v970 = vsel %vm962, %v945, %v947
  %v971 = vsel %vm962, %v943, %v945
  %v972 = vsel %vm962, %v941, %v943
  %v973 = vsel %vm962, %v939, %v941
  %v974 = vsel %vm962, %v937, %v939
  %v975 = vsel %vm962, %v935, %v937
  %v976 = vsel %vm962, %v933, %v935
  %v977 = vsel %vm962, %v931, %v933
  %v978 = vsel %vm962, %v929, %v931
  %v979 = vsel %vm962, %v927, %v929
  %v980 = vsel %vm962, %v961, %v927
  %981 = vrot.lane.b32.xlu0 %v21, 39
  %v982 = vpop.permute.xlu0 %981
  %983 = vrot.lane.b32.xlu0 %v22, 39
  %v984 = vpop.permute.xlu0 %983
  %985 = vrot.lane.b32.xlu0 %v23, 39
  %v986 = vpop.permute.xlu0 %985
  %987 = vrot.lane.b32.xlu0 %v24, 39
  %v988 = vpop.permute.xlu0 %987
  %989 = vrot.lane.b32.xlu0 %v25, 39
  %v990 = vpop.permute.xlu0 %989
  %991 = vrot.lane.b32.xlu0 %v26, 39
  %v992 = vpop.permute.xlu0 %991
  %993 = vrot.lane.b32.xlu0 %v27, 39
  %v994 = vpop.permute.xlu0 %993
  %995 = vrot.lane.b32.xlu0 %v28, 39
  %v996 = vpop.permute.xlu0 %995
  %997 = vrot.lane.b32.xlu0 %v29, 39
  %v998 = vpop.permute.xlu0 %997
  %999 = vrot.lane.b32.xlu0 %v30, 39
  %v1000 = vpop.permute.xlu0 %999
  %1001 = vrot.lane.b32.xlu0 %v31, 39
  %v1002 = vpop.permute.xlu0 %1001
  %1003 = vrot.lane.b32.xlu0 %v32, 39
  %v1004 = vpop.permute.xlu0 %1003
  %1005 = vrot.lane.b32.xlu0 %v33, 39
  %v1006 = vpop.permute.xlu0 %1005
  %1007 = vrot.lane.b32.xlu0 %v34, 39
  %v1008 = vpop.permute.xlu0 %1007
  %1009 = vrot.lane.b32.xlu0 %v35, 39
  %v1010 = vpop.permute.xlu0 %1009
  %1011 = vrot.lane.b32.xlu0 %v36, 39
  %v1012 = vpop.permute.xlu0 %1011
  %1013 = vrot.lane.b32.xlu0 %v37, 39
  %v1014 = vpop.permute.xlu0 %1013
  %1015 = vrot.lane.b32.xlu0 %v38, 39
  %v1016 = vpop.permute.xlu0 %1015
  %vm1017 = vcmp.lt.s32.totalorder %v81, 39
  %v1018 = vsel %vm1017, %v1014, %v1016
  %v1019 = vsel %vm1017, %v1012, %v1014
  %v1020 = vsel %vm1017, %v1010, %v1012
  %v1021 = vsel %vm1017, %v1008, %v1010
  %v1022 = vsel %vm1017, %v1006, %v1008
  %v1023 = vsel %vm1017, %v1004, %v1006
  %v1024 = vsel %vm1017, %v1002, %v1004
  %v1025 = vsel %vm1017, %v1000, %v1002
  %v1026 = vsel %vm1017, %v998, %v1000
  %v1027 = vsel %vm1017, %v996, %v998
  %v1028 = vsel %vm1017, %v994, %v996
  %v1029 = vsel %vm1017, %v992, %v994
  %v1030 = vsel %vm1017, %v990, %v992
  %v1031 = vsel %vm1017, %v988, %v990
  %v1032 = vsel %vm1017, %v986, %v988
  %v1033 = vsel %vm1017, %v984, %v986
  %v1034 = vsel %vm1017, %v982, %v984
  %v1035 = vsel %vm1017, %v1016, %v982
  %1036 = vrot.lane.b32.xlu0 %v21, 38
  %v1037 = vpop.permute.xlu0 %1036
  %1038 = vrot.lane.b32.xlu0 %v22, 38
  %v1039 = vpop.permute.xlu0 %1038
  %1040 = vrot.lane.b32.xlu0 %v23, 38
  %v1041 = vpop.permute.xlu0 %1040
  %1042 = vrot.lane.b32.xlu0 %v24, 38
  %v1043 = vpop.permute.xlu0 %1042
  %1044 = vrot.lane.b32.xlu0 %v25, 38
  %v1045 = vpop.permute.xlu0 %1044
  %1046 = vrot.lane.b32.xlu0 %v26, 38
  %v1047 = vpop.permute.xlu0 %1046
  %1048 = vrot.lane.b32.xlu0 %v27, 38
  %v1049 = vpop.permute.xlu0 %1048
  %1050 = vrot.lane.b32.xlu0 %v28, 38
  %v1051 = vpop.permute.xlu0 %1050
  %1052 = vrot.lane.b32.xlu0 %v29, 38
  %v1053 = vpop.permute.xlu0 %1052
  %1054 = vrot.lane.b32.xlu0 %v30, 38
  %v1055 = vpop.permute.xlu0 %1054
  %1056 = vrot.lane.b32.xlu0 %v31, 38
  %v1057 = vpop.permute.xlu0 %1056
  %1058 = vrot.lane.b32.xlu0 %v32, 38
  %v1059 = vpop.permute.xlu0 %1058
  %1060 = vrot.lane.b32.xlu0 %v33, 38
  %v1061 = vpop.permute.xlu0 %1060
  %1062 = vrot.lane.b32.xlu0 %v34, 38
  %v1063 = vpop.permute.xlu0 %1062
  %1064 = vrot.lane.b32.xlu0 %v35, 38
  %v1065 = vpop.permute.xlu0 %1064
  %1066 = vrot.lane.b32.xlu0 %v36, 38
  %v1067 = vpop.permute.xlu0 %1066
  %1068 = vrot.lane.b32.xlu0 %v37, 38
  %v1069 = vpop.permute.xlu0 %1068
  %1070 = vrot.lane.b32.xlu0 %v38, 38
  %v1071 = vpop.permute.xlu0 %1070
  %vm1072 = vcmp.lt.s32.totalorder %v81, 38
  %v1073 = vsel %vm1072, %v1069, %v1071
  %v1074 = vsel %vm1072, %v1067, %v1069
  %v1075 = vsel %vm1072, %v1065, %v1067
  %v1076 = vsel %vm1072, %v1063, %v1065
  %v1077 = vsel %vm1072, %v1061, %v1063
  %v1078 = vsel %vm1072, %v1059, %v1061
  %v1079 = vsel %vm1072, %v1057, %v1059
  %v1080 = vsel %vm1072, %v1055, %v1057
  %v1081 = vsel %vm1072, %v1053, %v1055
  %v1082 = vsel %vm1072, %v1051, %v1053
  %v1083 = vsel %vm1072, %v1049, %v1051
  %v1084 = vsel %vm1072, %v1047, %v1049
  %v1085 = vsel %vm1072, %v1045, %v1047
  %v1086 = vsel %vm1072, %v1043, %v1045
  %v1087 = vsel %vm1072, %v1041, %v1043
  %v1088 = vsel %vm1072, %v1039, %v1041
  %v1089 = vsel %vm1072, %v1037, %v1039
  %v1090 = vsel %vm1072, %v1071, %v1037
  %1091 = vrot.lane.b32.xlu0 %v21, 37
  %v1092 = vpop.permute.xlu0 %1091
  %1093 = vrot.lane.b32.xlu0 %v22, 37
  %v1094 = vpop.permute.xlu0 %1093
  %1095 = vrot.lane.b32.xlu0 %v23, 37
  %v1096 = vpop.permute.xlu0 %1095
  %1097 = vrot.lane.b32.xlu0 %v24, 37
  %v1098 = vpop.permute.xlu0 %1097
  %1099 = vrot.lane.b32.xlu0 %v25, 37
  %v1100 = vpop.permute.xlu0 %1099
  %1101 = vrot.lane.b32.xlu0 %v26, 37
  %v1102 = vpop.permute.xlu0 %1101
  %1103 = vrot.lane.b32.xlu0 %v27, 37
  %v1104 = vpop.permute.xlu0 %1103
  %1105 = vrot.lane.b32.xlu0 %v28, 37
  %v1106 = vpop.permute.xlu0 %1105
  %1107 = vrot.lane.b32.xlu0 %v29, 37
  %v1108 = vpop.permute.xlu0 %1107
  %1109 = vrot.lane.b32.xlu0 %v30, 37
  %v1110 = vpop.permute.xlu0 %1109
  %1111 = vrot.lane.b32.xlu0 %v31, 37
  %v1112 = vpop.permute.xlu0 %1111
  %1113 = vrot.lane.b32.xlu0 %v32, 37
  %v1114 = vpop.permute.xlu0 %1113
  %1115 = vrot.lane.b32.xlu0 %v33, 37
  %v1116 = vpop.permute.xlu0 %1115
  %1117 = vrot.lane.b32.xlu0 %v34, 37
  %v1118 = vpop.permute.xlu0 %1117
  %1119 = vrot.lane.b32.xlu0 %v35, 37
  %v1120 = vpop.permute.xlu0 %1119
  %1121 = vrot.lane.b32.xlu0 %v36, 37
  %v1122 = vpop.permute.xlu0 %1121
  %1123 = vrot.lane.b32.xlu0 %v37, 37
  %v1124 = vpop.permute.xlu0 %1123
  %1125 = vrot.lane.b32.xlu0 %v38, 37
  %v1126 = vpop.permute.xlu0 %1125
  %vm1127 = vcmp.lt.s32.totalorder %v81, 37
  %v1128 = vsel %vm1127, %v1124, %v1126
  %v1129 = vsel %vm1127, %v1122, %v1124
  %v1130 = vsel %vm1127, %v1120, %v1122
  %v1131 = vsel %vm1127, %v1118, %v1120
  %v1132 = vsel %vm1127, %v1116, %v1118
  %v1133 = vsel %vm1127, %v1114, %v1116
  %v1134 = vsel %vm1127, %v1112, %v1114
  %v1135 = vsel %vm1127, %v1110, %v1112
  %v1136 = vsel %vm1127, %v1108, %v1110
  %v1137 = vsel %vm1127, %v1106, %v1108
  %v1138 = vsel %vm1127, %v1104, %v1106
  %v1139 = vsel %vm1127, %v1102, %v1104
  %v1140 = vsel %vm1127, %v1100, %v1102
  %v1141 = vsel %vm1127, %v1098, %v1100
  %v1142 = vsel %vm1127, %v1096, %v1098
  %v1143 = vsel %vm1127, %v1094, %v1096
  %v1144 = vsel %vm1127, %v1092, %v1094
  %v1145 = vsel %vm1127, %v1126, %v1092
  %1146 = vrot.lane.b32.xlu0 %v21, 29
  %v1147 = vpop.permute.xlu0 %1146
  %1148 = vrot.lane.b32.xlu0 %v22, 29
  %v1149 = vpop.permute.xlu0 %1148
  %1150 = vrot.lane.b32.xlu0 %v23, 29
  %v1151 = vpop.permute.xlu0 %1150
  %1152 = vrot.lane.b32.xlu0 %v24, 29
  %v1153 = vpop.permute.xlu0 %1152
  %1154 = vrot.lane.b32.xlu0 %v25, 29
  %v1155 = vpop.permute.xlu0 %1154
  %1156 = vrot.lane.b32.xlu0 %v26, 29
  %v1157 = vpop.permute.xlu0 %1156
  %1158 = vrot.lane.b32.xlu0 %v27, 29
  %v1159 = vpop.permute.xlu0 %1158
  %1160 = vrot.lane.b32.xlu0 %v28, 29
  %v1161 = vpop.permute.xlu0 %1160
  %1162 = vrot.lane.b32.xlu0 %v29, 29
  %v1163 = vpop.permute.xlu0 %1162
  %1164 = vrot.lane.b32.xlu0 %v30, 29
  %v1165 = vpop.permute.xlu0 %1164
  %1166 = vrot.lane.b32.xlu0 %v31, 29
  %v1167 = vpop.permute.xlu0 %1166
  %1168 = vrot.lane.b32.xlu0 %v32, 29
  %v1169 = vpop.permute.xlu0 %1168
  %1170 = vrot.lane.b32.xlu0 %v33, 29
  %v1171 = vpop.permute.xlu0 %1170
  %1172 = vrot.lane.b32.xlu0 %v34, 29
  %v1173 = vpop.permute.xlu0 %1172
  %1174 = vrot.lane.b32.xlu0 %v35, 29
  %v1175 = vpop.permute.xlu0 %1174
  %1176 = vrot.lane.b32.xlu0 %v36, 29
  %v1177 = vpop.permute.xlu0 %1176
  %1178 = vrot.lane.b32.xlu0 %v37, 29
  %v1179 = vpop.permute.xlu0 %1178
  %1180 = vrot.lane.b32.xlu0 %v38, 29
  %v1181 = vpop.permute.xlu0 %1180
  %vm1182 = vcmp.lt.s32.totalorder %v81, 29
  %v1183 = vsel %vm1182, %v1179, %v1181
  %v1184 = vsel %vm1182, %v1177, %v1179
  %v1185 = vsel %vm1182, %v1175, %v1177
  %v1186 = vsel %vm1182, %v1173, %v1175
  %v1187 = vsel %vm1182, %v1171, %v1173
  %v1188 = vsel %vm1182, %v1169, %v1171
  %v1189 = vsel %vm1182, %v1167, %v1169
  %v1190 = vsel %vm1182, %v1165, %v1167
  %v1191 = vsel %vm1182, %v1163, %v1165
  %v1192 = vsel %vm1182, %v1161, %v1163
  %v1193 = vsel %vm1182, %v1159, %v1161
  %v1194 = vsel %vm1182, %v1157, %v1159
  %v1195 = vsel %vm1182, %v1155, %v1157
  %v1196 = vsel %vm1182, %v1153, %v1155
  %v1197 = vsel %vm1182, %v1151, %v1153
  %v1198 = vsel %vm1182, %v1149, %v1151
  %v1199 = vsel %vm1182, %v1147, %v1149
  %v1200 = vsel %vm1182, %v1181, %v1147
  %1201 = vrot.lane.b32.xlu0 %v21, 28
  %v1202 = vpop.permute.xlu0 %1201
  %1203 = vrot.lane.b32.xlu0 %v22, 28
  %v1204 = vpop.permute.xlu0 %1203
  %1205 = vrot.lane.b32.xlu0 %v23, 28
  %v1206 = vpop.permute.xlu0 %1205
  %1207 = vrot.lane.b32.xlu0 %v24, 28
  %v1208 = vpop.permute.xlu0 %1207
  %1209 = vrot.lane.b32.xlu0 %v25, 28
  %v1210 = vpop.permute.xlu0 %1209
  %1211 = vrot.lane.b32.xlu0 %v26, 28
  %v1212 = vpop.permute.xlu0 %1211
  %1213 = vrot.lane.b32.xlu0 %v27, 28
  %v1214 = vpop.permute.xlu0 %1213
  %1215 = vrot.lane.b32.xlu0 %v28, 28
  %v1216 = vpop.permute.xlu0 %1215
  %1217 = vrot.lane.b32.xlu0 %v29, 28
  %v1218 = vpop.permute.xlu0 %1217
  %1219 = vrot.lane.b32.xlu0 %v30, 28
  %v1220 = vpop.permute.xlu0 %1219
  %1221 = vrot.lane.b32.xlu0 %v31, 28
  %v1222 = vpop.permute.xlu0 %1221
  %1223 = vrot.lane.b32.xlu0 %v32, 28
  %v1224 = vpop.permute.xlu0 %1223
  %1225 = vrot.lane.b32.xlu0 %v33, 28
  %v1226 = vpop.permute.xlu0 %1225
  %1227 = vrot.lane.b32.xlu0 %v34, 28
  %v1228 = vpop.permute.xlu0 %1227
  %1229 = vrot.lane.b32.xlu0 %v35, 28
  %v1230 = vpop.permute.xlu0 %1229
  %1231 = vrot.lane.b32.xlu0 %v36, 28
  %v1232 = vpop.permute.xlu0 %1231
  %1233 = vrot.lane.b32.xlu0 %v37, 28
  %v1234 = vpop.permute.xlu0 %1233
  %1235 = vrot.lane.b32.xlu0 %v38, 28
  %v1236 = vpop.permute.xlu0 %1235
  %vm1237 = vcmp.lt.s32.totalorder %v81, 28
  %v1238 = vsel %vm1237, %v1234, %v1236
  %v1239 = vsel %vm1237, %v1232, %v1234
  %v1240 = vsel %vm1237, %v1230, %v1232
  %v1241 = vsel %vm1237, %v1228, %v1230
  %v1242 = vsel %vm1237, %v1226, %v1228
  %v1243 = vsel %vm1237, %v1224, %v1226
  %v1244 = vsel %vm1237, %v1222, %v1224
  %v1245 = vsel %vm1237, %v1220, %v1222
  %v1246 = vsel %vm1237, %v1218, %v1220
  %v1247 = vsel %vm1237, %v1216, %v1218
  %v1248 = vsel %vm1237, %v1214, %v1216
  %v1249 = vsel %vm1237, %v1212, %v1214
  %v1250 = vsel %vm1237, %v1210, %v1212
  %v1251 = vsel %vm1237, %v1208, %v1210
  %v1252 = vsel %vm1237, %v1206, %v1208
  %v1253 = vsel %vm1237, %v1204, %v1206
  %v1254 = vsel %vm1237, %v1202, %v1204
  %v1255 = vsel %vm1237, %v1236, %v1202
  %1256 = vrot.lane.b32.xlu0 %v21, 27
  %v1257 = vpop.permute.xlu0 %1256
  %1258 = vrot.lane.b32.xlu0 %v22, 27
  %v1259 = vpop.permute.xlu0 %1258
  %1260 = vrot.lane.b32.xlu0 %v23, 27
  %v1261 = vpop.permute.xlu0 %1260
  %1262 = vrot.lane.b32.xlu0 %v24, 27
  %v1263 = vpop.permute.xlu0 %1262
  %1264 = vrot.lane.b32.xlu0 %v25, 27
  %v1265 = vpop.permute.xlu0 %1264
  %1266 = vrot.lane.b32.xlu0 %v26, 27
  %v1267 = vpop.permute.xlu0 %1266
  %1268 = vrot.lane.b32.xlu0 %v27, 27
  %v1269 = vpop.permute.xlu0 %1268
  %1270 = vrot.lane.b32.xlu0 %v28, 27
  %v1271 = vpop.permute.xlu0 %1270
  %1272 = vrot.lane.b32.xlu0 %v29, 27
  %v1273 = vpop.permute.xlu0 %1272
  %1274 = vrot.lane.b32.xlu0 %v30, 27
  %v1275 = vpop.permute.xlu0 %1274
  %1276 = vrot.lane.b32.xlu0 %v31, 27
  %v1277 = vpop.permute.xlu0 %1276
  %1278 = vrot.lane.b32.xlu0 %v32, 27
  %v1279 = vpop.permute.xlu0 %1278
  %1280 = vrot.lane.b32.xlu0 %v33, 27
  %v1281 = vpop.permute.xlu0 %1280
  %1282 = vrot.lane.b32.xlu0 %v34, 27
  %v1283 = vpop.permute.xlu0 %1282
  %1284 = vrot.lane.b32.xlu0 %v35, 27
  %v1285 = vpop.permute.xlu0 %1284
  %1286 = vrot.lane.b32.xlu0 %v36, 27
  %v1287 = vpop.permute.xlu0 %1286
  %1288 = vrot.lane.b32.xlu0 %v37, 27
  %v1289 = vpop.permute.xlu0 %1288
  %1290 = vrot.lane.b32.xlu0 %v38, 27
  %v1291 = vpop.permute.xlu0 %1290
  %vm1292 = vcmp.lt.s32.totalorder %v81, 27
  %v1293 = vsel %vm1292, %v1289, %v1291
  %v1294 = vsel %vm1292, %v1287, %v1289
  %v1295 = vsel %vm1292, %v1285, %v1287
  %v1296 = vsel %vm1292, %v1283, %v1285
  %v1297 = vsel %vm1292, %v1281, %v1283
  %v1298 = vsel %vm1292, %v1279, %v1281
  %v1299 = vsel %vm1292, %v1277, %v1279
  %v1300 = vsel %vm1292, %v1275, %v1277
  %v1301 = vsel %vm1292, %v1273, %v1275
  %v1302 = vsel %vm1292, %v1271, %v1273
  %v1303 = vsel %vm1292, %v1269, %v1271
  %v1304 = vsel %vm1292, %v1267, %v1269
  %v1305 = vsel %vm1292, %v1265, %v1267
  %v1306 = vsel %vm1292, %v1263, %v1265
  %v1307 = vsel %vm1292, %v1261, %v1263
  %v1308 = vsel %vm1292, %v1259, %v1261
  %v1309 = vsel %vm1292, %v1257, %v1259
  %v1310 = vsel %vm1292, %v1291, %v1257
  %1311 = vrot.lane.b32.xlu0 %v21, 19
  %v1312 = vpop.permute.xlu0 %1311
  %1313 = vrot.lane.b32.xlu0 %v22, 19
  %v1314 = vpop.permute.xlu0 %1313
  %1315 = vrot.lane.b32.xlu0 %v23, 19
  %v1316 = vpop.permute.xlu0 %1315
  %1317 = vrot.lane.b32.xlu0 %v24, 19
  %v1318 = vpop.permute.xlu0 %1317
  %1319 = vrot.lane.b32.xlu0 %v25, 19
  %v1320 = vpop.permute.xlu0 %1319
  %1321 = vrot.lane.b32.xlu0 %v26, 19
  %v1322 = vpop.permute.xlu0 %1321
  %1323 = vrot.lane.b32.xlu0 %v27, 19
  %v1324 = vpop.permute.xlu0 %1323
  %1325 = vrot.lane.b32.xlu0 %v28, 19
  %v1326 = vpop.permute.xlu0 %1325
  %1327 = vrot.lane.b32.xlu0 %v29, 19
  %v1328 = vpop.permute.xlu0 %1327
  %1329 = vrot.lane.b32.xlu0 %v30, 19
  %v1330 = vpop.permute.xlu0 %1329
  %1331 = vrot.lane.b32.xlu0 %v31, 19
  %v1332 = vpop.permute.xlu0 %1331
  %1333 = vrot.lane.b32.xlu0 %v32, 19
  %v1334 = vpop.permute.xlu0 %1333
  %1335 = vrot.lane.b32.xlu0 %v33, 19
  %v1336 = vpop.permute.xlu0 %1335
  %1337 = vrot.lane.b32.xlu0 %v34, 19
  %v1338 = vpop.permute.xlu0 %1337
  %1339 = vrot.lane.b32.xlu0 %v35, 19
  %v1340 = vpop.permute.xlu0 %1339
  %1341 = vrot.lane.b32.xlu0 %v36, 19
  %v1342 = vpop.permute.xlu0 %1341
  %1343 = vrot.lane.b32.xlu0 %v37, 19
  %v1344 = vpop.permute.xlu0 %1343
  %1345 = vrot.lane.b32.xlu0 %v38, 19
  %v1346 = vpop.permute.xlu0 %1345
  %vm1347 = vcmp.lt.s32.totalorder %v81, 19
  %v1348 = vsel %vm1347, %v1344, %v1346
  %v1349 = vsel %vm1347, %v1342, %v1344
  %v1350 = vsel %vm1347, %v1340, %v1342
  %v1351 = vsel %vm1347, %v1338, %v1340
  %v1352 = vsel %vm1347, %v1336, %v1338
  %v1353 = vsel %vm1347, %v1334, %v1336
  %v1354 = vsel %vm1347, %v1332, %v1334
  %v1355 = vsel %vm1347, %v1330, %v1332
  %v1356 = vsel %vm1347, %v1328, %v1330
  %v1357 = vsel %vm1347, %v1326, %v1328
  %v1358 = vsel %vm1347, %v1324, %v1326
  %v1359 = vsel %vm1347, %v1322, %v1324
  %v1360 = vsel %vm1347, %v1320, %v1322
  %v1361 = vsel %vm1347, %v1318, %v1320
  %v1362 = vsel %vm1347, %v1316, %v1318
  %v1363 = vsel %vm1347, %v1314, %v1316
  %v1364 = vsel %vm1347, %v1312, %v1314
  %v1365 = vsel %vm1347, %v1346, %v1312
  %1366 = vrot.lane.b32.xlu0 %v21, 18
  %v1367 = vpop.permute.xlu0 %1366
  %1368 = vrot.lane.b32.xlu0 %v22, 18
  %v1369 = vpop.permute.xlu0 %1368
  %1370 = vrot.lane.b32.xlu0 %v23, 18
  %v1371 = vpop.permute.xlu0 %1370
  %1372 = vrot.lane.b32.xlu0 %v24, 18
  %v1373 = vpop.permute.xlu0 %1372
  %1374 = vrot.lane.b32.xlu0 %v25, 18
  %v1375 = vpop.permute.xlu0 %1374
  %1376 = vrot.lane.b32.xlu0 %v26, 18
  %v1377 = vpop.permute.xlu0 %1376
  %1378 = vrot.lane.b32.xlu0 %v27, 18
  %v1379 = vpop.permute.xlu0 %1378
  %1380 = vrot.lane.b32.xlu0 %v28, 18
  %v1381 = vpop.permute.xlu0 %1380
  %1382 = vrot.lane.b32.xlu0 %v29, 18
  %v1383 = vpop.permute.xlu0 %1382
  %1384 = vrot.lane.b32.xlu0 %v30, 18
  %v1385 = vpop.permute.xlu0 %1384
  %1386 = vrot.lane.b32.xlu0 %v31, 18
  %v1387 = vpop.permute.xlu0 %1386
  %1388 = vrot.lane.b32.xlu0 %v32, 18
  %v1389 = vpop.permute.xlu0 %1388
  %1390 = vrot.lane.b32.xlu0 %v33, 18
  %v1391 = vpop.permute.xlu0 %1390
  %1392 = vrot.lane.b32.xlu0 %v34, 18
  %v1393 = vpop.permute.xlu0 %1392
  %1394 = vrot.lane.b32.xlu0 %v35, 18
  %v1395 = vpop.permute.xlu0 %1394
  %1396 = vrot.lane.b32.xlu0 %v36, 18
  %v1397 = vpop.permute.xlu0 %1396
  %1398 = vrot.lane.b32.xlu0 %v37, 18
  %v1399 = vpop.permute.xlu0 %1398
  %1400 = vrot.lane.b32.xlu0 %v38, 18
  %v1401 = vpop.permute.xlu0 %1400
  %vm1402 = vcmp.lt.s32.totalorder %v81, 18
  %v1403 = vsel %vm1402, %v1399, %v1401
  %v1404 = vsel %vm1402, %v1397, %v1399
  %v1405 = vsel %vm1402, %v1395, %v1397
  %v1406 = vsel %vm1402, %v1393, %v1395
  %v1407 = vsel %vm1402, %v1391, %v1393
  %v1408 = vsel %vm1402, %v1389, %v1391
  %v1409 = vsel %vm1402, %v1387, %v1389
  %v1410 = vsel %vm1402, %v1385, %v1387
  %v1411 = vsel %vm1402, %v1383, %v1385
  %v1412 = vsel %vm1402, %v1381, %v1383
  %v1413 = vsel %vm1402, %v1379, %v1381
  %v1414 = vsel %vm1402, %v1377, %v1379
  %v1415 = vsel %vm1402, %v1375, %v1377
  %v1416 = vsel %vm1402, %v1373, %v1375
  %v1417 = vsel %vm1402, %v1371, %v1373
  %v1418 = vsel %vm1402, %v1369, %v1371
  %v1419 = vsel %vm1402, %v1367, %v1369
  %v1420 = vsel %vm1402, %v1401, %v1367
  %1421 = vrot.lane.b32.xlu0 %v21, 17
  %v1422 = vpop.permute.xlu0 %1421
  %1423 = vrot.lane.b32.xlu0 %v22, 17
  %v1424 = vpop.permute.xlu0 %1423
  %1425 = vrot.lane.b32.xlu0 %v23, 17
  %v1426 = vpop.permute.xlu0 %1425
  %1427 = vrot.lane.b32.xlu0 %v24, 17
  %v1428 = vpop.permute.xlu0 %1427
  %1429 = vrot.lane.b32.xlu0 %v25, 17
  %v1430 = vpop.permute.xlu0 %1429
  %1431 = vrot.lane.b32.xlu0 %v26, 17
  %v1432 = vpop.permute.xlu0 %1431
  %1433 = vrot.lane.b32.xlu0 %v27, 17
  %v1434 = vpop.permute.xlu0 %1433
  %1435 = vrot.lane.b32.xlu0 %v28, 17
  %v1436 = vpop.permute.xlu0 %1435
  %1437 = vrot.lane.b32.xlu0 %v29, 17
  %v1438 = vpop.permute.xlu0 %1437
  %1439 = vrot.lane.b32.xlu0 %v30, 17
  %v1440 = vpop.permute.xlu0 %1439
  %1441 = vrot.lane.b32.xlu0 %v31, 17
  %v1442 = vpop.permute.xlu0 %1441
  %1443 = vrot.lane.b32.xlu0 %v32, 17
  %v1444 = vpop.permute.xlu0 %1443
  %1445 = vrot.lane.b32.xlu0 %v33, 17
  %v1446 = vpop.permute.xlu0 %1445
  %1447 = vrot.lane.b32.xlu0 %v34, 17
  %v1448 = vpop.permute.xlu0 %1447
  %1449 = vrot.lane.b32.xlu0 %v35, 17
  %v1450 = vpop.permute.xlu0 %1449
  %1451 = vrot.lane.b32.xlu0 %v36, 17
  %v1452 = vpop.permute.xlu0 %1451
  %1453 = vrot.lane.b32.xlu0 %v37, 17
  %v1454 = vpop.permute.xlu0 %1453
  %1455 = vrot.lane.b32.xlu0 %v38, 17
  %v1456 = vpop.permute.xlu0 %1455
  %vm1457 = vcmp.lt.s32.totalorder %v81, 17
  %v1458 = vsel %vm1457, %v1454, %v1456
  %v1459 = vsel %vm1457, %v1452, %v1454
  %v1460 = vsel %vm1457, %v1450, %v1452
  %v1461 = vsel %vm1457, %v1448, %v1450
  %v1462 = vsel %vm1457, %v1446, %v1448
  %v1463 = vsel %vm1457, %v1444, %v1446
  %v1464 = vsel %vm1457, %v1442, %v1444
  %v1465 = vsel %vm1457, %v1440, %v1442
  %v1466 = vsel %vm1457, %v1438, %v1440
  %v1467 = vsel %vm1457, %v1436, %v1438
  %v1468 = vsel %vm1457, %v1434, %v1436
  %v1469 = vsel %vm1457, %v1432, %v1434
  %v1470 = vsel %vm1457, %v1430, %v1432
  %v1471 = vsel %vm1457, %v1428, %v1430
  %v1472 = vsel %vm1457, %v1426, %v1428
  %v1473 = vsel %vm1457, %v1424, %v1426
  %v1474 = vsel %vm1457, %v1422, %v1424
  %v1475 = vsel %vm1457, %v1456, %v1422
  %v1476 = vpack.c.bf16 %v155, %v100
  %v1477 = vpack.c.bf16 %v154, %v99
  %v1478 = vpack.c.bf16 %v153, %v98
  %v1479 = vpack.c.bf16 %v152, %v97
  %v1480 = vpack.c.bf16 %v151, %v96
  %v1481 = vpack.c.bf16 %v150, %v95
  %v1482 = vpack.c.bf16 %v149, %v94
  %v1483 = vpack.c.bf16 %v148, %v93
  %v1484 = vpack.c.bf16 %v147, %v92
  %v1485 = vpack.c.bf16 %v146, %v91
  %v1486 = vpack.c.bf16 %v145, %v90
  %v1487 = vpack.c.bf16 %v144, %v89
  %v1488 = vpack.c.bf16 %v143, %v88
  %v1489 = vpack.c.bf16 %v142, %v87
  %v1490 = vpack.c.bf16 %v141, %v86
  %v1491 = vpack.c.bf16 %v140, %v85
  %v1492 = vpack.c.bf16 %v139, %v84
  %v1493 = vpack.c.bf16 %v138, %v83
  %v1494 = vpack.c.bf16 %v265, %v210
  %v1495 = vpack.c.bf16 %v264, %v209
  %v1496 = vpack.c.bf16 %v263, %v208
  %v1497 = vpack.c.bf16 %v262, %v207
  %v1498 = vpack.c.bf16 %v261, %v206
  %v1499 = vpack.c.bf16 %v260, %v205
  %v1500 = vpack.c.bf16 %v259, %v204
  %v1501 = vpack.c.bf16 %v258, %v203
  %v1502 = vpack.c.bf16 %v257, %v202
  %v1503 = vpack.c.bf16 %v256, %v201
  %v1504 = vpack.c.bf16 %v255, %v200
  %v1505 = vpack.c.bf16 %v254, %v199
  %v1506 = vpack.c.bf16 %v253, %v198
  %v1507 = vpack.c.bf16 %v252, %v197
  %v1508 = vpack.c.bf16 %v251, %v196
  %v1509 = vpack.c.bf16 %v250, %v195
  %v1510 = vpack.c.bf16 %v249, %v194
  %v1511 = vpack.c.bf16 %v248, %v193
  %v1512 = vpack.c.bf16 %v375, %v320
  %v1513 = vpack.c.bf16 %v374, %v319
  %v1514 = vpack.c.bf16 %v373, %v318
  %v1515 = vpack.c.bf16 %v372, %v317
  %v1516 = vpack.c.bf16 %v371, %v316
  %v1517 = vpack.c.bf16 %v370, %v315
  %v1518 = vpack.c.bf16 %v369, %v314
  %v1519 = vpack.c.bf16 %v368, %v313
  %v1520 = vpack.c.bf16 %v367, %v312
  %v1521 = vpack.c.bf16 %v366, %v311
  %v1522 = vpack.c.bf16 %v365, %v310
  %v1523 = vpack.c.bf16 %v364, %v309
  %v1524 = vpack.c.bf16 %v363, %v308
  %v1525 = vpack.c.bf16 %v362, %v307
  %v1526 = vpack.c.bf16 %v361, %v306
  %v1527 = vpack.c.bf16 %v360, %v305
  %v1528 = vpack.c.bf16 %v359, %v304
  %v1529 = vpack.c.bf16 %v358, %v303
  %v1530 = vpack.c.bf16 %v485, %v430
  %v1531 = vpack.c.bf16 %v484, %v429
  %v1532 = vpack.c.bf16 %v483, %v428
  %v1533 = vpack.c.bf16 %v482, %v427
  %v1534 = vpack.c.bf16 %v481, %v426
  %v1535 = vpack.c.bf16 %v480, %v425
  %v1536 = vpack.c.bf16 %v479, %v424
  %v1537 = vpack.c.bf16 %v478, %v423
  %v1538 = vpack.c.bf16 %v477, %v422
  %v1539 = vpack.c.bf16 %v476, %v421
  %v1540 = vpack.c.bf16 %v475, %v420
  %v1541 = vpack.c.bf16 %v474, %v419
  %v1542 = vpack.c.bf16 %v473, %v418
  %v1543 = vpack.c.bf16 %v472, %v417
  %v1544 = vpack.c.bf16 %v471, %v416
  %v1545 = vpack.c.bf16 %v470, %v415
  %v1546 = vpack.c.bf16 %v469, %v414
  %v1547 = vpack.c.bf16 %v468, %v413
  %v1548 = vpack.c.bf16 %v595, %v540
  %v1549 = vpack.c.bf16 %v594, %v539
  %v1550 = vpack.c.bf16 %v593, %v538
  %v1551 = vpack.c.bf16 %v592, %v537
  %v1552 = vpack.c.bf16 %v591, %v536
  %v1553 = vpack.c.bf16 %v590, %v535
  %v1554 = vpack.c.bf16 %v589, %v534
  %v1555 = vpack.c.bf16 %v588, %v533
  %v1556 = vpack.c.bf16 %v587, %v532
  %v1557 = vpack.c.bf16 %v586, %v531
  %v1558 = vpack.c.bf16 %v585, %v530
  %v1559 = vpack.c.bf16 %v584, %v529
  %v1560 = vpack.c.bf16 %v583, %v528
  %v1561 = vpack.c.bf16 %v582, %v527
  %v1562 = vpack.c.bf16 %v581, %v526
  %v1563 = vpack.c.bf16 %v580, %v525
  %v1564 = vpack.c.bf16 %v579, %v524
  %v1565 = vpack.c.bf16 %v578, %v523
  %v1566 = vpack.c.bf16 %v705, %v650
  %v1567 = vpack.c.bf16 %v704, %v649
  %v1568 = vpack.c.bf16 %v703, %v648
  %v1569 = vpack.c.bf16 %v702, %v647
  %v1570 = vpack.c.bf16 %v701, %v646
  %v1571 = vpack.c.bf16 %v700, %v645
  %v1572 = vpack.c.bf16 %v699, %v644
  %v1573 = vpack.c.bf16 %v698, %v643
  %v1574 = vpack.c.bf16 %v697, %v642
  %v1575 = vpack.c.bf16 %v696, %v641
  %v1576 = vpack.c.bf16 %v695, %v640
  %v1577 = vpack.c.bf16 %v694, %v639
  %v1578 = vpack.c.bf16 %v693, %v638
  %v1579 = vpack.c.bf16 %v692, %v637
  %v1580 = vpack.c.bf16 %v691, %v636
  %v1581 = vpack.c.bf16 %v690, %v635
  %v1582 = vpack.c.bf16 %v689, %v634
  %v1583 = vpack.c.bf16 %v688, %v633
  %v1584 = vpack.c.bf16 %v21, %v760
  %v1585 = vpack.c.bf16 %v22, %v759
  %v1586 = vpack.c.bf16 %v23, %v758
  %v1587 = vpack.c.bf16 %v24, %v757
  %v1588 = vpack.c.bf16 %v25, %v756
  %v1589 = vpack.c.bf16 %v26, %v755
  %v1590 = vpack.c.bf16 %v27, %v754
  %v1591 = vpack.c.bf16 %v28, %v753
  %v1592 = vpack.c.bf16 %v29, %v752
  %v1593 = vpack.c.bf16 %v30, %v751
  %v1594 = vpack.c.bf16 %v31, %v750
  %v1595 = vpack.c.bf16 %v32, %v749
  %v1596 = vpack.c.bf16 %v33, %v748
  %v1597 = vpack.c.bf16 %v34, %v747
  %v1598 = vpack.c.bf16 %v35, %v746
  %v1599 = vpack.c.bf16 %v36, %v745
  %v1600 = vpack.c.bf16 %v37, %v744
  %v1601 = vpack.c.bf16 %v38, %v743
  %v1602 = vpack.c.bf16 %v869, %v814
  %v1603 = vpack.c.bf16 %v868, %v813
  %v1604 = vpack.c.bf16 %v867, %v812
  %v1605 = vpack.c.bf16 %v866, %v811
  %v1606 = vpack.c.bf16 %v865, %v810
  %v1607 = vpack.c.bf16 %v864, %v809
  %v1608 = vpack.c.bf16 %v863, %v808
  %v1609 = vpack.c.bf16 %v862, %v807
  %v1610 = vpack.c.bf16 %v861, %v806
  %v1611 = vpack.c.bf16 %v860, %v805
  %v1612 = vpack.c.bf16 %v859, %v804
  %v1613 = vpack.c.bf16 %v858, %v803
  %v1614 = vpack.c.bf16 %v857, %v802
  %v1615 = vpack.c.bf16 %v856, %v801
  %v1616 = vpack.c.bf16 %v855, %v800
  %v1617 = vpack.c.bf16 %v854, %v799
  %v1618 = vpack.c.bf16 %v853, %v798
  %v1619 = vpack.c.bf16 %v870, %v815
  %v1620 = vpack.c.bf16 %v979, %v924
  %v1621 = vpack.c.bf16 %v978, %v923
  %v1622 = vpack.c.bf16 %v977, %v922
  %v1623 = vpack.c.bf16 %v976, %v921
  %v1624 = vpack.c.bf16 %v975, %v920
  %v1625 = vpack.c.bf16 %v974, %v919
  %v1626 = vpack.c.bf16 %v973, %v918
  %v1627 = vpack.c.bf16 %v972, %v917
  %v1628 = vpack.c.bf16 %v971, %v916
  %v1629 = vpack.c.bf16 %v970, %v915
  %v1630 = vpack.c.bf16 %v969, %v914
  %v1631 = vpack.c.bf16 %v968, %v913
  %v1632 = vpack.c.bf16 %v967, %v912
  %v1633 = vpack.c.bf16 %v966, %v911
  %v1634 = vpack.c.bf16 %v965, %v910
  %v1635 = vpack.c.bf16 %v964, %v909
  %v1636 = vpack.c.bf16 %v963, %v908
  %v1637 = vpack.c.bf16 %v980, %v925
  %v1638 = vpack.c.bf16 %v1089, %v1034
  %v1639 = vpack.c.bf16 %v1088, %v1033
  %v1640 = vpack.c.bf16 %v1087, %v1032
  %v1641 = vpack.c.bf16 %v1086, %v1031
  %v1642 = vpack.c.bf16 %v1085, %v1030
  %v1643 = vpack.c.bf16 %v1084, %v1029
  %v1644 = vpack.c.bf16 %v1083, %v1028
  %v1645 = vpack.c.bf16 %v1082, %v1027
  %v1646 = vpack.c.bf16 %v1081, %v1026
  %v1647 = vpack.c.bf16 %v1080, %v1025
  %v1648 = vpack.c.bf16 %v1079, %v1024
  %v1649 = vpack.c.bf16 %v1078, %v1023
  %v1650 = vpack.c.bf16 %v1077, %v1022
  %v1651 = vpack.c.bf16 %v1076, %v1021
  %v1652 = vpack.c.bf16 %v1075, %v1020
  %v1653 = vpack.c.bf16 %v1074, %v1019
  %v1654 = vpack.c.bf16 %v1073, %v1018
  %v1655 = vpack.c.bf16 %v1090, %v1035
  %v1656 = vpack.c.bf16 %v1199, %v1144
  %v1657 = vpack.c.bf16 %v1198, %v1143
  %v1658 = vpack.c.bf16 %v1197, %v1142
  %v1659 = vpack.c.bf16 %v1196, %v1141
  %v1660 = vpack.c.bf16 %v1195, %v1140
  %v1661 = vpack.c.bf16 %v1194, %v1139
  %v1662 = vpack.c.bf16 %v1193, %v1138
  %v1663 = vpack.c.bf16 %v1192, %v1137
  %v1664 = vpack.c.bf16 %v1191, %v1136
  %v1665 = vpack.c.bf16 %v1190, %v1135
  %v1666 = vpack.c.bf16 %v1189, %v1134
  %v1667 = vpack.c.bf16 %v1188, %v1133
  %v1668 = vpack.c.bf16 %v1187, %v1132
  %v1669 = vpack.c.bf16 %v1186, %v1131
  %v1670 = vpack.c.bf16 %v1185, %v1130
  %v1671 = vpack.c.bf16 %v1184, %v1129
  %v1672 = vpack.c.bf16 %v1183, %v1128
  %v1673 = vpack.c.bf16 %v1200, %v1145
  %v1674 = vpack.c.bf16 %v1309, %v1254
  %v1675 = vpack.c.bf16 %v1308, %v1253
  %v1676 = vpack.c.bf16 %v1307, %v1252
  %v1677 = vpack.c.bf16 %v1306, %v1251
  %v1678 = vpack.c.bf16 %v1305, %v1250
  %v1679 = vpack.c.bf16 %v1304, %v1249
  %v1680 = vpack.c.bf16 %v1303, %v1248
  %v1681 = vpack.c.bf16 %v1302, %v1247
  %v1682 = vpack.c.bf16 %v1301, %v1246
  %v1683 = vpack.c.bf16 %v1300, %v1245
  %v1684 = vpack.c.bf16 %v1299, %v1244
  %v1685 = vpack.c.bf16 %v1298, %v1243
  %v1686 = vpack.c.bf16 %v1297, %v1242
  %v1687 = vpack.c.bf16 %v1296, %v1241
  %v1688 = vpack.c.bf16 %v1295, %v1240
  %v1689 = vpack.c.bf16 %v1294, %v1239
  %v1690 = vpack.c.bf16 %v1293, %v1238
  %v1691 = vpack.c.bf16 %v1310, %v1255
  %v1692 = vpack.c.bf16 %v1419, %v1364
  %v1693 = vpack.c.bf16 %v1418, %v1363
  %v1694 = vpack.c.bf16 %v1417, %v1362
  %v1695 = vpack.c.bf16 %v1416, %v1361
  %v1696 = vpack.c.bf16 %v1415, %v1360
  %v1697 = vpack.c.bf16 %v1414, %v1359
  %v1698 = vpack.c.bf16 %v1413, %v1358
  %v1699 = vpack.c.bf16 %v1412, %v1357
  %v1700 = vpack.c.bf16 %v1411, %v1356
  %v1701 = vpack.c.bf16 %v1410, %v1355
  %v1702 = vpack.c.bf16 %v1409, %v1354
  %v1703 = vpack.c.bf16 %v1408, %v1353
  %v1704 = vpack.c.bf16 %v1407, %v1352
  %v1705 = vpack.c.bf16 %v1406, %v1351
  %v1706 = vpack.c.bf16 %v1405, %v1350
  %v1707 = vpack.c.bf16 %v1404, %v1349
  %v1708 = vpack.c.bf16 %v1403, %v1348
  %v1709 = vpack.c.bf16 %v1420, %v1365
  %v1710 = vpack.c.bf16 %v1474, %v1474
  %v1711 = vpack.c.bf16 %v1473, %v1473
  %v1712 = vpack.c.bf16 %v1472, %v1472
  %v1713 = vpack.c.bf16 %v1471, %v1471
  %v1714 = vpack.c.bf16 %v1470, %v1470
  %v1715 = vpack.c.bf16 %v1469, %v1469
  %v1716 = vpack.c.bf16 %v1468, %v1468
  %v1717 = vpack.c.bf16 %v1467, %v1467
  %v1718 = vpack.c.bf16 %v1466, %v1466
  %v1719 = vpack.c.bf16 %v1465, %v1465
  %v1720 = vpack.c.bf16 %v1464, %v1464
  %v1721 = vpack.c.bf16 %v1463, %v1463
  %v1722 = vpack.c.bf16 %v1462, %v1462
  %v1723 = vpack.c.bf16 %v1461, %v1461
  %v1724 = vpack.c.bf16 %v1460, %v1460
  %v1725 = vpack.c.bf16 %v1459, %v1459
  %v1726 = vpack.c.bf16 %v1458, %v1458
  %v1727 = vpack.c.bf16 %v1475, %v1475
  %v1730 = vunpack.c.l.b16 %v42
  %v1731 = vunpack.c.h.b16 %v42
  %v1732 = vunpack.c.l.b16 %v43
  %v1733 = vunpack.c.h.b16 %v43
  %v1734 = vpack.c.b16 %v1732, %v1730
  %v1735 = vpack.c.b16 %v1733, %v1731
  %vm1737 = vcmask 719872
  %v1739 = vsel %vm1737, %v1735, 0
  %vm1741 = vcmask 1043456
  %v1743 = vsel %vm1741, %v1710, 0
  %v1746 = vsel %vm1741, %v1711, 0
  %v1749 = vsel %vm1741, %v1712, 0
  %v1752 = vsel %vm1741, %v1713, 0
  %v1755 = vsel %vm1741, %v1714, 0
  %v1758 = vsel %vm1741, %v1715, 0
  %v1761 = vsel %vm1741, %v1716, 0
  %v1764 = vsel %vm1741, %v1717, 0
  %v1767 = vsel %vm1741, %v1718, 0
  %v1770 = vsel %vm1741, %v1719, 0
  %v1773 = vsel %vm1741, %v1720, 0
  %v1776 = vsel %vm1741, %v1721, 0
  %v1779 = vsel %vm1741, %v1722, 0
  %v1782 = vsel %vm1741, %v1723, 0
  %v1785 = vsel %vm1741, %v1724, 0
  %v1788 = vsel %vm1741, %v1725, 0
  %v1791 = vsel %vm1741, %v1726, 0
  %v1794 = vsel %vm1741, %v1727, 0
  %1796 = vmatprep.subr.bf16.mxu0 %v1603
  %1797 = vmatpush1.bf16.msra.mxu0 %v1602
  %1798 = vmatprep.subr.bf16.mxu0 %v1585
  %1799 = vmatpush1.bf16.msra.mxu0 %v1584
  %1800 = vmatprep.subr.bf16.mxu0 %v1567
  %1801 = vmatpush1.bf16.msra.mxu0 %v1566
  %1802 = vmatprep.subr.bf16.mxu0 %v1549
  %1803 = vmatpush1.bf16.msra.mxu0 %v1548
  %1804 = vmatprep.subr.bf16.mxu0 %v1531
  %1805 = vmatpush1.bf16.msra.mxu0 %v1530
  %1806 = vmatprep.subr.bf16.mxu0 %v1513
  %1807 = vmatpush1.bf16.msra.mxu0 %v1512
  %1808 = vmatprep.subr.bf16.mxu0 %v1495
  %1809 = vmatpush1.bf16.msra.mxu0 %v1494
  %1810 = vmatprep.subr.bf16.mxu0 %v1477
  %1811 = vmatpush1.bf16.msra.mxu0 %v1476
  %1812 = vmatprep.subr.bf16.mxu0 0
  %1813 = vmatpush2.bf16.msra.mxu0 0
  %1814 = vmatprep.subr.bf16.mxu0 0
  %1815 = vmatpush2.bf16.msra.mxu0 0
  %1816 = vmatprep.subr.bf16.mxu0 %v1746
  %1817 = vmatpush2.bf16.msra.mxu0 %v1743
  %1818 = vmatprep.subr.bf16.mxu0 %v1693
  %1819 = vmatpush2.bf16.msra.mxu0 %v1692
  %1820 = vmatprep.subr.bf16.mxu0 %v1675
  %1821 = vmatpush2.bf16.msra.mxu0 %v1674
  %1822 = vmatprep.subr.bf16.mxu0 %v1657
  %1823 = vmatpush2.bf16.msra.mxu0 %v1656
  %1824 = vmatprep.subr.bf16.mxu0 %v1639
  %1825 = vmatpush2.bf16.msra.mxu0 %v1638
  %1826 = vmatprep.subr.bf16.mxu0 %v1621
  %1827 = vmatpush2.bf16.msra.mxu0 %v1620
  %1828 = vmatprep.mubr.bf16.mxu0 %v1739
  %1829 = vmatmul.mubr.bf16.gmra.mxu0 %v1734
  %v1830 = vpop.f32.mrf.mxu0
  %v1831 = vadd.f32 0.0, %v1830
  %v1832 = vpop.f32.mrf.mxu0
  %v1833 = vadd.f32 0.0, %v1832
  %v1834 = vpop.f32.mrf.mxu0
  %v1835 = vadd.f32 0.0, %v1834
  %v1836 = vpop.f32.mrf.mxu0
  %v1837 = vadd.f32 0.0, %v1836
  %1838 = vdwg.mxu0
  %1839 = vmatprep.subr.bf16.mxu0 %v1605
  %1840 = vmatpush1.bf16.msra.mxu0 %v1604
  %1841 = vmatprep.subr.bf16.mxu0 %v1587
  %1842 = vmatpush1.bf16.msra.mxu0 %v1586
  %1843 = vmatprep.subr.bf16.mxu0 %v1569
  %1844 = vmatpush1.bf16.msra.mxu0 %v1568
  %1845 = vmatprep.subr.bf16.mxu0 %v1551
  %1846 = vmatpush1.bf16.msra.mxu0 %v1550
  %1847 = vmatprep.subr.bf16.mxu0 %v1533
  %1848 = vmatpush1.bf16.msra.mxu0 %v1532
  %1849 = vmatprep.subr.bf16.mxu0 %v1515
  %1850 = vmatpush1.bf16.msra.mxu0 %v1514
  %1851 = vmatprep.subr.bf16.mxu0 %v1497
  %1852 = vmatpush1.bf16.msra.mxu0 %v1496
  %1853 = vmatprep.subr.bf16.mxu0 %v1479
  %1854 = vmatpush1.bf16.msra.mxu0 %v1478
  %1855 = vmatprep.subr.bf16.mxu0 0
  %1856 = vmatpush2.bf16.msra.mxu0 0
  %1857 = vmatprep.subr.bf16.mxu0 0
  %1858 = vmatpush2.bf16.msra.mxu0 0
  %1859 = vmatprep.subr.bf16.mxu0 %v1752
  %1860 = vmatpush2.bf16.msra.mxu0 %v1749
  %1861 = vmatprep.subr.bf16.mxu0 %v1695
  %1862 = vmatpush2.bf16.msra.mxu0 %v1694
  %1863 = vmatprep.subr.bf16.mxu0 %v1677
  %1864 = vmatpush2.bf16.msra.mxu0 %v1676
  %1865 = vmatprep.subr.bf16.mxu0 %v1659
  %1866 = vmatpush2.bf16.msra.mxu0 %v1658
  %1867 = vmatprep.subr.bf16.mxu0 %v1641
  %1868 = vmatpush2.bf16.msra.mxu0 %v1640
  %1869 = vmatprep.subr.bf16.mxu0 %v1623
  %1870 = vmatpush2.bf16.msra.mxu0 %v1622
  %1871 = vmatprep.mubr.bf16.mxu0 %v1739
  %1872 = vmatmul.mubr.bf16.gmra.mxu0 %v1734
  %v1873 = vpop.f32.mrf.mxu0
  %v1874 = vadd.f32 0.0, %v1873
  %v1875 = vpop.f32.mrf.mxu0
  %v1876 = vadd.f32 0.0, %v1875
  %v1877 = vpop.f32.mrf.mxu0
  %v1878 = vadd.f32 0.0, %v1877
  %v1879 = vpop.f32.mrf.mxu0
  %v1880 = vadd.f32 0.0, %v1879
  %1881 = vdwg.mxu0
  %1882 = vmatprep.subr.bf16.mxu0 %v1607
  %1883 = vmatpush1.bf16.msra.mxu0 %v1606
  %1884 = vmatprep.subr.bf16.mxu0 %v1589
  %1885 = vmatpush1.bf16.msra.mxu0 %v1588
  %1886 = vmatprep.subr.bf16.mxu0 %v1571
  %1887 = vmatpush1.bf16.msra.mxu0 %v1570
  %1888 = vmatprep.subr.bf16.mxu0 %v1553
  %1889 = vmatpush1.bf16.msra.mxu0 %v1552
  %1890 = vmatprep.subr.bf16.mxu0 %v1535
  %1891 = vmatpush1.bf16.msra.mxu0 %v1534
  %1892 = vmatprep.subr.bf16.mxu0 %v1517
  %1893 = vmatpush1.bf16.msra.mxu0 %v1516
  %1894 = vmatprep.subr.bf16.mxu0 %v1499
  %1895 = vmatpush1.bf16.msra.mxu0 %v1498
  %1896 = vmatprep.subr.bf16.mxu0 %v1481
  %1897 = vmatpush1.bf16.msra.mxu0 %v1480
  %1898 = vmatprep.subr.bf16.mxu0 0
  %1899 = vmatpush2.bf16.msra.mxu0 0
  %1900 = vmatprep.subr.bf16.mxu0 0
  %1901 = vmatpush2.bf16.msra.mxu0 0
  %1902 = vmatprep.subr.bf16.mxu0 %v1758
  %1903 = vmatpush2.bf16.msra.mxu0 %v1755
  %1904 = vmatprep.subr.bf16.mxu0 %v1697
  %1905 = vmatpush2.bf16.msra.mxu0 %v1696
  %1906 = vmatprep.subr.bf16.mxu0 %v1679
  %1907 = vmatpush2.bf16.msra.mxu0 %v1678
  %1908 = vmatprep.subr.bf16.mxu0 %v1661
  %1909 = vmatpush2.bf16.msra.mxu0 %v1660
  %1910 = vmatprep.subr.bf16.mxu0 %v1643
  %1911 = vmatpush2.bf16.msra.mxu0 %v1642
  %1912 = vmatprep.subr.bf16.mxu0 %v1625
  %1913 = vmatpush2.bf16.msra.mxu0 %v1624
  %1914 = vmatprep.mubr.bf16.mxu0 %v1739
  %1915 = vmatmul.mubr.bf16.gmra.mxu0 %v1734
  %v1916 = vpop.f32.mrf.mxu0
  %v1917 = vadd.f32 0.0, %v1916
  %v1918 = vpop.f32.mrf.mxu0
  %v1919 = vadd.f32 0.0, %v1918
  %v1920 = vpop.f32.mrf.mxu0
  %v1921 = vadd.f32 0.0, %v1920
  %v1922 = vpop.f32.mrf.mxu0
  %v1923 = vadd.f32 0.0, %v1922
  %1924 = vdwg.mxu0
  %1925 = vmatprep.subr.bf16.mxu0 %v1609
  %1926 = vmatpush1.bf16.msra.mxu0 %v1608
  %1927 = vmatprep.subr.bf16.mxu0 %v1591
  %1928 = vmatpush1.bf16.msra.mxu0 %v1590
  %1929 = vmatprep.subr.bf16.mxu0 %v1573
  %1930 = vmatpush1.bf16.msra.mxu0 %v1572
  %1931 = vmatprep.subr.bf16.mxu0 %v1555
  %1932 = vmatpush1.bf16.msra.mxu0 %v1554
  %1933 = vmatprep.subr.bf16.mxu0 %v1537
  %1934 = vmatpush1.bf16.msra.mxu0 %v1536
  %1935 = vmatprep.subr.bf16.mxu0 %v1519
  %1936 = vmatpush1.bf16.msra.mxu0 %v1518
  %1937 = vmatprep.subr.bf16.mxu0 %v1501
  %1938 = vmatpush1.bf16.msra.mxu0 %v1500
  %1939 = vmatprep.subr.bf16.mxu0 %v1483
  %1940 = vmatpush1.bf16.msra.mxu0 %v1482
  %1941 = vmatprep.subr.bf16.mxu0 0
  %1942 = vmatpush2.bf16.msra.mxu0 0
  %1943 = vmatprep.subr.bf16.mxu0 0
  %1944 = vmatpush2.bf16.msra.mxu0 0
  %1945 = vmatprep.subr.bf16.mxu0 %v1764
  %1946 = vmatpush2.bf16.msra.mxu0 %v1761
  %1947 = vmatprep.subr.bf16.mxu0 %v1699
  %1948 = vmatpush2.bf16.msra.mxu0 %v1698
  %1949 = vmatprep.subr.bf16.mxu0 %v1681
  %1950 = vmatpush2.bf16.msra.mxu0 %v1680
  %1951 = vmatprep.subr.bf16.mxu0 %v1663
  %1952 = vmatpush2.bf16.msra.mxu0 %v1662
  %1953 = vmatprep.subr.bf16.mxu0 %v1645
  %1954 = vmatpush2.bf16.msra.mxu0 %v1644
  %1955 = vmatprep.subr.bf16.mxu0 %v1627
  %1956 = vmatpush2.bf16.msra.mxu0 %v1626
  %1957 = vmatprep.mubr.bf16.mxu0 %v1739
  %1958 = vmatmul.mubr.bf16.gmra.mxu0 %v1734
  %v1959 = vpop.f32.mrf.mxu0
  %v1960 = vadd.f32 0.0, %v1959
  %v1961 = vpop.f32.mrf.mxu0
  %v1962 = vadd.f32 0.0, %v1961
  %v1963 = vpop.f32.mrf.mxu0
  %v1964 = vadd.f32 0.0, %v1963
  %v1965 = vpop.f32.mrf.mxu0
  %v1966 = vadd.f32 0.0, %v1965
  %1967 = vdwg.mxu0
  %1968 = vmatprep.subr.bf16.mxu0 %v1611
  %1969 = vmatpush1.bf16.msra.mxu0 %v1610
  %1970 = vmatprep.subr.bf16.mxu0 %v1593
  %1971 = vmatpush1.bf16.msra.mxu0 %v1592
  %1972 = vmatprep.subr.bf16.mxu0 %v1575
  %1973 = vmatpush1.bf16.msra.mxu0 %v1574
  %1974 = vmatprep.subr.bf16.mxu0 %v1557
  %1975 = vmatpush1.bf16.msra.mxu0 %v1556
  %1976 = vmatprep.subr.bf16.mxu0 %v1539
  %1977 = vmatpush1.bf16.msra.mxu0 %v1538
  %1978 = vmatprep.subr.bf16.mxu0 %v1521
  %1979 = vmatpush1.bf16.msra.mxu0 %v1520
  %1980 = vmatprep.subr.bf16.mxu0 %v1503
  %1981 = vmatpush1.bf16.msra.mxu0 %v1502
  %1982 = vmatprep.subr.bf16.mxu0 %v1485
  %1983 = vmatpush1.bf16.msra.mxu0 %v1484
  %1984 = vmatprep.subr.bf16.mxu0 0
  %1985 = vmatpush2.bf16.msra.mxu0 0
  %1986 = vmatprep.subr.bf16.mxu0 0
  %1987 = vmatpush2.bf16.msra.mxu0 0
  %1988 = vmatprep.subr.bf16.mxu0 %v1770
  %1989 = vmatpush2.bf16.msra.mxu0 %v1767
  %1990 = vmatprep.subr.bf16.mxu0 %v1701
  %1991 = vmatpush2.bf16.msra.mxu0 %v1700
  %1992 = vmatprep.subr.bf16.mxu0 %v1683
  %1993 = vmatpush2.bf16.msra.mxu0 %v1682
  %1994 = vmatprep.subr.bf16.mxu0 %v1665
  %1995 = vmatpush2.bf16.msra.mxu0 %v1664
  %1996 = vmatprep.subr.bf16.mxu0 %v1647
  %1997 = vmatpush2.bf16.msra.mxu0 %v1646
  %1998 = vmatprep.subr.bf16.mxu0 %v1629
  %1999 = vmatpush2.bf16.msra.mxu0 %v1628
  %2000 = vmatprep.mubr.bf16.mxu0 %v1739
  %2001 = vmatmul.mubr.bf16.gmra.mxu0 %v1734
  %v2002 = vpop.f32.mrf.mxu0
  %v2003 = vadd.f32 0.0, %v2002
  %v2004 = vpop.f32.mrf.mxu0
  %v2005 = vadd.f32 0.0, %v2004
  %v2006 = vpop.f32.mrf.mxu0
  %v2007 = vadd.f32 0.0, %v2006
  %v2008 = vpop.f32.mrf.mxu0
  %v2009 = vadd.f32 0.0, %v2008
  %2010 = vdwg.mxu0
  %2011 = vmatprep.subr.bf16.mxu0 %v1613
  %2012 = vmatpush1.bf16.msra.mxu0 %v1612
  %2013 = vmatprep.subr.bf16.mxu0 %v1595
  %2014 = vmatpush1.bf16.msra.mxu0 %v1594
  %2015 = vmatprep.subr.bf16.mxu0 %v1577
  %2016 = vmatpush1.bf16.msra.mxu0 %v1576
  %2017 = vmatprep.subr.bf16.mxu0 %v1559
  %2018 = vmatpush1.bf16.msra.mxu0 %v1558
  %2019 = vmatprep.subr.bf16.mxu0 %v1541
  %2020 = vmatpush1.bf16.msra.mxu0 %v1540
  %2021 = vmatprep.subr.bf16.mxu0 %v1523
  %2022 = vmatpush1.bf16.msra.mxu0 %v1522
  %2023 = vmatprep.subr.bf16.mxu0 %v1505
  %2024 = vmatpush1.bf16.msra.mxu0 %v1504
  %2025 = vmatprep.subr.bf16.mxu0 %v1487
  %2026 = vmatpush1.bf16.msra.mxu0 %v1486
  %2027 = vmatprep.subr.bf16.mxu0 0
  %2028 = vmatpush2.bf16.msra.mxu0 0
  %2029 = vmatprep.subr.bf16.mxu0 0
  %2030 = vmatpush2.bf16.msra.mxu0 0
  %2031 = vmatprep.subr.bf16.mxu0 %v1776
  %2032 = vmatpush2.bf16.msra.mxu0 %v1773
  %2033 = vmatprep.subr.bf16.mxu0 %v1703
  %2034 = vmatpush2.bf16.msra.mxu0 %v1702
  %2035 = vmatprep.subr.bf16.mxu0 %v1685
  %2036 = vmatpush2.bf16.msra.mxu0 %v1684
  %2037 = vmatprep.subr.bf16.mxu0 %v1667
  %2038 = vmatpush2.bf16.msra.mxu0 %v1666
  %2039 = vmatprep.subr.bf16.mxu0 %v1649
  %2040 = vmatpush2.bf16.msra.mxu0 %v1648
  %2041 = vmatprep.subr.bf16.mxu0 %v1631
  %2042 = vmatpush2.bf16.msra.mxu0 %v1630
  %2043 = vmatprep.mubr.bf16.mxu0 %v1739
  %2044 = vmatmul.mubr.bf16.gmra.mxu0 %v1734
  %v2045 = vpop.f32.mrf.mxu0
  %v2046 = vadd.f32 0.0, %v2045
  %v2047 = vpop.f32.mrf.mxu0
  %v2048 = vadd.f32 0.0, %v2047
  %v2049 = vpop.f32.mrf.mxu0
  %v2050 = vadd.f32 0.0, %v2049
  %v2051 = vpop.f32.mrf.mxu0
  %v2052 = vadd.f32 0.0, %v2051
  %2053 = vdwg.mxu0
  %2054 = vmatprep.subr.bf16.mxu0 %v1615
  %2055 = vmatpush1.bf16.msra.mxu0 %v1614
  %2056 = vmatprep.subr.bf16.mxu0 %v1597
  %2057 = vmatpush1.bf16.msra.mxu0 %v1596
  %2058 = vmatprep.subr.bf16.mxu0 %v1579
  %2059 = vmatpush1.bf16.msra.mxu0 %v1578
  %2060 = vmatprep.subr.bf16.mxu0 %v1561
  %2061 = vmatpush1.bf16.msra.mxu0 %v1560
  %2062 = vmatprep.subr.bf16.mxu0 %v1543
  %2063 = vmatpush1.bf16.msra.mxu0 %v1542
  %2064 = vmatprep.subr.bf16.mxu0 %v1525
  %2065 = vmatpush1.bf16.msra.mxu0 %v1524
  %2066 = vmatprep.subr.bf16.mxu0 %v1507
  %2067 = vmatpush1.bf16.msra.mxu0 %v1506
  %2068 = vmatprep.subr.bf16.mxu0 %v1489
  %2069 = vmatpush1.bf16.msra.mxu0 %v1488
  %2070 = vmatprep.subr.bf16.mxu0 0
  %2071 = vmatpush2.bf16.msra.mxu0 0
  %2072 = vmatprep.subr.bf16.mxu0 0
  %2073 = vmatpush2.bf16.msra.mxu0 0
  %2074 = vmatprep.subr.bf16.mxu0 %v1782
  %2075 = vmatpush2.bf16.msra.mxu0 %v1779
  %2076 = vmatprep.subr.bf16.mxu0 %v1705
  %2077 = vmatpush2.bf16.msra.mxu0 %v1704
  %2078 = vmatprep.subr.bf16.mxu0 %v1687
  %2079 = vmatpush2.bf16.msra.mxu0 %v1686
  %2080 = vmatprep.subr.bf16.mxu0 %v1669
  %2081 = vmatpush2.bf16.msra.mxu0 %v1668
  %2082 = vmatprep.subr.bf16.mxu0 %v1651
  %2083 = vmatpush2.bf16.msra.mxu0 %v1650
  %2084 = vmatprep.subr.bf16.mxu0 %v1633
  %2085 = vmatpush2.bf16.msra.mxu0 %v1632
  %2086 = vmatprep.mubr.bf16.mxu0 %v1739
  %2087 = vmatmul.mubr.bf16.gmra.mxu0 %v1734
  %v2088 = vpop.f32.mrf.mxu0
  %v2089 = vadd.f32 0.0, %v2088
  %v2090 = vpop.f32.mrf.mxu0
  %v2091 = vadd.f32 0.0, %v2090
  %v2092 = vpop.f32.mrf.mxu0
  %v2093 = vadd.f32 0.0, %v2092
  %v2094 = vpop.f32.mrf.mxu0
  %v2095 = vadd.f32 0.0, %v2094
  %2096 = vdwg.mxu0
  %2097 = vmatprep.subr.bf16.mxu0 %v1617
  %2098 = vmatpush1.bf16.msra.mxu0 %v1616
  %2099 = vmatprep.subr.bf16.mxu0 %v1599
  %2100 = vmatpush1.bf16.msra.mxu0 %v1598
  %2101 = vmatprep.subr.bf16.mxu0 %v1581
  %2102 = vmatpush1.bf16.msra.mxu0 %v1580
  %2103 = vmatprep.subr.bf16.mxu0 %v1563
  %2104 = vmatpush1.bf16.msra.mxu0 %v1562
  %2105 = vmatprep.subr.bf16.mxu0 %v1545
  %2106 = vmatpush1.bf16.msra.mxu0 %v1544
  %2107 = vmatprep.subr.bf16.mxu0 %v1527
  %2108 = vmatpush1.bf16.msra.mxu0 %v1526
  %2109 = vmatprep.subr.bf16.mxu0 %v1509
  %2110 = vmatpush1.bf16.msra.mxu0 %v1508
  %2111 = vmatprep.subr.bf16.mxu0 %v1491
  %2112 = vmatpush1.bf16.msra.mxu0 %v1490
  %2113 = vmatprep.subr.bf16.mxu0 0
  %2114 = vmatpush2.bf16.msra.mxu0 0
  %2115 = vmatprep.subr.bf16.mxu0 0
  %2116 = vmatpush2.bf16.msra.mxu0 0
  %2117 = vmatprep.subr.bf16.mxu0 %v1788
  %2118 = vmatpush2.bf16.msra.mxu0 %v1785
  %2119 = vmatprep.subr.bf16.mxu0 %v1707
  %2120 = vmatpush2.bf16.msra.mxu0 %v1706
  %2121 = vmatprep.subr.bf16.mxu0 %v1689
  %2122 = vmatpush2.bf16.msra.mxu0 %v1688
  %2123 = vmatprep.subr.bf16.mxu0 %v1671
  %2124 = vmatpush2.bf16.msra.mxu0 %v1670
  %2125 = vmatprep.subr.bf16.mxu0 %v1653
  %2126 = vmatpush2.bf16.msra.mxu0 %v1652
  %2127 = vmatprep.subr.bf16.mxu0 %v1635
  %2128 = vmatpush2.bf16.msra.mxu0 %v1634
  %2129 = vmatprep.mubr.bf16.mxu0 %v1739
  %2130 = vmatmul.mubr.bf16.gmra.mxu0 %v1734
  %v2131 = vpop.f32.mrf.mxu0
  %v2132 = vadd.f32 0.0, %v2131
  %v2133 = vpop.f32.mrf.mxu0
  %v2134 = vadd.f32 0.0, %v2133
  %v2135 = vpop.f32.mrf.mxu0
  %v2136 = vadd.f32 0.0, %v2135
  %v2137 = vpop.f32.mrf.mxu0
  %v2138 = vadd.f32 0.0, %v2137
  %2139 = vdwg.mxu0
  %2140 = vmatprep.subr.bf16.mxu0 %v1619
  %2141 = vmatpush1.bf16.msra.mxu0 %v1618
  %2142 = vmatprep.subr.bf16.mxu0 %v1601
  %2143 = vmatpush1.bf16.msra.mxu0 %v1600
  %2144 = vmatprep.subr.bf16.mxu0 %v1583
  %2145 = vmatpush1.bf16.msra.mxu0 %v1582
  %2146 = vmatprep.subr.bf16.mxu0 %v1565
  %2147 = vmatpush1.bf16.msra.mxu0 %v1564
  %2148 = vmatprep.subr.bf16.mxu0 %v1547
  %2149 = vmatpush1.bf16.msra.mxu0 %v1546
  %2150 = vmatprep.subr.bf16.mxu0 %v1529
  %2151 = vmatpush1.bf16.msra.mxu0 %v1528
  %2152 = vmatprep.subr.bf16.mxu0 %v1511
  %2153 = vmatpush1.bf16.msra.mxu0 %v1510
  %2154 = vmatprep.subr.bf16.mxu0 %v1493
  %2155 = vmatpush1.bf16.msra.mxu0 %v1492
  %2156 = vmatprep.subr.bf16.mxu0 0
  %2157 = vmatpush2.bf16.msra.mxu0 0
  %2158 = vmatprep.subr.bf16.mxu0 0
  %2159 = vmatpush2.bf16.msra.mxu0 0
  %2160 = vmatprep.subr.bf16.mxu0 %v1794
  %2161 = vmatpush2.bf16.msra.mxu0 %v1791
  %2162 = vmatprep.subr.bf16.mxu0 %v1709
  %2163 = vmatpush2.bf16.msra.mxu0 %v1708
  %2164 = vmatprep.subr.bf16.mxu0 %v1691
  %2165 = vmatpush2.bf16.msra.mxu0 %v1690
  %2166 = vmatprep.subr.bf16.mxu0 %v1673
  %2167 = vmatpush2.bf16.msra.mxu0 %v1672
  %2168 = vmatprep.subr.bf16.mxu0 %v1655
  %2169 = vmatpush2.bf16.msra.mxu0 %v1654
  %2170 = vmatprep.subr.bf16.mxu0 %v1637
  %2171 = vmatpush2.bf16.msra.mxu0 %v1636
  %2172 = vmatprep.mubr.bf16.mxu0 %v1739
  %2173 = vmatmul.mubr.bf16.gmra.mxu0 %v1734
  %v2174 = vpop.f32.mrf.mxu0
  %v2175 = vadd.f32 0.0, %v2174
  %v2176 = vpop.f32.mrf.mxu0
  %v2177 = vadd.f32 0.0, %v2176
  %v2178 = vpop.f32.mrf.mxu0
  %v2179 = vadd.f32 0.0, %v2178
  %v2180 = vpop.f32.mrf.mxu0
  %v2181 = vadd.f32 0.0, %v2180
  %2182 = vdwg.mxu0
  %s2183 = scalar_lea.vmem %s4, 32
  %v2184 = vld [vmem:[%s2183] sm:$0xff]
  %s2185 = scalar_lea.vmem %s4, 40
  %v2186 = vld [vmem:[%s2185] sm:$0xff]
  %v2190 = vlaneseq
  %v2191 = vshrl.u32 %v2190, 7
  %v2192 = vsub.s32 0, %v2191
  %v2193 = vrot.slane %v39, %v2192
  %v2194 = vlaneseq
  %v2195 = vshrl.u32 %v2194, 7
  %v2196 = vsub.s32 1, %v2195
  %v2197 = vrot.slane %v39, %v2196
  %v2198 = vlaneseq
  %v2199 = vshrl.u32 %v2198, 7
  %v2200 = vsub.s32 2, %v2199
  %v2201 = vrot.slane %v39, %v2200
  %v2202 = vlaneseq
  %v2203 = vshrl.u32 %v2202, 7
  %v2204 = vsub.s32 3, %v2203
  %v2205 = vrot.slane %v39, %v2204
  %v2206 = vlaneseq
  %v2207 = vshrl.u32 %v2206, 7
  %v2208 = vsub.s32 4, %v2207
  %v2209 = vrot.slane %v39, %v2208
  %v2210 = vlaneseq
  %v2211 = vshrl.u32 %v2210, 7
  %v2212 = vsub.s32 5, %v2211
  %v2213 = vrot.slane %v39, %v2212
  %v2214 = vlaneseq
  %v2215 = vshrl.u32 %v2214, 7
  %v2216 = vsub.s32 6, %v2215
  %v2217 = vrot.slane %v39, %v2216
  %v2218 = vlaneseq
  %v2219 = vshrl.u32 %v2218, 7
  %v2220 = vsub.s32 7, %v2219
  %v2221 = vrot.slane %v39, %v2220
  %v2222 = vlaneseq
  %v2223 = vshrl.u32 %v2222, 7
  %v2224 = vsub.s32 0, %v2223
  %v2225 = vrot.slane %v40, %v2224
  %v2226 = vlaneseq
  %v2227 = vshrl.u32 %v2226, 7
  %v2228 = vsub.s32 1, %v2227
  %v2229 = vrot.slane %v40, %v2228
  %v2230 = vlaneseq
  %v2231 = vshrl.u32 %v2230, 7
  %v2232 = vsub.s32 2, %v2231
  %v2233 = vrot.slane %v40, %v2232
  %v2234 = vlaneseq
  %v2235 = vshrl.u32 %v2234, 7
  %v2236 = vsub.s32 3, %v2235
  %v2237 = vrot.slane %v40, %v2236
  %v2238 = vlaneseq
  %v2239 = vshrl.u32 %v2238, 7
  %v2240 = vsub.s32 4, %v2239
  %v2241 = vrot.slane %v40, %v2240
  %v2242 = vlaneseq
  %v2243 = vshrl.u32 %v2242, 7
  %v2244 = vsub.s32 5, %v2243
  %v2245 = vrot.slane %v40, %v2244
  %v2246 = vlaneseq
  %v2247 = vshrl.u32 %v2246, 7
  %v2248 = vsub.s32 6, %v2247
  %v2249 = vrot.slane %v40, %v2248
  %v2250 = vlaneseq
  %v2251 = vshrl.u32 %v2250, 7
  %v2252 = vsub.s32 7, %v2251
  %v2253 = vrot.slane %v40, %v2252
  %v2254 = vlaneseq
  %v2255 = vshrl.u32 %v2254, 7
  %v2256 = vsub.s32 0, %v2255
  %v2257 = vrot.slane %v41, %v2256
  %v2258 = vlaneseq
  %v2259 = vshrl.u32 %v2258, 7
  %v2260 = vsub.s32 1, %v2259
  %v2261 = vrot.slane %v41, %v2260
  %v2280 = vmul.f32 %v1835, %v2193
  %v2281 = vmul.f32 %v1837, %v2197
  %v2282 = vmul.f32 %v1878, %v2201
  %v2283 = vmul.f32 %v1880, %v2205
  %v2284 = vmul.f32 %v1921, %v2209
  %v2285 = vmul.f32 %v1923, %v2213
  %v2286 = vmul.f32 %v1964, %v2217
  %v2287 = vmul.f32 %v1966, %v2221
  %v2288 = vmul.f32 %v2007, %v2225
  %v2289 = vmul.f32 %v2009, %v2229
  %v2290 = vmul.f32 %v2050, %v2233
  %v2291 = vmul.f32 %v2052, %v2237
  %v2292 = vmul.f32 %v2093, %v2241
  %v2293 = vmul.f32 %v2095, %v2245
  %v2294 = vmul.f32 %v2136, %v2249
  %v2295 = vmul.f32 %v2138, %v2253
  %v2296 = vmul.f32 %v2179, %v2257
  %v2297 = vmul.f32 %v2181, %v2261
  %v2298 = vadd.f32 %v2280, %v2281
  %v2299 = vadd.f32 %v2298, %v2282
  %v2300 = vadd.f32 %v2299, %v2283
  %v2301 = vadd.f32 %v2300, %v2284
  %v2302 = vadd.f32 %v2301, %v2285
  %v2303 = vadd.f32 %v2302, %v2286
  %v2304 = vadd.f32 %v2303, %v2287
  %v2305 = vadd.f32 %v2304, %v2288
  %v2306 = vadd.f32 %v2305, %v2289
  %v2307 = vadd.f32 %v2306, %v2290
  %v2308 = vadd.f32 %v2307, %v2291
  %v2309 = vadd.f32 %v2308, %v2292
  %v2310 = vadd.f32 %v2309, %v2293
  %v2311 = vadd.f32 %v2310, %v2294
  %v2312 = vadd.f32 %v2311, %v2295
  %v2313 = vadd.f32 %v2312, %v2296
  %v2314 = vadd.f32 %v2313, %v2297
  %2315 = vadd.xlane.f32.xlu0 %v2314
  %v2316 = vpop.xlane.xlu0 %2315
  %v2317 = vmul.f32 %v2316, 0.0009765625
  %v2318 = vmul.f32 %v2280, %v1835
  %v2319 = vmul.f32 %v2281, %v1837
  %v2320 = vmul.f32 %v2282, %v1878
  %v2321 = vmul.f32 %v2283, %v1880
  %v2322 = vmul.f32 %v2284, %v1921
  %v2323 = vmul.f32 %v2285, %v1923
  %v2324 = vmul.f32 %v2286, %v1964
  %v2325 = vmul.f32 %v2287, %v1966
  %v2326 = vmul.f32 %v2288, %v2007
  %v2327 = vmul.f32 %v2289, %v2009
  %v2328 = vmul.f32 %v2290, %v2050
  %v2329 = vmul.f32 %v2291, %v2052
  %v2330 = vmul.f32 %v2292, %v2093
  %v2331 = vmul.f32 %v2293, %v2095
  %v2332 = vmul.f32 %v2294, %v2136
  %v2333 = vmul.f32 %v2295, %v2138
  %v2334 = vmul.f32 %v2296, %v2179
  %v2335 = vmul.f32 %v2297, %v2181
  %v2336 = vadd.f32 %v2318, %v2319
  %v2337 = vadd.f32 %v2336, %v2320
  %v2338 = vadd.f32 %v2337, %v2321
  %v2339 = vadd.f32 %v2338, %v2322
  %v2340 = vadd.f32 %v2339, %v2323
  %v2341 = vadd.f32 %v2340, %v2324
  %v2342 = vadd.f32 %v2341, %v2325
  %v2343 = vadd.f32 %v2342, %v2326
  %v2344 = vadd.f32 %v2343, %v2327
  %v2345 = vadd.f32 %v2344, %v2328
  %v2346 = vadd.f32 %v2345, %v2329
  %v2347 = vadd.f32 %v2346, %v2330
  %v2348 = vadd.f32 %v2347, %v2331
  %v2349 = vadd.f32 %v2348, %v2332
  %v2350 = vadd.f32 %v2349, %v2333
  %v2351 = vadd.f32 %v2350, %v2334
  %v2352 = vadd.f32 %v2351, %v2335
  %2353 = vadd.xlane.f32.xlu0 %v2352
  %v2354 = vpop.xlane.xlu0 %2353
  %v2355 = vmul.f32 %v2354, 0.0009765625
  %v2356 = vmul.f32 %v2317, %v2317
  %v2357 = vsub.f32 %v2355, %v2356
  %v2358 = vadd.f32 %v2357, 1e-05
  %v2359 = vrsqrt.pop %v2358
  %v2360 = vsub.f32 %v1835, %v2317
  %v2361 = vsub.f32 %v1837, %v2317
  %v2362 = vsub.f32 %v1878, %v2317
  %v2363 = vsub.f32 %v1880, %v2317
  %v2364 = vsub.f32 %v1921, %v2317
  %v2365 = vsub.f32 %v1923, %v2317
  %v2366 = vsub.f32 %v1964, %v2317
  %v2367 = vsub.f32 %v1966, %v2317
  %v2368 = vsub.f32 %v2007, %v2317
  %v2369 = vsub.f32 %v2009, %v2317
  %v2370 = vsub.f32 %v2050, %v2317
  %v2371 = vsub.f32 %v2052, %v2317
  %v2372 = vsub.f32 %v2093, %v2317
  %v2373 = vsub.f32 %v2095, %v2317
  %v2374 = vsub.f32 %v2136, %v2317
  %v2375 = vsub.f32 %v2138, %v2317
  %v2376 = vsub.f32 %v2179, %v2317
  %v2377 = vsub.f32 %v2181, %v2317
  %v2378 = vmul.f32 %v2184, %v2359
  %2380 = vset.pattern.permute.xlu0 0
  %2381 = vperm.xlu0 %2380, %v2378
  %v2382 = vpop.permute.xlu0 %2381
  %v2384 = vmul.f32 %v2360, %v2382
  %v2385 = vmul.f32 %v2361, %v2382
  %v2386 = vmul.f32 %v2362, %v2382
  %v2387 = vmul.f32 %v2363, %v2382
  %v2388 = vmul.f32 %v2364, %v2382
  %v2389 = vmul.f32 %v2365, %v2382
  %v2390 = vmul.f32 %v2366, %v2382
  %v2391 = vmul.f32 %v2367, %v2382
  %v2392 = vmul.f32 %v2368, %v2382
  %v2393 = vmul.f32 %v2369, %v2382
  %v2394 = vmul.f32 %v2370, %v2382
  %v2395 = vmul.f32 %v2371, %v2382
  %v2396 = vmul.f32 %v2372, %v2382
  %v2397 = vmul.f32 %v2373, %v2382
  %v2398 = vmul.f32 %v2374, %v2382
  %v2399 = vmul.f32 %v2375, %v2382
  %v2400 = vmul.f32 %v2376, %v2382
  %v2401 = vmul.f32 %v2377, %v2382
  %2403 = vset.pattern.permute.xlu0 0
  %2404 = vperm.xlu0 %2403, %v2186
  %v2405 = vpop.permute.xlu0 %2404
  %v2407 = vadd.f32 %v2384, %v2405
  %v2408 = vadd.f32 %v2385, %v2405
  %v2409 = vadd.f32 %v2386, %v2405
  %v2410 = vadd.f32 %v2387, %v2405
  %v2411 = vadd.f32 %v2388, %v2405
  %v2412 = vadd.f32 %v2389, %v2405
  %v2413 = vadd.f32 %v2390, %v2405
  %v2414 = vadd.f32 %v2391, %v2405
  %v2415 = vadd.f32 %v2392, %v2405
  %v2416 = vadd.f32 %v2393, %v2405
  %v2417 = vadd.f32 %v2394, %v2405
  %v2418 = vadd.f32 %v2395, %v2405
  %v2419 = vadd.f32 %v2396, %v2405
  %v2420 = vadd.f32 %v2397, %v2405
  %v2421 = vadd.f32 %v2398, %v2405
  %v2422 = vadd.f32 %v2399, %v2405
  %v2423 = vadd.f32 %v2400, %v2405
  %v2424 = vadd.f32 %v2401, %v2405
  %v2425 = vld [vmem:[%s4] sm:$0xff]
  %s2426 = scalar_lea.vmem %s4, 8
  %v2427 = vld [vmem:[%s2426] sm:$0xff]
  %v2428 = vmul.f32 %v1831, %v2193
  %v2429 = vmul.f32 %v1833, %v2197
  %v2430 = vmul.f32 %v1874, %v2201
  %v2431 = vmul.f32 %v1876, %v2205
  %v2432 = vmul.f32 %v1917, %v2209
  %v2433 = vmul.f32 %v1919, %v2213
  %v2434 = vmul.f32 %v1960, %v2217
  %v2435 = vmul.f32 %v1962, %v2221
  %v2436 = vmul.f32 %v2003, %v2225
  %v2437 = vmul.f32 %v2005, %v2229
  %v2438 = vmul.f32 %v2046, %v2233
  %v2439 = vmul.f32 %v2048, %v2237
  %v2440 = vmul.f32 %v2089, %v2241
  %v2441 = vmul.f32 %v2091, %v2245
  %v2442 = vmul.f32 %v2132, %v2249
  %v2443 = vmul.f32 %v2134, %v2253
  %v2444 = vmul.f32 %v2175, %v2257
  %v2445 = vmul.f32 %v2177, %v2261
  %v2446 = vadd.f32 %v2428, %v2429
  %v2447 = vadd.f32 %v2446, %v2430
  %v2448 = vadd.f32 %v2447, %v2431
  %v2449 = vadd.f32 %v2448, %v2432
  %v2450 = vadd.f32 %v2449, %v2433
  %v2451 = vadd.f32 %v2450, %v2434
  %v2452 = vadd.f32 %v2451, %v2435
  %v2453 = vadd.f32 %v2452, %v2436
  %v2454 = vadd.f32 %v2453, %v2437
  %v2455 = vadd.f32 %v2454, %v2438
  %v2456 = vadd.f32 %v2455, %v2439
  %v2457 = vadd.f32 %v2456, %v2440
  %v2458 = vadd.f32 %v2457, %v2441
  %v2459 = vadd.f32 %v2458, %v2442
  %v2460 = vadd.f32 %v2459, %v2443
  %v2461 = vadd.f32 %v2460, %v2444
  %v2462 = vadd.f32 %v2461, %v2445
  %2463 = vadd.xlane.f32.xlu0 %v2462
  %v2464 = vpop.xlane.xlu0 %2463
  %v2465 = vmul.f32 %v2464, 0.0009765625
  %v2466 = vmul.f32 %v2428, %v1831
  %v2467 = vmul.f32 %v2429, %v1833
  %v2468 = vmul.f32 %v2430, %v1874
  %v2469 = vmul.f32 %v2431, %v1876
  %v2470 = vmul.f32 %v2432, %v1917
  %v2471 = vmul.f32 %v2433, %v1919
  %v2472 = vmul.f32 %v2434, %v1960
  %v2473 = vmul.f32 %v2435, %v1962
  %v2474 = vmul.f32 %v2436, %v2003
  %v2475 = vmul.f32 %v2437, %v2005
  %v2476 = vmul.f32 %v2438, %v2046
  %v2477 = vmul.f32 %v2439, %v2048
  %v2478 = vmul.f32 %v2440, %v2089
  %v2479 = vmul.f32 %v2441, %v2091
  %v2480 = vmul.f32 %v2442, %v2132
  %v2481 = vmul.f32 %v2443, %v2134
  %v2482 = vmul.f32 %v2444, %v2175
  %v2483 = vmul.f32 %v2445, %v2177
  %v2484 = vadd.f32 %v2466, %v2467
  %v2485 = vadd.f32 %v2484, %v2468
  %v2486 = vadd.f32 %v2485, %v2469
  %v2487 = vadd.f32 %v2486, %v2470
  %v2488 = vadd.f32 %v2487, %v2471
  %v2489 = vadd.f32 %v2488, %v2472
  %v2490 = vadd.f32 %v2489, %v2473
  %v2491 = vadd.f32 %v2490, %v2474
  %v2492 = vadd.f32 %v2491, %v2475
  %v2493 = vadd.f32 %v2492, %v2476
  %v2494 = vadd.f32 %v2493, %v2477
  %v2495 = vadd.f32 %v2494, %v2478
  %v2496 = vadd.f32 %v2495, %v2479
  %v2497 = vadd.f32 %v2496, %v2480
  %v2498 = vadd.f32 %v2497, %v2481
  %v2499 = vadd.f32 %v2498, %v2482
  %v2500 = vadd.f32 %v2499, %v2483
  %2501 = vadd.xlane.f32.xlu0 %v2500
  %v2502 = vpop.xlane.xlu0 %2501
  %v2503 = vmul.f32 %v2502, 0.0009765625
  %v2504 = vmul.f32 %v2465, %v2465
  %v2505 = vsub.f32 %v2503, %v2504
  %v2506 = vadd.f32 %v2505, 1e-05
  %v2507 = vrsqrt.pop %v2506
  %v2508 = vsub.f32 %v1831, %v2465
  %v2509 = vsub.f32 %v1833, %v2465
  %v2510 = vsub.f32 %v1874, %v2465
  %v2511 = vsub.f32 %v1876, %v2465
  %v2512 = vsub.f32 %v1917, %v2465
  %v2513 = vsub.f32 %v1919, %v2465
  %v2514 = vsub.f32 %v1960, %v2465
  %v2515 = vsub.f32 %v1962, %v2465
  %v2516 = vsub.f32 %v2003, %v2465
  %v2517 = vsub.f32 %v2005, %v2465
  %v2518 = vsub.f32 %v2046, %v2465
  %v2519 = vsub.f32 %v2048, %v2465
  %v2520 = vsub.f32 %v2089, %v2465
  %v2521 = vsub.f32 %v2091, %v2465
  %v2522 = vsub.f32 %v2132, %v2465
  %v2523 = vsub.f32 %v2134, %v2465
  %v2524 = vsub.f32 %v2175, %v2465
  %v2525 = vsub.f32 %v2177, %v2465
  %v2526 = vmul.f32 %v2425, %v2507
  %2528 = vset.pattern.permute.xlu0 0
  %2529 = vperm.xlu0 %2528, %v2526
  %v2530 = vpop.permute.xlu0 %2529
  %v2532 = vmul.f32 %v2508, %v2530
  %v2533 = vmul.f32 %v2509, %v2530
  %v2534 = vmul.f32 %v2510, %v2530
  %v2535 = vmul.f32 %v2511, %v2530
  %v2536 = vmul.f32 %v2512, %v2530
  %v2537 = vmul.f32 %v2513, %v2530
  %v2538 = vmul.f32 %v2514, %v2530
  %v2539 = vmul.f32 %v2515, %v2530
  %v2540 = vmul.f32 %v2516, %v2530
  %v2541 = vmul.f32 %v2517, %v2530
  %v2542 = vmul.f32 %v2518, %v2530
  %v2543 = vmul.f32 %v2519, %v2530
  %v2544 = vmul.f32 %v2520, %v2530
  %v2545 = vmul.f32 %v2521, %v2530
  %v2546 = vmul.f32 %v2522, %v2530
  %v2547 = vmul.f32 %v2523, %v2530
  %v2548 = vmul.f32 %v2524, %v2530
  %v2549 = vmul.f32 %v2525, %v2530
  %2551 = vset.pattern.permute.xlu0 0
  %2552 = vperm.xlu0 %2551, %v2427
  %v2553 = vpop.permute.xlu0 %2552
  %v2555 = vadd.f32 %v2532, %v2553
  %v2556 = vadd.f32 %v2533, %v2553
  %v2557 = vadd.f32 %v2534, %v2553
  %v2558 = vadd.f32 %v2535, %v2553
  %v2559 = vadd.f32 %v2536, %v2553
  %v2560 = vadd.f32 %v2537, %v2553
  %v2561 = vadd.f32 %v2538, %v2553
  %v2562 = vadd.f32 %v2539, %v2553
  %v2563 = vadd.f32 %v2540, %v2553
  %v2564 = vadd.f32 %v2541, %v2553
  %v2565 = vadd.f32 %v2542, %v2553
  %v2566 = vadd.f32 %v2543, %v2553
  %v2567 = vadd.f32 %v2544, %v2553
  %v2568 = vadd.f32 %v2545, %v2553
  %v2569 = vadd.f32 %v2546, %v2553
  %v2570 = vadd.f32 %v2547, %v2553
  %v2571 = vadd.f32 %v2548, %v2553
  %v2572 = vadd.f32 %v2549, %v2553
  %v2573 = vmax.f32 %v2555, 0.0
  %v2574 = vmax.f32 %v2556, 0.0
  %v2575 = vmax.f32 %v2557, 0.0
  %v2576 = vmax.f32 %v2558, 0.0
  %v2577 = vmax.f32 %v2559, 0.0
  %v2578 = vmax.f32 %v2560, 0.0
  %v2579 = vmax.f32 %v2561, 0.0
  %v2580 = vmax.f32 %v2562, 0.0
  %v2581 = vmax.f32 %v2563, 0.0
  %v2582 = vmax.f32 %v2564, 0.0
  %v2583 = vmax.f32 %v2565, 0.0
  %v2584 = vmax.f32 %v2566, 0.0
  %v2585 = vmax.f32 %v2567, 0.0
  %v2586 = vmax.f32 %v2568, 0.0
  %v2587 = vmax.f32 %v2569, 0.0
  %v2588 = vmax.f32 %v2570, 0.0
  %v2589 = vmax.f32 %v2571, 0.0
  %v2590 = vmax.f32 %v2572, 0.0
  %v2591 = vmul.f32 %v2573, %v2193
  %v2592 = vmul.f32 %v2574, %v2197
  %v2593 = vmul.f32 %v2575, %v2201
  %v2594 = vmul.f32 %v2576, %v2205
  %v2595 = vmul.f32 %v2577, %v2209
  %v2596 = vmul.f32 %v2578, %v2213
  %v2597 = vmul.f32 %v2579, %v2217
  %v2598 = vmul.f32 %v2580, %v2221
  %v2599 = vmul.f32 %v2581, %v2225
  %v2600 = vmul.f32 %v2582, %v2229
  %v2601 = vmul.f32 %v2583, %v2233
  %v2602 = vmul.f32 %v2584, %v2237
  %v2603 = vmul.f32 %v2585, %v2241
  %v2604 = vmul.f32 %v2586, %v2245
  %v2605 = vmul.f32 %v2587, %v2249
  %v2606 = vmul.f32 %v2588, %v2253
  %v2607 = vmul.f32 %v2589, %v2257
  %v2608 = vmul.f32 %v2590, %v2261
  %v2609 = vld [vmem:[%s3] sm:$0xff]
  %2610 = vrot.lane.b32.xlu0 %v2591, 111
  %v2611 = vpop.permute.xlu0 %2610
  %2612 = vrot.lane.b32.xlu0 %v2592, 111
  %v2613 = vpop.permute.xlu0 %2612
  %2614 = vrot.lane.b32.xlu0 %v2593, 111
  %v2615 = vpop.permute.xlu0 %2614
  %2616 = vrot.lane.b32.xlu0 %v2594, 111
  %v2617 = vpop.permute.xlu0 %2616
  %2618 = vrot.lane.b32.xlu0 %v2595, 111
  %v2619 = vpop.permute.xlu0 %2618
  %2620 = vrot.lane.b32.xlu0 %v2596, 111
  %v2621 = vpop.permute.xlu0 %2620
  %2622 = vrot.lane.b32.xlu0 %v2597, 111
  %v2623 = vpop.permute.xlu0 %2622
  %2624 = vrot.lane.b32.xlu0 %v2598, 111
  %v2625 = vpop.permute.xlu0 %2624
  %2626 = vrot.lane.b32.xlu0 %v2599, 111
  %v2627 = vpop.permute.xlu0 %2626
  %2628 = vrot.lane.b32.xlu0 %v2600, 111
  %v2629 = vpop.permute.xlu0 %2628
  %2630 = vrot.lane.b32.xlu0 %v2601, 111
  %v2631 = vpop.permute.xlu0 %2630
  %2632 = vrot.lane.b32.xlu0 %v2602, 111
  %v2633 = vpop.permute.xlu0 %2632
  %2634 = vrot.lane.b32.xlu0 %v2603, 111
  %v2635 = vpop.permute.xlu0 %2634
  %2636 = vrot.lane.b32.xlu0 %v2604, 111
  %v2637 = vpop.permute.xlu0 %2636
  %2638 = vrot.lane.b32.xlu0 %v2605, 111
  %v2639 = vpop.permute.xlu0 %2638
  %2640 = vrot.lane.b32.xlu0 %v2606, 111
  %v2641 = vpop.permute.xlu0 %2640
  %2642 = vrot.lane.b32.xlu0 %v2607, 111
  %v2643 = vpop.permute.xlu0 %2642
  %2644 = vrot.lane.b32.xlu0 %v2608, 111
  %v2645 = vpop.permute.xlu0 %2644
  %v2646 = vsel %vm82, %v2643, %v2645
  %v2647 = vsel %vm82, %v2641, %v2643
  %v2648 = vsel %vm82, %v2639, %v2641
  %v2649 = vsel %vm82, %v2637, %v2639
  %v2650 = vsel %vm82, %v2635, %v2637
  %v2651 = vsel %vm82, %v2633, %v2635
  %v2652 = vsel %vm82, %v2631, %v2633
  %v2653 = vsel %vm82, %v2629, %v2631
  %v2654 = vsel %vm82, %v2627, %v2629
  %v2655 = vsel %vm82, %v2625, %v2627
  %v2656 = vsel %vm82, %v2623, %v2625
  %v2657 = vsel %vm82, %v2621, %v2623
  %v2658 = vsel %vm82, %v2619, %v2621
  %v2659 = vsel %vm82, %v2617, %v2619
  %v2660 = vsel %vm82, %v2615, %v2617
  %v2661 = vsel %vm82, %v2613, %v2615
  %v2662 = vsel %vm82, %v2611, %v2613
  %v2663 = vsel %vm82, %v2645, %v2611
  %2664 = vrot.lane.b32.xlu0 %v2591, 110
  %v2665 = vpop.permute.xlu0 %2664
  %2666 = vrot.lane.b32.xlu0 %v2592, 110
  %v2667 = vpop.permute.xlu0 %2666
  %2668 = vrot.lane.b32.xlu0 %v2593, 110
  %v2669 = vpop.permute.xlu0 %2668
  %2670 = vrot.lane.b32.xlu0 %v2594, 110
  %v2671 = vpop.permute.xlu0 %2670
  %2672 = vrot.lane.b32.xlu0 %v2595, 110
  %v2673 = vpop.permute.xlu0 %2672
  %2674 = vrot.lane.b32.xlu0 %v2596, 110
  %v2675 = vpop.permute.xlu0 %2674
  %2676 = vrot.lane.b32.xlu0 %v2597, 110
  %v2677 = vpop.permute.xlu0 %2676
  %2678 = vrot.lane.b32.xlu0 %v2598, 110
  %v2679 = vpop.permute.xlu0 %2678
  %2680 = vrot.lane.b32.xlu0 %v2599, 110
  %v2681 = vpop.permute.xlu0 %2680
  %2682 = vrot.lane.b32.xlu0 %v2600, 110
  %v2683 = vpop.permute.xlu0 %2682
  %2684 = vrot.lane.b32.xlu0 %v2601, 110
  %v2685 = vpop.permute.xlu0 %2684
  %2686 = vrot.lane.b32.xlu0 %v2602, 110
  %v2687 = vpop.permute.xlu0 %2686
  %2688 = vrot.lane.b32.xlu0 %v2603, 110
  %v2689 = vpop.permute.xlu0 %2688
  %2690 = vrot.lane.b32.xlu0 %v2604, 110
  %v2691 = vpop.permute.xlu0 %2690
  %2692 = vrot.lane.b32.xlu0 %v2605, 110
  %v2693 = vpop.permute.xlu0 %2692
  %2694 = vrot.lane.b32.xlu0 %v2606, 110
  %v2695 = vpop.permute.xlu0 %2694
  %2696 = vrot.lane.b32.xlu0 %v2607, 110
  %v2697 = vpop.permute.xlu0 %2696
  %2698 = vrot.lane.b32.xlu0 %v2608, 110
  %v2699 = vpop.permute.xlu0 %2698
  %v2700 = vsel %vm137, %v2697, %v2699
  %v2701 = vsel %vm137, %v2695, %v2697
  %v2702 = vsel %vm137, %v2693, %v2695
  %v2703 = vsel %vm137, %v2691, %v2693
  %v2704 = vsel %vm137, %v2689, %v2691
  %v2705 = vsel %vm137, %v2687, %v2689
  %v2706 = vsel %vm137, %v2685, %v2687
  %v2707 = vsel %vm137, %v2683, %v2685
  %v2708 = vsel %vm137, %v2681, %v2683
  %v2709 = vsel %vm137, %v2679, %v2681
  %v2710 = vsel %vm137, %v2677, %v2679
  %v2711 = vsel %vm137, %v2675, %v2677
  %v2712 = vsel %vm137, %v2673, %v2675
  %v2713 = vsel %vm137, %v2671, %v2673
  %v2714 = vsel %vm137, %v2669, %v2671
  %v2715 = vsel %vm137, %v2667, %v2669
  %v2716 = vsel %vm137, %v2665, %v2667
  %v2717 = vsel %vm137, %v2699, %v2665
  %2718 = vrot.lane.b32.xlu0 %v2591, 109
  %v2719 = vpop.permute.xlu0 %2718
  %2720 = vrot.lane.b32.xlu0 %v2592, 109
  %v2721 = vpop.permute.xlu0 %2720
  %2722 = vrot.lane.b32.xlu0 %v2593, 109
  %v2723 = vpop.permute.xlu0 %2722
  %2724 = vrot.lane.b32.xlu0 %v2594, 109
  %v2725 = vpop.permute.xlu0 %2724
  %2726 = vrot.lane.b32.xlu0 %v2595, 109
  %v2727 = vpop.permute.xlu0 %2726
  %2728 = vrot.lane.b32.xlu0 %v2596, 109
  %v2729 = vpop.permute.xlu0 %2728
  %2730 = vrot.lane.b32.xlu0 %v2597, 109
  %v2731 = vpop.permute.xlu0 %2730
  %2732 = vrot.lane.b32.xlu0 %v2598, 109
  %v2733 = vpop.permute.xlu0 %2732
  %2734 = vrot.lane.b32.xlu0 %v2599, 109
  %v2735 = vpop.permute.xlu0 %2734
  %2736 = vrot.lane.b32.xlu0 %v2600, 109
  %v2737 = vpop.permute.xlu0 %2736
  %2738 = vrot.lane.b32.xlu0 %v2601, 109
  %v2739 = vpop.permute.xlu0 %2738
  %2740 = vrot.lane.b32.xlu0 %v2602, 109
  %v2741 = vpop.permute.xlu0 %2740
  %2742 = vrot.lane.b32.xlu0 %v2603, 109
  %v2743 = vpop.permute.xlu0 %2742
  %2744 = vrot.lane.b32.xlu0 %v2604, 109
  %v2745 = vpop.permute.xlu0 %2744
  %2746 = vrot.lane.b32.xlu0 %v2605, 109
  %v2747 = vpop.permute.xlu0 %2746
  %2748 = vrot.lane.b32.xlu0 %v2606, 109
  %v2749 = vpop.permute.xlu0 %2748
  %2750 = vrot.lane.b32.xlu0 %v2607, 109
  %v2751 = vpop.permute.xlu0 %2750
  %2752 = vrot.lane.b32.xlu0 %v2608, 109
  %v2753 = vpop.permute.xlu0 %2752
  %v2754 = vsel %vm192, %v2751, %v2753
  %v2755 = vsel %vm192, %v2749, %v2751
  %v2756 = vsel %vm192, %v2747, %v2749
  %v2757 = vsel %vm192, %v2745, %v2747
  %v2758 = vsel %vm192, %v2743, %v2745
  %v2759 = vsel %vm192, %v2741, %v2743
  %v2760 = vsel %vm192, %v2739, %v2741
  %v2761 = vsel %vm192, %v2737, %v2739
  %v2762 = vsel %vm192, %v2735, %v2737
  %v2763 = vsel %vm192, %v2733, %v2735
  %v2764 = vsel %vm192, %v2731, %v2733
  %v2765 = vsel %vm192, %v2729, %v2731
  %v2766 = vsel %vm192, %v2727, %v2729
  %v2767 = vsel %vm192, %v2725, %v2727
  %v2768 = vsel %vm192, %v2723, %v2725
  %v2769 = vsel %vm192, %v2721, %v2723
  %v2770 = vsel %vm192, %v2719, %v2721
  %v2771 = vsel %vm192, %v2753, %v2719
  %2772 = vrot.lane.b32.xlu0 %v2591, 101
  %v2773 = vpop.permute.xlu0 %2772
  %2774 = vrot.lane.b32.xlu0 %v2592, 101
  %v2775 = vpop.permute.xlu0 %2774
  %2776 = vrot.lane.b32.xlu0 %v2593, 101
  %v2777 = vpop.permute.xlu0 %2776
  %2778 = vrot.lane.b32.xlu0 %v2594, 101
  %v2779 = vpop.permute.xlu0 %2778
  %2780 = vrot.lane.b32.xlu0 %v2595, 101
  %v2781 = vpop.permute.xlu0 %2780
  %2782 = vrot.lane.b32.xlu0 %v2596, 101
  %v2783 = vpop.permute.xlu0 %2782
  %2784 = vrot.lane.b32.xlu0 %v2597, 101
  %v2785 = vpop.permute.xlu0 %2784
  %2786 = vrot.lane.b32.xlu0 %v2598, 101
  %v2787 = vpop.permute.xlu0 %2786
  %2788 = vrot.lane.b32.xlu0 %v2599, 101
  %v2789 = vpop.permute.xlu0 %2788
  %2790 = vrot.lane.b32.xlu0 %v2600, 101
  %v2791 = vpop.permute.xlu0 %2790
  %2792 = vrot.lane.b32.xlu0 %v2601, 101
  %v2793 = vpop.permute.xlu0 %2792
  %2794 = vrot.lane.b32.xlu0 %v2602, 101
  %v2795 = vpop.permute.xlu0 %2794
  %2796 = vrot.lane.b32.xlu0 %v2603, 101
  %v2797 = vpop.permute.xlu0 %2796
  %2798 = vrot.lane.b32.xlu0 %v2604, 101
  %v2799 = vpop.permute.xlu0 %2798
  %2800 = vrot.lane.b32.xlu0 %v2605, 101
  %v2801 = vpop.permute.xlu0 %2800
  %2802 = vrot.lane.b32.xlu0 %v2606, 101
  %v2803 = vpop.permute.xlu0 %2802
  %2804 = vrot.lane.b32.xlu0 %v2607, 101
  %v2805 = vpop.permute.xlu0 %2804
  %2806 = vrot.lane.b32.xlu0 %v2608, 101
  %v2807 = vpop.permute.xlu0 %2806
  %v2808 = vsel %vm247, %v2805, %v2807
  %v2809 = vsel %vm247, %v2803, %v2805
  %v2810 = vsel %vm247, %v2801, %v2803
  %v2811 = vsel %vm247, %v2799, %v2801
  %v2812 = vsel %vm247, %v2797, %v2799
  %v2813 = vsel %vm247, %v2795, %v2797
  %v2814 = vsel %vm247, %v2793, %v2795
  %v2815 = vsel %vm247, %v2791, %v2793
  %v2816 = vsel %vm247, %v2789, %v2791
  %v2817 = vsel %vm247, %v2787, %v2789
  %v2818 = vsel %vm247, %v2785, %v2787
  %v2819 = vsel %vm247, %v2783, %v2785
  %v2820 = vsel %vm247, %v2781, %v2783
  %v2821 = vsel %vm247, %v2779, %v2781
  %v2822 = vsel %vm247, %v2777, %v2779
  %v2823 = vsel %vm247, %v2775, %v2777
  %v2824 = vsel %vm247, %v2773, %v2775
  %v2825 = vsel %vm247, %v2807, %v2773
  %2826 = vrot.lane.b32.xlu0 %v2591, 100
  %v2827 = vpop.permute.xlu0 %2826
  %2828 = vrot.lane.b32.xlu0 %v2592, 100
  %v2829 = vpop.permute.xlu0 %2828
  %2830 = vrot.lane.b32.xlu0 %v2593, 100
  %v2831 = vpop.permute.xlu0 %2830
  %2832 = vrot.lane.b32.xlu0 %v2594, 100
  %v2833 = vpop.permute.xlu0 %2832
  %2834 = vrot.lane.b32.xlu0 %v2595, 100
  %v2835 = vpop.permute.xlu0 %2834
  %2836 = vrot.lane.b32.xlu0 %v2596, 100
  %v2837 = vpop.permute.xlu0 %2836
  %2838 = vrot.lane.b32.xlu0 %v2597, 100
  %v2839 = vpop.permute.xlu0 %2838
  %2840 = vrot.lane.b32.xlu0 %v2598, 100
  %v2841 = vpop.permute.xlu0 %2840
  %2842 = vrot.lane.b32.xlu0 %v2599, 100
  %v2843 = vpop.permute.xlu0 %2842
  %2844 = vrot.lane.b32.xlu0 %v2600, 100
  %v2845 = vpop.permute.xlu0 %2844
  %2846 = vrot.lane.b32.xlu0 %v2601, 100
  %v2847 = vpop.permute.xlu0 %2846
  %2848 = vrot.lane.b32.xlu0 %v2602, 100
  %v2849 = vpop.permute.xlu0 %2848
  %2850 = vrot.lane.b32.xlu0 %v2603, 100
  %v2851 = vpop.permute.xlu0 %2850
  %2852 = vrot.lane.b32.xlu0 %v2604, 100
  %v2853 = vpop.permute.xlu0 %2852
  %2854 = vrot.lane.b32.xlu0 %v2605, 100
  %v2855 = vpop.permute.xlu0 %2854
  %2856 = vrot.lane.b32.xlu0 %v2606, 100
  %v2857 = vpop.permute.xlu0 %2856
  %2858 = vrot.lane.b32.xlu0 %v2607, 100
  %v2859 = vpop.permute.xlu0 %2858
  %2860 = vrot.lane.b32.xlu0 %v2608, 100
  %v2861 = vpop.permute.xlu0 %2860
  %v2862 = vsel %vm302, %v2859, %v2861
  %v2863 = vsel %vm302, %v2857, %v2859
  %v2864 = vsel %vm302, %v2855, %v2857
  %v2865 = vsel %vm302, %v2853, %v2855
  %v2866 = vsel %vm302, %v2851, %v2853
  %v2867 = vsel %vm302, %v2849, %v2851
  %v2868 = vsel %vm302, %v2847, %v2849
  %v2869 = vsel %vm302, %v2845, %v2847
  %v2870 = vsel %vm302, %v2843, %v2845
  %v2871 = vsel %vm302, %v2841, %v2843
  %v2872 = vsel %vm302, %v2839, %v2841
  %v2873 = vsel %vm302, %v2837, %v2839
  %v2874 = vsel %vm302, %v2835, %v2837
  %v2875 = vsel %vm302, %v2833, %v2835
  %v2876 = vsel %vm302, %v2831, %v2833
  %v2877 = vsel %vm302, %v2829, %v2831
  %v2878 = vsel %vm302, %v2827, %v2829
  %v2879 = vsel %vm302, %v2861, %v2827
  %2880 = vrot.lane.b32.xlu0 %v2591, 99
  %v2881 = vpop.permute.xlu0 %2880
  %2882 = vrot.lane.b32.xlu0 %v2592, 99
  %v2883 = vpop.permute.xlu0 %2882
  %2884 = vrot.lane.b32.xlu0 %v2593, 99
  %v2885 = vpop.permute.xlu0 %2884
  %2886 = vrot.lane.b32.xlu0 %v2594, 99
  %v2887 = vpop.permute.xlu0 %2886
  %2888 = vrot.lane.b32.xlu0 %v2595, 99
  %v2889 = vpop.permute.xlu0 %2888
  %2890 = vrot.lane.b32.xlu0 %v2596, 99
  %v2891 = vpop.permute.xlu0 %2890
  %2892 = vrot.lane.b32.xlu0 %v2597, 99
  %v2893 = vpop.permute.xlu0 %2892
  %2894 = vrot.lane.b32.xlu0 %v2598, 99
  %v2895 = vpop.permute.xlu0 %2894
  %2896 = vrot.lane.b32.xlu0 %v2599, 99
  %v2897 = vpop.permute.xlu0 %2896
  %2898 = vrot.lane.b32.xlu0 %v2600, 99
  %v2899 = vpop.permute.xlu0 %2898
  %2900 = vrot.lane.b32.xlu0 %v2601, 99
  %v2901 = vpop.permute.xlu0 %2900
  %2902 = vrot.lane.b32.xlu0 %v2602, 99
  %v2903 = vpop.permute.xlu0 %2902
  %2904 = vrot.lane.b32.xlu0 %v2603, 99
  %v2905 = vpop.permute.xlu0 %2904
  %2906 = vrot.lane.b32.xlu0 %v2604, 99
  %v2907 = vpop.permute.xlu0 %2906
  %2908 = vrot.lane.b32.xlu0 %v2605, 99
  %v2909 = vpop.permute.xlu0 %2908
  %2910 = vrot.lane.b32.xlu0 %v2606, 99
  %v2911 = vpop.permute.xlu0 %2910
  %2912 = vrot.lane.b32.xlu0 %v2607, 99
  %v2913 = vpop.permute.xlu0 %2912
  %2914 = vrot.lane.b32.xlu0 %v2608, 99
  %v2915 = vpop.permute.xlu0 %2914
  %v2916 = vsel %vm357, %v2913, %v2915
  %v2917 = vsel %vm357, %v2911, %v2913
  %v2918 = vsel %vm357, %v2909, %v2911
  %v2919 = vsel %vm357, %v2907, %v2909
  %v2920 = vsel %vm357, %v2905, %v2907
  %v2921 = vsel %vm357, %v2903, %v2905
  %v2922 = vsel %vm357, %v2901, %v2903
  %v2923 = vsel %vm357, %v2899, %v2901
  %v2924 = vsel %vm357, %v2897, %v2899
  %v2925 = vsel %vm357, %v2895, %v2897
  %v2926 = vsel %vm357, %v2893, %v2895
  %v2927 = vsel %vm357, %v2891, %v2893
  %v2928 = vsel %vm357, %v2889, %v2891
  %v2929 = vsel %vm357, %v2887, %v2889
  %v2930 = vsel %vm357, %v2885, %v2887
  %v2931 = vsel %vm357, %v2883, %v2885
  %v2932 = vsel %vm357, %v2881, %v2883
  %v2933 = vsel %vm357, %v2915, %v2881
  %2934 = vrot.lane.b32.xlu0 %v2591, 91
  %v2935 = vpop.permute.xlu0 %2934
  %2936 = vrot.lane.b32.xlu0 %v2592, 91
  %v2937 = vpop.permute.xlu0 %2936
  %2938 = vrot.lane.b32.xlu0 %v2593, 91
  %v2939 = vpop.permute.xlu0 %2938
  %2940 = vrot.lane.b32.xlu0 %v2594, 91
  %v2941 = vpop.permute.xlu0 %2940
  %2942 = vrot.lane.b32.xlu0 %v2595, 91
  %v2943 = vpop.permute.xlu0 %2942
  %2944 = vrot.lane.b32.xlu0 %v2596, 91
  %v2945 = vpop.permute.xlu0 %2944
  %2946 = vrot.lane.b32.xlu0 %v2597, 91
  %v2947 = vpop.permute.xlu0 %2946
  %2948 = vrot.lane.b32.xlu0 %v2598, 91
  %v2949 = vpop.permute.xlu0 %2948
  %2950 = vrot.lane.b32.xlu0 %v2599, 91
  %v2951 = vpop.permute.xlu0 %2950
  %2952 = vrot.lane.b32.xlu0 %v2600, 91
  %v2953 = vpop.permute.xlu0 %2952
  %2954 = vrot.lane.b32.xlu0 %v2601, 91
  %v2955 = vpop.permute.xlu0 %2954
  %2956 = vrot.lane.b32.xlu0 %v2602, 91
  %v2957 = vpop.permute.xlu0 %2956
  %2958 = vrot.lane.b32.xlu0 %v2603, 91
  %v2959 = vpop.permute.xlu0 %2958
  %2960 = vrot.lane.b32.xlu0 %v2604, 91
  %v2961 = vpop.permute.xlu0 %2960
  %2962 = vrot.lane.b32.xlu0 %v2605, 91
  %v2963 = vpop.permute.xlu0 %2962
  %2964 = vrot.lane.b32.xlu0 %v2606, 91
  %v2965 = vpop.permute.xlu0 %2964
  %2966 = vrot.lane.b32.xlu0 %v2607, 91
  %v2967 = vpop.permute.xlu0 %2966
  %2968 = vrot.lane.b32.xlu0 %v2608, 91
  %v2969 = vpop.permute.xlu0 %2968
  %v2970 = vsel %vm412, %v2967, %v2969
  %v2971 = vsel %vm412, %v2965, %v2967
  %v2972 = vsel %vm412, %v2963, %v2965
  %v2973 = vsel %vm412, %v2961, %v2963
  %v2974 = vsel %vm412, %v2959, %v2961
  %v2975 = vsel %vm412, %v2957, %v2959
  %v2976 = vsel %vm412, %v2955, %v2957
  %v2977 = vsel %vm412, %v2953, %v2955
  %v2978 = vsel %vm412, %v2951, %v2953
  %v2979 = vsel %vm412, %v2949, %v2951
  %v2980 = vsel %vm412, %v2947, %v2949
  %v2981 = vsel %vm412, %v2945, %v2947
  %v2982 = vsel %vm412, %v2943, %v2945
  %v2983 = vsel %vm412, %v2941, %v2943
  %v2984 = vsel %vm412, %v2939, %v2941
  %v2985 = vsel %vm412, %v2937, %v2939
  %v2986 = vsel %vm412, %v2935, %v2937
  %v2987 = vsel %vm412, %v2969, %v2935
  %2988 = vrot.lane.b32.xlu0 %v2591, 90
  %v2989 = vpop.permute.xlu0 %2988
  %2990 = vrot.lane.b32.xlu0 %v2592, 90
  %v2991 = vpop.permute.xlu0 %2990
  %2992 = vrot.lane.b32.xlu0 %v2593, 90
  %v2993 = vpop.permute.xlu0 %2992
  %2994 = vrot.lane.b32.xlu0 %v2594, 90
  %v2995 = vpop.permute.xlu0 %2994
  %2996 = vrot.lane.b32.xlu0 %v2595, 90
  %v2997 = vpop.permute.xlu0 %2996
  %2998 = vrot.lane.b32.xlu0 %v2596, 90
  %v2999 = vpop.permute.xlu0 %2998
  %3000 = vrot.lane.b32.xlu0 %v2597, 90
  %v3001 = vpop.permute.xlu0 %3000
  %3002 = vrot.lane.b32.xlu0 %v2598, 90
  %v3003 = vpop.permute.xlu0 %3002
  %3004 = vrot.lane.b32.xlu0 %v2599, 90
  %v3005 = vpop.permute.xlu0 %3004
  %3006 = vrot.lane.b32.xlu0 %v2600, 90
  %v3007 = vpop.permute.xlu0 %3006
  %3008 = vrot.lane.b32.xlu0 %v2601, 90
  %v3009 = vpop.permute.xlu0 %3008
  %3010 = vrot.lane.b32.xlu0 %v2602, 90
  %v3011 = vpop.permute.xlu0 %3010
  %3012 = vrot.lane.b32.xlu0 %v2603, 90
  %v3013 = vpop.permute.xlu0 %3012
  %3014 = vrot.lane.b32.xlu0 %v2604, 90
  %v3015 = vpop.permute.xlu0 %3014
  %3016 = vrot.lane.b32.xlu0 %v2605, 90
  %v3017 = vpop.permute.xlu0 %3016
  %3018 = vrot.lane.b32.xlu0 %v2606, 90
  %v3019 = vpop.permute.xlu0 %3018
  %3020 = vrot.lane.b32.xlu0 %v2607, 90
  %v3021 = vpop.permute.xlu0 %3020
  %3022 = vrot.lane.b32.xlu0 %v2608, 90
  %v3023 = vpop.permute.xlu0 %3022
  %v3024 = vsel %vm467, %v3021, %v3023
  %v3025 = vsel %vm467, %v3019, %v3021
  %v3026 = vsel %vm467, %v3017, %v3019
  %v3027 = vsel %vm467, %v3015, %v3017
  %v3028 = vsel %vm467, %v3013, %v3015
  %v3029 = vsel %vm467, %v3011, %v3013
  %v3030 = vsel %vm467, %v3009, %v3011
  %v3031 = vsel %vm467, %v3007, %v3009
  %v3032 = vsel %vm467, %v3005, %v3007
  %v3033 = vsel %vm467, %v3003, %v3005
  %v3034 = vsel %vm467, %v3001, %v3003
  %v3035 = vsel %vm467, %v2999, %v3001
  %v3036 = vsel %vm467, %v2997, %v2999
  %v3037 = vsel %vm467, %v2995, %v2997
  %v3038 = vsel %vm467, %v2993, %v2995
  %v3039 = vsel %vm467, %v2991, %v2993
  %v3040 = vsel %vm467, %v2989, %v2991
  %v3041 = vsel %vm467, %v3023, %v2989
  %3042 = vrot.lane.b32.xlu0 %v2591, 89
  %v3043 = vpop.permute.xlu0 %3042
  %3044 = vrot.lane.b32.xlu0 %v2592, 89
  %v3045 = vpop.permute.xlu0 %3044
  %3046 = vrot.lane.b32.xlu0 %v2593, 89
  %v3047 = vpop.permute.xlu0 %3046
  %3048 = vrot.lane.b32.xlu0 %v2594, 89
  %v3049 = vpop.permute.xlu0 %3048
  %3050 = vrot.lane.b32.xlu0 %v2595, 89
  %v3051 = vpop.permute.xlu0 %3050
  %3052 = vrot.lane.b32.xlu0 %v2596, 89
  %v3053 = vpop.permute.xlu0 %3052
  %3054 = vrot.lane.b32.xlu0 %v2597, 89
  %v3055 = vpop.permute.xlu0 %3054
  %3056 = vrot.lane.b32.xlu0 %v2598, 89
  %v3057 = vpop.permute.xlu0 %3056
  %3058 = vrot.lane.b32.xlu0 %v2599, 89
  %v3059 = vpop.permute.xlu0 %3058
  %3060 = vrot.lane.b32.xlu0 %v2600, 89
  %v3061 = vpop.permute.xlu0 %3060
  %3062 = vrot.lane.b32.xlu0 %v2601, 89
  %v3063 = vpop.permute.xlu0 %3062
  %3064 = vrot.lane.b32.xlu0 %v2602, 89
  %v3065 = vpop.permute.xlu0 %3064
  %3066 = vrot.lane.b32.xlu0 %v2603, 89
  %v3067 = vpop.permute.xlu0 %3066
  %3068 = vrot.lane.b32.xlu0 %v2604, 89
  %v3069 = vpop.permute.xlu0 %3068
  %3070 = vrot.lane.b32.xlu0 %v2605, 89
  %v3071 = vpop.permute.xlu0 %3070
  %3072 = vrot.lane.b32.xlu0 %v2606, 89
  %v3073 = vpop.permute.xlu0 %3072
  %3074 = vrot.lane.b32.xlu0 %v2607, 89
  %v3075 = vpop.permute.xlu0 %3074
  %3076 = vrot.lane.b32.xlu0 %v2608, 89
  %v3077 = vpop.permute.xlu0 %3076
  %v3078 = vsel %vm522, %v3075, %v3077
  %v3079 = vsel %vm522, %v3073, %v3075
  %v3080 = vsel %vm522, %v3071, %v3073
  %v3081 = vsel %vm522, %v3069, %v3071
  %v3082 = vsel %vm522, %v3067, %v3069
  %v3083 = vsel %vm522, %v3065, %v3067
  %v3084 = vsel %vm522, %v3063, %v3065
  %v3085 = vsel %vm522, %v3061, %v3063
  %v3086 = vsel %vm522, %v3059, %v3061
  %v3087 = vsel %vm522, %v3057, %v3059
  %v3088 = vsel %vm522, %v3055, %v3057
  %v3089 = vsel %vm522, %v3053, %v3055
  %v3090 = vsel %vm522, %v3051, %v3053
  %v3091 = vsel %vm522, %v3049, %v3051
  %v3092 = vsel %vm522, %v3047, %v3049
  %v3093 = vsel %vm522, %v3045, %v3047
  %v3094 = vsel %vm522, %v3043, %v3045
  %v3095 = vsel %vm522, %v3077, %v3043
  %3096 = vrot.lane.b32.xlu0 %v2591, 11
  %v3097 = vpop.permute.xlu0 %3096
  %3098 = vrot.lane.b32.xlu0 %v2592, 11
  %v3099 = vpop.permute.xlu0 %3098
  %3100 = vrot.lane.b32.xlu0 %v2593, 11
  %v3101 = vpop.permute.xlu0 %3100
  %3102 = vrot.lane.b32.xlu0 %v2594, 11
  %v3103 = vpop.permute.xlu0 %3102
  %3104 = vrot.lane.b32.xlu0 %v2595, 11
  %v3105 = vpop.permute.xlu0 %3104
  %3106 = vrot.lane.b32.xlu0 %v2596, 11
  %v3107 = vpop.permute.xlu0 %3106
  %3108 = vrot.lane.b32.xlu0 %v2597, 11
  %v3109 = vpop.permute.xlu0 %3108
  %3110 = vrot.lane.b32.xlu0 %v2598, 11
  %v3111 = vpop.permute.xlu0 %3110
  %3112 = vrot.lane.b32.xlu0 %v2599, 11
  %v3113 = vpop.permute.xlu0 %3112
  %3114 = vrot.lane.b32.xlu0 %v2600, 11
  %v3115 = vpop.permute.xlu0 %3114
  %3116 = vrot.lane.b32.xlu0 %v2601, 11
  %v3117 = vpop.permute.xlu0 %3116
  %3118 = vrot.lane.b32.xlu0 %v2602, 11
  %v3119 = vpop.permute.xlu0 %3118
  %3120 = vrot.lane.b32.xlu0 %v2603, 11
  %v3121 = vpop.permute.xlu0 %3120
  %3122 = vrot.lane.b32.xlu0 %v2604, 11
  %v3123 = vpop.permute.xlu0 %3122
  %3124 = vrot.lane.b32.xlu0 %v2605, 11
  %v3125 = vpop.permute.xlu0 %3124
  %3126 = vrot.lane.b32.xlu0 %v2606, 11
  %v3127 = vpop.permute.xlu0 %3126
  %3128 = vrot.lane.b32.xlu0 %v2607, 11
  %v3129 = vpop.permute.xlu0 %3128
  %3130 = vrot.lane.b32.xlu0 %v2608, 11
  %v3131 = vpop.permute.xlu0 %3130
  %v3132 = vsel %vm577, %v3129, %v3131
  %v3133 = vsel %vm577, %v3127, %v3129
  %v3134 = vsel %vm577, %v3125, %v3127
  %v3135 = vsel %vm577, %v3123, %v3125
  %v3136 = vsel %vm577, %v3121, %v3123
  %v3137 = vsel %vm577, %v3119, %v3121
  %v3138 = vsel %vm577, %v3117, %v3119
  %v3139 = vsel %vm577, %v3115, %v3117
  %v3140 = vsel %vm577, %v3113, %v3115
  %v3141 = vsel %vm577, %v3111, %v3113
  %v3142 = vsel %vm577, %v3109, %v3111
  %v3143 = vsel %vm577, %v3107, %v3109
  %v3144 = vsel %vm577, %v3105, %v3107
  %v3145 = vsel %vm577, %v3103, %v3105
  %v3146 = vsel %vm577, %v3101, %v3103
  %v3147 = vsel %vm577, %v3099, %v3101
  %v3148 = vsel %vm577, %v3097, %v3099
  %v3149 = vsel %vm577, %v3131, %v3097
  %3150 = vrot.lane.b32.xlu0 %v2591, 10
  %v3151 = vpop.permute.xlu0 %3150
  %3152 = vrot.lane.b32.xlu0 %v2592, 10
  %v3153 = vpop.permute.xlu0 %3152
  %3154 = vrot.lane.b32.xlu0 %v2593, 10
  %v3155 = vpop.permute.xlu0 %3154
  %3156 = vrot.lane.b32.xlu0 %v2594, 10
  %v3157 = vpop.permute.xlu0 %3156
  %3158 = vrot.lane.b32.xlu0 %v2595, 10
  %v3159 = vpop.permute.xlu0 %3158
  %3160 = vrot.lane.b32.xlu0 %v2596, 10
  %v3161 = vpop.permute.xlu0 %3160
  %3162 = vrot.lane.b32.xlu0 %v2597, 10
  %v3163 = vpop.permute.xlu0 %3162
  %3164 = vrot.lane.b32.xlu0 %v2598, 10
  %v3165 = vpop.permute.xlu0 %3164
  %3166 = vrot.lane.b32.xlu0 %v2599, 10
  %v3167 = vpop.permute.xlu0 %3166
  %3168 = vrot.lane.b32.xlu0 %v2600, 10
  %v3169 = vpop.permute.xlu0 %3168
  %3170 = vrot.lane.b32.xlu0 %v2601, 10
  %v3171 = vpop.permute.xlu0 %3170
  %3172 = vrot.lane.b32.xlu0 %v2602, 10
  %v3173 = vpop.permute.xlu0 %3172
  %3174 = vrot.lane.b32.xlu0 %v2603, 10
  %v3175 = vpop.permute.xlu0 %3174
  %3176 = vrot.lane.b32.xlu0 %v2604, 10
  %v3177 = vpop.permute.xlu0 %3176
  %3178 = vrot.lane.b32.xlu0 %v2605, 10
  %v3179 = vpop.permute.xlu0 %3178
  %3180 = vrot.lane.b32.xlu0 %v2606, 10
  %v3181 = vpop.permute.xlu0 %3180
  %3182 = vrot.lane.b32.xlu0 %v2607, 10
  %v3183 = vpop.permute.xlu0 %3182
  %3184 = vrot.lane.b32.xlu0 %v2608, 10
  %v3185 = vpop.permute.xlu0 %3184
  %v3186 = vsel %vm632, %v3183, %v3185
  %v3187 = vsel %vm632, %v3181, %v3183
  %v3188 = vsel %vm632, %v3179, %v3181
  %v3189 = vsel %vm632, %v3177, %v3179
  %v3190 = vsel %vm632, %v3175, %v3177
  %v3191 = vsel %vm632, %v3173, %v3175
  %v3192 = vsel %vm632, %v3171, %v3173
  %v3193 = vsel %vm632, %v3169, %v3171
  %v3194 = vsel %vm632, %v3167, %v3169
  %v3195 = vsel %vm632, %v3165, %v3167
  %v3196 = vsel %vm632, %v3163, %v3165
  %v3197 = vsel %vm632, %v3161, %v3163
  %v3198 = vsel %vm632, %v3159, %v3161
  %v3199 = vsel %vm632, %v3157, %v3159
  %v3200 = vsel %vm632, %v3155, %v3157
  %v3201 = vsel %vm632, %v3153, %v3155
  %v3202 = vsel %vm632, %v3151, %v3153
  %v3203 = vsel %vm632, %v3185, %v3151
  %3204 = vrot.lane.b32.xlu0 %v2591, 9
  %v3205 = vpop.permute.xlu0 %3204
  %3206 = vrot.lane.b32.xlu0 %v2592, 9
  %v3207 = vpop.permute.xlu0 %3206
  %3208 = vrot.lane.b32.xlu0 %v2593, 9
  %v3209 = vpop.permute.xlu0 %3208
  %3210 = vrot.lane.b32.xlu0 %v2594, 9
  %v3211 = vpop.permute.xlu0 %3210
  %3212 = vrot.lane.b32.xlu0 %v2595, 9
  %v3213 = vpop.permute.xlu0 %3212
  %3214 = vrot.lane.b32.xlu0 %v2596, 9
  %v3215 = vpop.permute.xlu0 %3214
  %3216 = vrot.lane.b32.xlu0 %v2597, 9
  %v3217 = vpop.permute.xlu0 %3216
  %3218 = vrot.lane.b32.xlu0 %v2598, 9
  %v3219 = vpop.permute.xlu0 %3218
  %3220 = vrot.lane.b32.xlu0 %v2599, 9
  %v3221 = vpop.permute.xlu0 %3220
  %3222 = vrot.lane.b32.xlu0 %v2600, 9
  %v3223 = vpop.permute.xlu0 %3222
  %3224 = vrot.lane.b32.xlu0 %v2601, 9
  %v3225 = vpop.permute.xlu0 %3224
  %3226 = vrot.lane.b32.xlu0 %v2602, 9
  %v3227 = vpop.permute.xlu0 %3226
  %3228 = vrot.lane.b32.xlu0 %v2603, 9
  %v3229 = vpop.permute.xlu0 %3228
  %3230 = vrot.lane.b32.xlu0 %v2604, 9
  %v3231 = vpop.permute.xlu0 %3230
  %3232 = vrot.lane.b32.xlu0 %v2605, 9
  %v3233 = vpop.permute.xlu0 %3232
  %3234 = vrot.lane.b32.xlu0 %v2606, 9
  %v3235 = vpop.permute.xlu0 %3234
  %3236 = vrot.lane.b32.xlu0 %v2607, 9
  %v3237 = vpop.permute.xlu0 %3236
  %3238 = vrot.lane.b32.xlu0 %v2608, 9
  %v3239 = vpop.permute.xlu0 %3238
  %v3240 = vsel %vm687, %v3237, %v3239
  %v3241 = vsel %vm687, %v3235, %v3237
  %v3242 = vsel %vm687, %v3233, %v3235
  %v3243 = vsel %vm687, %v3231, %v3233
  %v3244 = vsel %vm687, %v3229, %v3231
  %v3245 = vsel %vm687, %v3227, %v3229
  %v3246 = vsel %vm687, %v3225, %v3227
  %v3247 = vsel %vm687, %v3223, %v3225
  %v3248 = vsel %vm687, %v3221, %v3223
  %v3249 = vsel %vm687, %v3219, %v3221
  %v3250 = vsel %vm687, %v3217, %v3219
  %v3251 = vsel %vm687, %v3215, %v3217
  %v3252 = vsel %vm687, %v3213, %v3215
  %v3253 = vsel %vm687, %v3211, %v3213
  %v3254 = vsel %vm687, %v3209, %v3211
  %v3255 = vsel %vm687, %v3207, %v3209
  %v3256 = vsel %vm687, %v3205, %v3207
  %v3257 = vsel %vm687, %v3239, %v3205
  %3258 = vrot.lane.b32.xlu0 %v2591, 1
  %v3259 = vpop.permute.xlu0 %3258
  %3260 = vrot.lane.b32.xlu0 %v2592, 1
  %v3261 = vpop.permute.xlu0 %3260
  %3262 = vrot.lane.b32.xlu0 %v2593, 1
  %v3263 = vpop.permute.xlu0 %3262
  %3264 = vrot.lane.b32.xlu0 %v2594, 1
  %v3265 = vpop.permute.xlu0 %3264
  %3266 = vrot.lane.b32.xlu0 %v2595, 1
  %v3267 = vpop.permute.xlu0 %3266
  %3268 = vrot.lane.b32.xlu0 %v2596, 1
  %v3269 = vpop.permute.xlu0 %3268
  %3270 = vrot.lane.b32.xlu0 %v2597, 1
  %v3271 = vpop.permute.xlu0 %3270
  %3272 = vrot.lane.b32.xlu0 %v2598, 1
  %v3273 = vpop.permute.xlu0 %3272
  %3274 = vrot.lane.b32.xlu0 %v2599, 1
  %v3275 = vpop.permute.xlu0 %3274
  %3276 = vrot.lane.b32.xlu0 %v2600, 1
  %v3277 = vpop.permute.xlu0 %3276
  %3278 = vrot.lane.b32.xlu0 %v2601, 1
  %v3279 = vpop.permute.xlu0 %3278
  %3280 = vrot.lane.b32.xlu0 %v2602, 1
  %v3281 = vpop.permute.xlu0 %3280
  %3282 = vrot.lane.b32.xlu0 %v2603, 1
  %v3283 = vpop.permute.xlu0 %3282
  %3284 = vrot.lane.b32.xlu0 %v2604, 1
  %v3285 = vpop.permute.xlu0 %3284
  %3286 = vrot.lane.b32.xlu0 %v2605, 1
  %v3287 = vpop.permute.xlu0 %3286
  %3288 = vrot.lane.b32.xlu0 %v2606, 1
  %v3289 = vpop.permute.xlu0 %3288
  %3290 = vrot.lane.b32.xlu0 %v2607, 1
  %v3291 = vpop.permute.xlu0 %3290
  %3292 = vrot.lane.b32.xlu0 %v2608, 1
  %v3293 = vpop.permute.xlu0 %3292
  %v3294 = vsel %vm742, %v3291, %v3293
  %v3295 = vsel %vm742, %v3289, %v3291
  %v3296 = vsel %vm742, %v3287, %v3289
  %v3297 = vsel %vm742, %v3285, %v3287
  %v3298 = vsel %vm742, %v3283, %v3285
  %v3299 = vsel %vm742, %v3281, %v3283
  %v3300 = vsel %vm742, %v3279, %v3281
  %v3301 = vsel %vm742, %v3277, %v3279
  %v3302 = vsel %vm742, %v3275, %v3277
  %v3303 = vsel %vm742, %v3273, %v3275
  %v3304 = vsel %vm742, %v3271, %v3273
  %v3305 = vsel %vm742, %v3269, %v3271
  %v3306 = vsel %vm742, %v3267, %v3269
  %v3307 = vsel %vm742, %v3265, %v3267
  %v3308 = vsel %vm742, %v3263, %v3265
  %v3309 = vsel %vm742, %v3261, %v3263
  %v3310 = vsel %vm742, %v3259, %v3261
  %v3311 = vsel %vm742, %v3293, %v3259
  %3312 = vrot.lane.b32.xlu0 %v2591, 127
  %v3313 = vpop.permute.xlu0 %3312
  %3314 = vrot.lane.b32.xlu0 %v2592, 127
  %v3315 = vpop.permute.xlu0 %3314
  %3316 = vrot.lane.b32.xlu0 %v2593, 127
  %v3317 = vpop.permute.xlu0 %3316
  %3318 = vrot.lane.b32.xlu0 %v2594, 127
  %v3319 = vpop.permute.xlu0 %3318
  %3320 = vrot.lane.b32.xlu0 %v2595, 127
  %v3321 = vpop.permute.xlu0 %3320
  %3322 = vrot.lane.b32.xlu0 %v2596, 127
  %v3323 = vpop.permute.xlu0 %3322
  %3324 = vrot.lane.b32.xlu0 %v2597, 127
  %v3325 = vpop.permute.xlu0 %3324
  %3326 = vrot.lane.b32.xlu0 %v2598, 127
  %v3327 = vpop.permute.xlu0 %3326
  %3328 = vrot.lane.b32.xlu0 %v2599, 127
  %v3329 = vpop.permute.xlu0 %3328
  %3330 = vrot.lane.b32.xlu0 %v2600, 127
  %v3331 = vpop.permute.xlu0 %3330
  %3332 = vrot.lane.b32.xlu0 %v2601, 127
  %v3333 = vpop.permute.xlu0 %3332
  %3334 = vrot.lane.b32.xlu0 %v2602, 127
  %v3335 = vpop.permute.xlu0 %3334
  %3336 = vrot.lane.b32.xlu0 %v2603, 127
  %v3337 = vpop.permute.xlu0 %3336
  %3338 = vrot.lane.b32.xlu0 %v2604, 127
  %v3339 = vpop.permute.xlu0 %3338
  %3340 = vrot.lane.b32.xlu0 %v2605, 127
  %v3341 = vpop.permute.xlu0 %3340
  %3342 = vrot.lane.b32.xlu0 %v2606, 127
  %v3343 = vpop.permute.xlu0 %3342
  %3344 = vrot.lane.b32.xlu0 %v2607, 127
  %v3345 = vpop.permute.xlu0 %3344
  %3346 = vrot.lane.b32.xlu0 %v2608, 127
  %v3347 = vpop.permute.xlu0 %3346
  %v3348 = vsel %vm797, %v3345, %v3347
  %v3349 = vsel %vm797, %v3343, %v3345
  %v3350 = vsel %vm797, %v3341, %v3343
  %v3351 = vsel %vm797, %v3339, %v3341
  %v3352 = vsel %vm797, %v3337, %v3339
  %v3353 = vsel %vm797, %v3335, %v3337
  %v3354 = vsel %vm797, %v3333, %v3335
  %v3355 = vsel %vm797, %v3331, %v3333
  %v3356 = vsel %vm797, %v3329, %v3331
  %v3357 = vsel %vm797, %v3327, %v3329
  %v3358 = vsel %vm797, %v3325, %v3327
  %v3359 = vsel %vm797, %v3323, %v3325
  %v3360 = vsel %vm797, %v3321, %v3323
  %v3361 = vsel %vm797, %v3319, %v3321
  %v3362 = vsel %vm797, %v3317, %v3319
  %v3363 = vsel %vm797, %v3315, %v3317
  %v3364 = vsel %vm797, %v3313, %v3315
  %v3365 = vsel %vm797, %v3347, %v3313
  %3366 = vrot.lane.b32.xlu0 %v2591, 119
  %v3367 = vpop.permute.xlu0 %3366
  %3368 = vrot.lane.b32.xlu0 %v2592, 119
  %v3369 = vpop.permute.xlu0 %3368
  %3370 = vrot.lane.b32.xlu0 %v2593, 119
  %v3371 = vpop.permute.xlu0 %3370
  %3372 = vrot.lane.b32.xlu0 %v2594, 119
  %v3373 = vpop.permute.xlu0 %3372
  %3374 = vrot.lane.b32.xlu0 %v2595, 119
  %v3375 = vpop.permute.xlu0 %3374
  %3376 = vrot.lane.b32.xlu0 %v2596, 119
  %v3377 = vpop.permute.xlu0 %3376
  %3378 = vrot.lane.b32.xlu0 %v2597, 119
  %v3379 = vpop.permute.xlu0 %3378
  %3380 = vrot.lane.b32.xlu0 %v2598, 119
  %v3381 = vpop.permute.xlu0 %3380
  %3382 = vrot.lane.b32.xlu0 %v2599, 119
  %v3383 = vpop.permute.xlu0 %3382
  %3384 = vrot.lane.b32.xlu0 %v2600, 119
  %v3385 = vpop.permute.xlu0 %3384
  %3386 = vrot.lane.b32.xlu0 %v2601, 119
  %v3387 = vpop.permute.xlu0 %3386
  %3388 = vrot.lane.b32.xlu0 %v2602, 119
  %v3389 = vpop.permute.xlu0 %3388
  %3390 = vrot.lane.b32.xlu0 %v2603, 119
  %v3391 = vpop.permute.xlu0 %3390
  %3392 = vrot.lane.b32.xlu0 %v2604, 119
  %v3393 = vpop.permute.xlu0 %3392
  %3394 = vrot.lane.b32.xlu0 %v2605, 119
  %v3395 = vpop.permute.xlu0 %3394
  %3396 = vrot.lane.b32.xlu0 %v2606, 119
  %v3397 = vpop.permute.xlu0 %3396
  %3398 = vrot.lane.b32.xlu0 %v2607, 119
  %v3399 = vpop.permute.xlu0 %3398
  %3400 = vrot.lane.b32.xlu0 %v2608, 119
  %v3401 = vpop.permute.xlu0 %3400
  %v3402 = vsel %vm852, %v3399, %v3401
  %v3403 = vsel %vm852, %v3397, %v3399
  %v3404 = vsel %vm852, %v3395, %v3397
  %v3405 = vsel %vm852, %v3393, %v3395
  %v3406 = vsel %vm852, %v3391, %v3393
  %v3407 = vsel %vm852, %v3389, %v3391
  %v3408 = vsel %vm852, %v3387, %v3389
  %v3409 = vsel %vm852, %v3385, %v3387
  %v3410 = vsel %vm852, %v3383, %v3385
  %v3411 = vsel %vm852, %v3381, %v3383
  %v3412 = vsel %vm852, %v3379, %v3381
  %v3413 = vsel %vm852, %v3377, %v3379
  %v3414 = vsel %vm852, %v3375, %v3377
  %v3415 = vsel %vm852, %v3373, %v3375
  %v3416 = vsel %vm852, %v3371, %v3373
  %v3417 = vsel %vm852, %v3369, %v3371
  %v3418 = vsel %vm852, %v3367, %v3369
  %v3419 = vsel %vm852, %v3401, %v3367
  %3420 = vrot.lane.b32.xlu0 %v2591, 118
  %v3421 = vpop.permute.xlu0 %3420
  %3422 = vrot.lane.b32.xlu0 %v2592, 118
  %v3423 = vpop.permute.xlu0 %3422
  %3424 = vrot.lane.b32.xlu0 %v2593, 118
  %v3425 = vpop.permute.xlu0 %3424
  %3426 = vrot.lane.b32.xlu0 %v2594, 118
  %v3427 = vpop.permute.xlu0 %3426
  %3428 = vrot.lane.b32.xlu0 %v2595, 118
  %v3429 = vpop.permute.xlu0 %3428
  %3430 = vrot.lane.b32.xlu0 %v2596, 118
  %v3431 = vpop.permute.xlu0 %3430
  %3432 = vrot.lane.b32.xlu0 %v2597, 118
  %v3433 = vpop.permute.xlu0 %3432
  %3434 = vrot.lane.b32.xlu0 %v2598, 118
  %v3435 = vpop.permute.xlu0 %3434
  %3436 = vrot.lane.b32.xlu0 %v2599, 118
  %v3437 = vpop.permute.xlu0 %3436
  %3438 = vrot.lane.b32.xlu0 %v2600, 118
  %v3439 = vpop.permute.xlu0 %3438
  %3440 = vrot.lane.b32.xlu0 %v2601, 118
  %v3441 = vpop.permute.xlu0 %3440
  %3442 = vrot.lane.b32.xlu0 %v2602, 118
  %v3443 = vpop.permute.xlu0 %3442
  %3444 = vrot.lane.b32.xlu0 %v2603, 118
  %v3445 = vpop.permute.xlu0 %3444
  %3446 = vrot.lane.b32.xlu0 %v2604, 118
  %v3447 = vpop.permute.xlu0 %3446
  %3448 = vrot.lane.b32.xlu0 %v2605, 118
  %v3449 = vpop.permute.xlu0 %3448
  %3450 = vrot.lane.b32.xlu0 %v2606, 118
  %v3451 = vpop.permute.xlu0 %3450
  %3452 = vrot.lane.b32.xlu0 %v2607, 118
  %v3453 = vpop.permute.xlu0 %3452
  %3454 = vrot.lane.b32.xlu0 %v2608, 118
  %v3455 = vpop.permute.xlu0 %3454
  %v3456 = vsel %vm907, %v3453, %v3455
  %v3457 = vsel %vm907, %v3451, %v3453
  %v3458 = vsel %vm907, %v3449, %v3451
  %v3459 = vsel %vm907, %v3447, %v3449
  %v3460 = vsel %vm907, %v3445, %v3447
  %v3461 = vsel %vm907, %v3443, %v3445
  %v3462 = vsel %vm907, %v3441, %v3443
  %v3463 = vsel %vm907, %v3439, %v3441
  %v3464 = vsel %vm907, %v3437, %v3439
  %v3465 = vsel %vm907, %v3435, %v3437
  %v3466 = vsel %vm907, %v3433, %v3435
  %v3467 = vsel %vm907, %v3431, %v3433
  %v3468 = vsel %vm907, %v3429, %v3431
  %v3469 = vsel %vm907, %v3427, %v3429
  %v3470 = vsel %vm907, %v3425, %v3427
  %v3471 = vsel %vm907, %v3423, %v3425
  %v3472 = vsel %vm907, %v3421, %v3423
  %v3473 = vsel %vm907, %v3455, %v3421
  %3474 = vrot.lane.b32.xlu0 %v2591, 117
  %v3475 = vpop.permute.xlu0 %3474
  %3476 = vrot.lane.b32.xlu0 %v2592, 117
  %v3477 = vpop.permute.xlu0 %3476
  %3478 = vrot.lane.b32.xlu0 %v2593, 117
  %v3479 = vpop.permute.xlu0 %3478
  %3480 = vrot.lane.b32.xlu0 %v2594, 117
  %v3481 = vpop.permute.xlu0 %3480
  %3482 = vrot.lane.b32.xlu0 %v2595, 117
  %v3483 = vpop.permute.xlu0 %3482
  %3484 = vrot.lane.b32.xlu0 %v2596, 117
  %v3485 = vpop.permute.xlu0 %3484
  %3486 = vrot.lane.b32.xlu0 %v2597, 117
  %v3487 = vpop.permute.xlu0 %3486
  %3488 = vrot.lane.b32.xlu0 %v2598, 117
  %v3489 = vpop.permute.xlu0 %3488
  %3490 = vrot.lane.b32.xlu0 %v2599, 117
  %v3491 = vpop.permute.xlu0 %3490
  %3492 = vrot.lane.b32.xlu0 %v2600, 117
  %v3493 = vpop.permute.xlu0 %3492
  %3494 = vrot.lane.b32.xlu0 %v2601, 117
  %v3495 = vpop.permute.xlu0 %3494
  %3496 = vrot.lane.b32.xlu0 %v2602, 117
  %v3497 = vpop.permute.xlu0 %3496
  %3498 = vrot.lane.b32.xlu0 %v2603, 117
  %v3499 = vpop.permute.xlu0 %3498
  %3500 = vrot.lane.b32.xlu0 %v2604, 117
  %v3501 = vpop.permute.xlu0 %3500
  %3502 = vrot.lane.b32.xlu0 %v2605, 117
  %v3503 = vpop.permute.xlu0 %3502
  %3504 = vrot.lane.b32.xlu0 %v2606, 117
  %v3505 = vpop.permute.xlu0 %3504
  %3506 = vrot.lane.b32.xlu0 %v2607, 117
  %v3507 = vpop.permute.xlu0 %3506
  %3508 = vrot.lane.b32.xlu0 %v2608, 117
  %v3509 = vpop.permute.xlu0 %3508
  %v3510 = vsel %vm962, %v3507, %v3509
  %v3511 = vsel %vm962, %v3505, %v3507
  %v3512 = vsel %vm962, %v3503, %v3505
  %v3513 = vsel %vm962, %v3501, %v3503
  %v3514 = vsel %vm962, %v3499, %v3501
  %v3515 = vsel %vm962, %v3497, %v3499
  %v3516 = vsel %vm962, %v3495, %v3497
  %v3517 = vsel %vm962, %v3493, %v3495
  %v3518 = vsel %vm962, %v3491, %v3493
  %v3519 = vsel %vm962, %v3489, %v3491
  %v3520 = vsel %vm962, %v3487, %v3489
  %v3521 = vsel %vm962, %v3485, %v3487
  %v3522 = vsel %vm962, %v3483, %v3485
  %v3523 = vsel %vm962, %v3481, %v3483
  %v3524 = vsel %vm962, %v3479, %v3481
  %v3525 = vsel %vm962, %v3477, %v3479
  %v3526 = vsel %vm962, %v3475, %v3477
  %v3527 = vsel %vm962, %v3509, %v3475
  %3528 = vrot.lane.b32.xlu0 %v2591, 39
  %v3529 = vpop.permute.xlu0 %3528
  %3530 = vrot.lane.b32.xlu0 %v2592, 39
  %v3531 = vpop.permute.xlu0 %3530
  %3532 = vrot.lane.b32.xlu0 %v2593, 39
  %v3533 = vpop.permute.xlu0 %3532
  %3534 = vrot.lane.b32.xlu0 %v2594, 39
  %v3535 = vpop.permute.xlu0 %3534
  %3536 = vrot.lane.b32.xlu0 %v2595, 39
  %v3537 = vpop.permute.xlu0 %3536
  %3538 = vrot.lane.b32.xlu0 %v2596, 39
  %v3539 = vpop.permute.xlu0 %3538
  %3540 = vrot.lane.b32.xlu0 %v2597, 39
  %v3541 = vpop.permute.xlu0 %3540
  %3542 = vrot.lane.b32.xlu0 %v2598, 39
  %v3543 = vpop.permute.xlu0 %3542
  %3544 = vrot.lane.b32.xlu0 %v2599, 39
  %v3545 = vpop.permute.xlu0 %3544
  %3546 = vrot.lane.b32.xlu0 %v2600, 39
  %v3547 = vpop.permute.xlu0 %3546
  %3548 = vrot.lane.b32.xlu0 %v2601, 39
  %v3549 = vpop.permute.xlu0 %3548
  %3550 = vrot.lane.b32.xlu0 %v2602, 39
  %v3551 = vpop.permute.xlu0 %3550
  %3552 = vrot.lane.b32.xlu0 %v2603, 39
  %v3553 = vpop.permute.xlu0 %3552
  %3554 = vrot.lane.b32.xlu0 %v2604, 39
  %v3555 = vpop.permute.xlu0 %3554
  %3556 = vrot.lane.b32.xlu0 %v2605, 39
  %v3557 = vpop.permute.xlu0 %3556
  %3558 = vrot.lane.b32.xlu0 %v2606, 39
  %v3559 = vpop.permute.xlu0 %3558
  %3560 = vrot.lane.b32.xlu0 %v2607, 39
  %v3561 = vpop.permute.xlu0 %3560
  %3562 = vrot.lane.b32.xlu0 %v2608, 39
  %v3563 = vpop.permute.xlu0 %3562
  %v3564 = vsel %vm1017, %v3561, %v3563
  %v3565 = vsel %vm1017, %v3559, %v3561
  %v3566 = vsel %vm1017, %v3557, %v3559
  %v3567 = vsel %vm1017, %v3555, %v3557
  %v3568 = vsel %vm1017, %v3553, %v3555
  %v3569 = vsel %vm1017, %v3551, %v3553
  %v3570 = vsel %vm1017, %v3549, %v3551
  %v3571 = vsel %vm1017, %v3547, %v3549
  %v3572 = vsel %vm1017, %v3545, %v3547
  %v3573 = vsel %vm1017, %v3543, %v3545
  %v3574 = vsel %vm1017, %v3541, %v3543
  %v3575 = vsel %vm1017, %v3539, %v3541
  %v3576 = vsel %vm1017, %v3537, %v3539
  %v3577 = vsel %vm1017, %v3535, %v3537
  %v3578 = vsel %vm1017, %v3533, %v3535
  %v3579 = vsel %vm1017, %v3531, %v3533
  %v3580 = vsel %vm1017, %v3529, %v3531
  %v3581 = vsel %vm1017, %v3563, %v3529
  %3582 = vrot.lane.b32.xlu0 %v2591, 38
  %v3583 = vpop.permute.xlu0 %3582
  %3584 = vrot.lane.b32.xlu0 %v2592, 38
  %v3585 = vpop.permute.xlu0 %3584
  %3586 = vrot.lane.b32.xlu0 %v2593, 38
  %v3587 = vpop.permute.xlu0 %3586
  %3588 = vrot.lane.b32.xlu0 %v2594, 38
  %v3589 = vpop.permute.xlu0 %3588
  %3590 = vrot.lane.b32.xlu0 %v2595, 38
  %v3591 = vpop.permute.xlu0 %3590
  %3592 = vrot.lane.b32.xlu0 %v2596, 38
  %v3593 = vpop.permute.xlu0 %3592
  %3594 = vrot.lane.b32.xlu0 %v2597, 38
  %v3595 = vpop.permute.xlu0 %3594
  %3596 = vrot.lane.b32.xlu0 %v2598, 38
  %v3597 = vpop.permute.xlu0 %3596
  %3598 = vrot.lane.b32.xlu0 %v2599, 38
  %v3599 = vpop.permute.xlu0 %3598
  %3600 = vrot.lane.b32.xlu0 %v2600, 38
  %v3601 = vpop.permute.xlu0 %3600
  %3602 = vrot.lane.b32.xlu0 %v2601, 38
  %v3603 = vpop.permute.xlu0 %3602
  %3604 = vrot.lane.b32.xlu0 %v2602, 38
  %v3605 = vpop.permute.xlu0 %3604
  %3606 = vrot.lane.b32.xlu0 %v2603, 38
  %v3607 = vpop.permute.xlu0 %3606
  %3608 = vrot.lane.b32.xlu0 %v2604, 38
  %v3609 = vpop.permute.xlu0 %3608
  %3610 = vrot.lane.b32.xlu0 %v2605, 38
  %v3611 = vpop.permute.xlu0 %3610
  %3612 = vrot.lane.b32.xlu0 %v2606, 38
  %v3613 = vpop.permute.xlu0 %3612
  %3614 = vrot.lane.b32.xlu0 %v2607, 38
  %v3615 = vpop.permute.xlu0 %3614
  %3616 = vrot.lane.b32.xlu0 %v2608, 38
  %v3617 = vpop.permute.xlu0 %3616
  %v3618 = vsel %vm1072, %v3615, %v3617
  %v3619 = vsel %vm1072, %v3613, %v3615
  %v3620 = vsel %vm1072, %v3611, %v3613
  %v3621 = vsel %vm1072, %v3609, %v3611
  %v3622 = vsel %vm1072, %v3607, %v3609
  %v3623 = vsel %vm1072, %v3605, %v3607
  %v3624 = vsel %vm1072, %v3603, %v3605
  %v3625 = vsel %vm1072, %v3601, %v3603
  %v3626 = vsel %vm1072, %v3599, %v3601
  %v3627 = vsel %vm1072, %v3597, %v3599
  %v3628 = vsel %vm1072, %v3595, %v3597
  %v3629 = vsel %vm1072, %v3593, %v3595
  %v3630 = vsel %vm1072, %v3591, %v3593
  %v3631 = vsel %vm1072, %v3589, %v3591
  %v3632 = vsel %vm1072, %v3587, %v3589
  %v3633 = vsel %vm1072, %v3585, %v3587
  %v3634 = vsel %vm1072, %v3583, %v3585
  %v3635 = vsel %vm1072, %v3617, %v3583
  %3636 = vrot.lane.b32.xlu0 %v2591, 37
  %v3637 = vpop.permute.xlu0 %3636
  %3638 = vrot.lane.b32.xlu0 %v2592, 37
  %v3639 = vpop.permute.xlu0 %3638
  %3640 = vrot.lane.b32.xlu0 %v2593, 37
  %v3641 = vpop.permute.xlu0 %3640
  %3642 = vrot.lane.b32.xlu0 %v2594, 37
  %v3643 = vpop.permute.xlu0 %3642
  %3644 = vrot.lane.b32.xlu0 %v2595, 37
  %v3645 = vpop.permute.xlu0 %3644
  %3646 = vrot.lane.b32.xlu0 %v2596, 37
  %v3647 = vpop.permute.xlu0 %3646
  %3648 = vrot.lane.b32.xlu0 %v2597, 37
  %v3649 = vpop.permute.xlu0 %3648
  %3650 = vrot.lane.b32.xlu0 %v2598, 37
  %v3651 = vpop.permute.xlu0 %3650
  %3652 = vrot.lane.b32.xlu0 %v2599, 37
  %v3653 = vpop.permute.xlu0 %3652
  %3654 = vrot.lane.b32.xlu0 %v2600, 37
  %v3655 = vpop.permute.xlu0 %3654
  %3656 = vrot.lane.b32.xlu0 %v2601, 37
  %v3657 = vpop.permute.xlu0 %3656
  %3658 = vrot.lane.b32.xlu0 %v2602, 37
  %v3659 = vpop.permute.xlu0 %3658
  %3660 = vrot.lane.b32.xlu0 %v2603, 37
  %v3661 = vpop.permute.xlu0 %3660
  %3662 = vrot.lane.b32.xlu0 %v2604, 37
  %v3663 = vpop.permute.xlu0 %3662
  %3664 = vrot.lane.b32.xlu0 %v2605, 37
  %v3665 = vpop.permute.xlu0 %3664
  %3666 = vrot.lane.b32.xlu0 %v2606, 37
  %v3667 = vpop.permute.xlu0 %3666
  %3668 = vrot.lane.b32.xlu0 %v2607, 37
  %v3669 = vpop.permute.xlu0 %3668
  %3670 = vrot.lane.b32.xlu0 %v2608, 37
  %v3671 = vpop.permute.xlu0 %3670
  %v3672 = vsel %vm1127, %v3669, %v3671
  %v3673 = vsel %vm1127, %v3667, %v3669
  %v3674 = vsel %vm1127, %v3665, %v3667
  %v3675 = vsel %vm1127, %v3663, %v3665
  %v3676 = vsel %vm1127, %v3661, %v3663
  %v3677 = vsel %vm1127, %v3659, %v3661
  %v3678 = vsel %vm1127, %v3657, %v3659
  %v3679 = vsel %vm1127, %v3655, %v3657
  %v3680 = vsel %vm1127, %v3653, %v3655
  %v3681 = vsel %vm1127, %v3651, %v3653
  %v3682 = vsel %vm1127, %v3649, %v3651
  %v3683 = vsel %vm1127, %v3647, %v3649
  %v3684 = vsel %vm1127, %v3645, %v3647
  %v3685 = vsel %vm1127, %v3643, %v3645
  %v3686 = vsel %vm1127, %v3641, %v3643
  %v3687 = vsel %vm1127, %v3639, %v3641
  %v3688 = vsel %vm1127, %v3637, %v3639
  %v3689 = vsel %vm1127, %v3671, %v3637
  %3690 = vrot.lane.b32.xlu0 %v2591, 29
  %v3691 = vpop.permute.xlu0 %3690
  %3692 = vrot.lane.b32.xlu0 %v2592, 29
  %v3693 = vpop.permute.xlu0 %3692
  %3694 = vrot.lane.b32.xlu0 %v2593, 29
  %v3695 = vpop.permute.xlu0 %3694
  %3696 = vrot.lane.b32.xlu0 %v2594, 29
  %v3697 = vpop.permute.xlu0 %3696
  %3698 = vrot.lane.b32.xlu0 %v2595, 29
  %v3699 = vpop.permute.xlu0 %3698
  %3700 = vrot.lane.b32.xlu0 %v2596, 29
  %v3701 = vpop.permute.xlu0 %3700
  %3702 = vrot.lane.b32.xlu0 %v2597, 29
  %v3703 = vpop.permute.xlu0 %3702
  %3704 = vrot.lane.b32.xlu0 %v2598, 29
  %v3705 = vpop.permute.xlu0 %3704
  %3706 = vrot.lane.b32.xlu0 %v2599, 29
  %v3707 = vpop.permute.xlu0 %3706
  %3708 = vrot.lane.b32.xlu0 %v2600, 29
  %v3709 = vpop.permute.xlu0 %3708
  %3710 = vrot.lane.b32.xlu0 %v2601, 29
  %v3711 = vpop.permute.xlu0 %3710
  %3712 = vrot.lane.b32.xlu0 %v2602, 29
  %v3713 = vpop.permute.xlu0 %3712
  %3714 = vrot.lane.b32.xlu0 %v2603, 29
  %v3715 = vpop.permute.xlu0 %3714
  %3716 = vrot.lane.b32.xlu0 %v2604, 29
  %v3717 = vpop.permute.xlu0 %3716
  %3718 = vrot.lane.b32.xlu0 %v2605, 29
  %v3719 = vpop.permute.xlu0 %3718
  %3720 = vrot.lane.b32.xlu0 %v2606, 29
  %v3721 = vpop.permute.xlu0 %3720
  %3722 = vrot.lane.b32.xlu0 %v2607, 29
  %v3723 = vpop.permute.xlu0 %3722
  %3724 = vrot.lane.b32.xlu0 %v2608, 29
  %v3725 = vpop.permute.xlu0 %3724
  %v3726 = vsel %vm1182, %v3723, %v3725
  %v3727 = vsel %vm1182, %v3721, %v3723
  %v3728 = vsel %vm1182, %v3719, %v3721
  %v3729 = vsel %vm1182, %v3717, %v3719
  %v3730 = vsel %vm1182, %v3715, %v3717
  %v3731 = vsel %vm1182, %v3713, %v3715
  %v3732 = vsel %vm1182, %v3711, %v3713
  %v3733 = vsel %vm1182, %v3709, %v3711
  %v3734 = vsel %vm1182, %v3707, %v3709
  %v3735 = vsel %vm1182, %v3705, %v3707
  %v3736 = vsel %vm1182, %v3703, %v3705
  %v3737 = vsel %vm1182, %v3701, %v3703
  %v3738 = vsel %vm1182, %v3699, %v3701
  %v3739 = vsel %vm1182, %v3697, %v3699
  %v3740 = vsel %vm1182, %v3695, %v3697
  %v3741 = vsel %vm1182, %v3693, %v3695
  %v3742 = vsel %vm1182, %v3691, %v3693
  %v3743 = vsel %vm1182, %v3725, %v3691
  %3744 = vrot.lane.b32.xlu0 %v2591, 28
  %v3745 = vpop.permute.xlu0 %3744
  %3746 = vrot.lane.b32.xlu0 %v2592, 28
  %v3747 = vpop.permute.xlu0 %3746
  %3748 = vrot.lane.b32.xlu0 %v2593, 28
  %v3749 = vpop.permute.xlu0 %3748
  %3750 = vrot.lane.b32.xlu0 %v2594, 28
  %v3751 = vpop.permute.xlu0 %3750
  %3752 = vrot.lane.b32.xlu0 %v2595, 28
  %v3753 = vpop.permute.xlu0 %3752
  %3754 = vrot.lane.b32.xlu0 %v2596, 28
  %v3755 = vpop.permute.xlu0 %3754
  %3756 = vrot.lane.b32.xlu0 %v2597, 28
  %v3757 = vpop.permute.xlu0 %3756
  %3758 = vrot.lane.b32.xlu0 %v2598, 28
  %v3759 = vpop.permute.xlu0 %3758
  %3760 = vrot.lane.b32.xlu0 %v2599, 28
  %v3761 = vpop.permute.xlu0 %3760
  %3762 = vrot.lane.b32.xlu0 %v2600, 28
  %v3763 = vpop.permute.xlu0 %3762
  %3764 = vrot.lane.b32.xlu0 %v2601, 28
  %v3765 = vpop.permute.xlu0 %3764
  %3766 = vrot.lane.b32.xlu0 %v2602, 28
  %v3767 = vpop.permute.xlu0 %3766
  %3768 = vrot.lane.b32.xlu0 %v2603, 28
  %v3769 = vpop.permute.xlu0 %3768
  %3770 = vrot.lane.b32.xlu0 %v2604, 28
  %v3771 = vpop.permute.xlu0 %3770
  %3772 = vrot.lane.b32.xlu0 %v2605, 28
  %v3773 = vpop.permute.xlu0 %3772
  %3774 = vrot.lane.b32.xlu0 %v2606, 28
  %v3775 = vpop.permute.xlu0 %3774
  %3776 = vrot.lane.b32.xlu0 %v2607, 28
  %v3777 = vpop.permute.xlu0 %3776
  %3778 = vrot.lane.b32.xlu0 %v2608, 28
  %v3779 = vpop.permute.xlu0 %3778
  %v3780 = vsel %vm1237, %v3777, %v3779
  %v3781 = vsel %vm1237, %v3775, %v3777
  %v3782 = vsel %vm1237, %v3773, %v3775
  %v3783 = vsel %vm1237, %v3771, %v3773
  %v3784 = vsel %vm1237, %v3769, %v3771
  %v3785 = vsel %vm1237, %v3767, %v3769
  %v3786 = vsel %vm1237, %v3765, %v3767
  %v3787 = vsel %vm1237, %v3763, %v3765
  %v3788 = vsel %vm1237, %v3761, %v3763
  %v3789 = vsel %vm1237, %v3759, %v3761
  %v3790 = vsel %vm1237, %v3757, %v3759
  %v3791 = vsel %vm1237, %v3755, %v3757
  %v3792 = vsel %vm1237, %v3753, %v3755
  %v3793 = vsel %vm1237, %v3751, %v3753
  %v3794 = vsel %vm1237, %v3749, %v3751
  %v3795 = vsel %vm1237, %v3747, %v3749
  %v3796 = vsel %vm1237, %v3745, %v3747
  %v3797 = vsel %vm1237, %v3779, %v3745
  %3798 = vrot.lane.b32.xlu0 %v2591, 27
  %v3799 = vpop.permute.xlu0 %3798
  %3800 = vrot.lane.b32.xlu0 %v2592, 27
  %v3801 = vpop.permute.xlu0 %3800
  %3802 = vrot.lane.b32.xlu0 %v2593, 27
  %v3803 = vpop.permute.xlu0 %3802
  %3804 = vrot.lane.b32.xlu0 %v2594, 27
  %v3805 = vpop.permute.xlu0 %3804
  %3806 = vrot.lane.b32.xlu0 %v2595, 27
  %v3807 = vpop.permute.xlu0 %3806
  %3808 = vrot.lane.b32.xlu0 %v2596, 27
  %v3809 = vpop.permute.xlu0 %3808
  %3810 = vrot.lane.b32.xlu0 %v2597, 27
  %v3811 = vpop.permute.xlu0 %3810
  %3812 = vrot.lane.b32.xlu0 %v2598, 27
  %v3813 = vpop.permute.xlu0 %3812
  %3814 = vrot.lane.b32.xlu0 %v2599, 27
  %v3815 = vpop.permute.xlu0 %3814
  %3816 = vrot.lane.b32.xlu0 %v2600, 27
  %v3817 = vpop.permute.xlu0 %3816
  %3818 = vrot.lane.b32.xlu0 %v2601, 27
  %v3819 = vpop.permute.xlu0 %3818
  %3820 = vrot.lane.b32.xlu0 %v2602, 27
  %v3821 = vpop.permute.xlu0 %3820
  %3822 = vrot.lane.b32.xlu0 %v2603, 27
  %v3823 = vpop.permute.xlu0 %3822
  %3824 = vrot.lane.b32.xlu0 %v2604, 27
  %v3825 = vpop.permute.xlu0 %3824
  %3826 = vrot.lane.b32.xlu0 %v2605, 27
  %v3827 = vpop.permute.xlu0 %3826
  %3828 = vrot.lane.b32.xlu0 %v2606, 27
  %v3829 = vpop.permute.xlu0 %3828
  %3830 = vrot.lane.b32.xlu0 %v2607, 27
  %v3831 = vpop.permute.xlu0 %3830
  %3832 = vrot.lane.b32.xlu0 %v2608, 27
  %v3833 = vpop.permute.xlu0 %3832
  %v3834 = vsel %vm1292, %v3831, %v3833
  %v3835 = vsel %vm1292, %v3829, %v3831
  %v3836 = vsel %vm1292, %v3827, %v3829
  %v3837 = vsel %vm1292, %v3825, %v3827
  %v3838 = vsel %vm1292, %v3823, %v3825
  %v3839 = vsel %vm1292, %v3821, %v3823
  %v3840 = vsel %vm1292, %v3819, %v3821
  %v3841 = vsel %vm1292, %v3817, %v3819
  %v3842 = vsel %vm1292, %v3815, %v3817
  %v3843 = vsel %vm1292, %v3813, %v3815
  %v3844 = vsel %vm1292, %v3811, %v3813
  %v3845 = vsel %vm1292, %v3809, %v3811
  %v3846 = vsel %vm1292, %v3807, %v3809
  %v3847 = vsel %vm1292, %v3805, %v3807
  %v3848 = vsel %vm1292, %v3803, %v3805
  %v3849 = vsel %vm1292, %v3801, %v3803
  %v3850 = vsel %vm1292, %v3799, %v3801
  %v3851 = vsel %vm1292, %v3833, %v3799
  %3852 = vrot.lane.b32.xlu0 %v2591, 19
  %v3853 = vpop.permute.xlu0 %3852
  %3854 = vrot.lane.b32.xlu0 %v2592, 19
  %v3855 = vpop.permute.xlu0 %3854
  %3856 = vrot.lane.b32.xlu0 %v2593, 19
  %v3857 = vpop.permute.xlu0 %3856
  %3858 = vrot.lane.b32.xlu0 %v2594, 19
  %v3859 = vpop.permute.xlu0 %3858
  %3860 = vrot.lane.b32.xlu0 %v2595, 19
  %v3861 = vpop.permute.xlu0 %3860
  %3862 = vrot.lane.b32.xlu0 %v2596, 19
  %v3863 = vpop.permute.xlu0 %3862
  %3864 = vrot.lane.b32.xlu0 %v2597, 19
  %v3865 = vpop.permute.xlu0 %3864
  %3866 = vrot.lane.b32.xlu0 %v2598, 19
  %v3867 = vpop.permute.xlu0 %3866
  %3868 = vrot.lane.b32.xlu0 %v2599, 19
  %v3869 = vpop.permute.xlu0 %3868
  %3870 = vrot.lane.b32.xlu0 %v2600, 19
  %v3871 = vpop.permute.xlu0 %3870
  %3872 = vrot.lane.b32.xlu0 %v2601, 19
  %v3873 = vpop.permute.xlu0 %3872
  %3874 = vrot.lane.b32.xlu0 %v2602, 19
  %v3875 = vpop.permute.xlu0 %3874
  %3876 = vrot.lane.b32.xlu0 %v2603, 19
  %v3877 = vpop.permute.xlu0 %3876
  %3878 = vrot.lane.b32.xlu0 %v2604, 19
  %v3879 = vpop.permute.xlu0 %3878
  %3880 = vrot.lane.b32.xlu0 %v2605, 19
  %v3881 = vpop.permute.xlu0 %3880
  %3882 = vrot.lane.b32.xlu0 %v2606, 19
  %v3883 = vpop.permute.xlu0 %3882
  %3884 = vrot.lane.b32.xlu0 %v2607, 19
  %v3885 = vpop.permute.xlu0 %3884
  %3886 = vrot.lane.b32.xlu0 %v2608, 19
  %v3887 = vpop.permute.xlu0 %3886
  %v3888 = vsel %vm1347, %v3885, %v3887
  %v3889 = vsel %vm1347, %v3883, %v3885
  %v3890 = vsel %vm1347, %v3881, %v3883
  %v3891 = vsel %vm1347, %v3879, %v3881
  %v3892 = vsel %vm1347, %v3877, %v3879
  %v3893 = vsel %vm1347, %v3875, %v3877
  %v3894 = vsel %vm1347, %v3873, %v3875
  %v3895 = vsel %vm1347, %v3871, %v3873
  %v3896 = vsel %vm1347, %v3869, %v3871
  %v3897 = vsel %vm1347, %v3867, %v3869
  %v3898 = vsel %vm1347, %v3865, %v3867
  %v3899 = vsel %vm1347, %v3863, %v3865
  %v3900 = vsel %vm1347, %v3861, %v3863
  %v3901 = vsel %vm1347, %v3859, %v3861
  %v3902 = vsel %vm1347, %v3857, %v3859
  %v3903 = vsel %vm1347, %v3855, %v3857
  %v3904 = vsel %vm1347, %v3853, %v3855
  %v3905 = vsel %vm1347, %v3887, %v3853
  %3906 = vrot.lane.b32.xlu0 %v2591, 18
  %v3907 = vpop.permute.xlu0 %3906
  %3908 = vrot.lane.b32.xlu0 %v2592, 18
  %v3909 = vpop.permute.xlu0 %3908
  %3910 = vrot.lane.b32.xlu0 %v2593, 18
  %v3911 = vpop.permute.xlu0 %3910
  %3912 = vrot.lane.b32.xlu0 %v2594, 18
  %v3913 = vpop.permute.xlu0 %3912
  %3914 = vrot.lane.b32.xlu0 %v2595, 18
  %v3915 = vpop.permute.xlu0 %3914
  %3916 = vrot.lane.b32.xlu0 %v2596, 18
  %v3917 = vpop.permute.xlu0 %3916
  %3918 = vrot.lane.b32.xlu0 %v2597, 18
  %v3919 = vpop.permute.xlu0 %3918
  %3920 = vrot.lane.b32.xlu0 %v2598, 18
  %v3921 = vpop.permute.xlu0 %3920
  %3922 = vrot.lane.b32.xlu0 %v2599, 18
  %v3923 = vpop.permute.xlu0 %3922
  %3924 = vrot.lane.b32.xlu0 %v2600, 18
  %v3925 = vpop.permute.xlu0 %3924
  %3926 = vrot.lane.b32.xlu0 %v2601, 18
  %v3927 = vpop.permute.xlu0 %3926
  %3928 = vrot.lane.b32.xlu0 %v2602, 18
  %v3929 = vpop.permute.xlu0 %3928
  %3930 = vrot.lane.b32.xlu0 %v2603, 18
  %v3931 = vpop.permute.xlu0 %3930
  %3932 = vrot.lane.b32.xlu0 %v2604, 18
  %v3933 = vpop.permute.xlu0 %3932
  %3934 = vrot.lane.b32.xlu0 %v2605, 18
  %v3935 = vpop.permute.xlu0 %3934
  %3936 = vrot.lane.b32.xlu0 %v2606, 18
  %v3937 = vpop.permute.xlu0 %3936
  %3938 = vrot.lane.b32.xlu0 %v2607, 18
  %v3939 = vpop.permute.xlu0 %3938
  %3940 = vrot.lane.b32.xlu0 %v2608, 18
  %v3941 = vpop.permute.xlu0 %3940
  %v3942 = vsel %vm1402, %v3939, %v3941
  %v3943 = vsel %vm1402, %v3937, %v3939
  %v3944 = vsel %vm1402, %v3935, %v3937
  %v3945 = vsel %vm1402, %v3933, %v3935
  %v3946 = vsel %vm1402, %v3931, %v3933
  %v3947 = vsel %vm1402, %v3929, %v3931
  %v3948 = vsel %vm1402, %v3927, %v3929
  %v3949 = vsel %vm1402, %v3925, %v3927
  %v3950 = vsel %vm1402, %v3923, %v3925
  %v3951 = vsel %vm1402, %v3921, %v3923
  %v3952 = vsel %vm1402, %v3919, %v3921
  %v3953 = vsel %vm1402, %v3917, %v3919
  %v3954 = vsel %vm1402, %v3915, %v3917
  %v3955 = vsel %vm1402, %v3913, %v3915
  %v3956 = vsel %vm1402, %v3911, %v3913
  %v3957 = vsel %vm1402, %v3909, %v3911
  %v3958 = vsel %vm1402, %v3907, %v3909
  %v3959 = vsel %vm1402, %v3941, %v3907
  %3960 = vrot.lane.b32.xlu0 %v2591, 17
  %v3961 = vpop.permute.xlu0 %3960
  %3962 = vrot.lane.b32.xlu0 %v2592, 17
  %v3963 = vpop.permute.xlu0 %3962
  %3964 = vrot.lane.b32.xlu0 %v2593, 17
  %v3965 = vpop.permute.xlu0 %3964
  %3966 = vrot.lane.b32.xlu0 %v2594, 17
  %v3967 = vpop.permute.xlu0 %3966
  %3968 = vrot.lane.b32.xlu0 %v2595, 17
  %v3969 = vpop.permute.xlu0 %3968
  %3970 = vrot.lane.b32.xlu0 %v2596, 17
  %v3971 = vpop.permute.xlu0 %3970
  %3972 = vrot.lane.b32.xlu0 %v2597, 17
  %v3973 = vpop.permute.xlu0 %3972
  %3974 = vrot.lane.b32.xlu0 %v2598, 17
  %v3975 = vpop.permute.xlu0 %3974
  %3976 = vrot.lane.b32.xlu0 %v2599, 17
  %v3977 = vpop.permute.xlu0 %3976
  %3978 = vrot.lane.b32.xlu0 %v2600, 17
  %v3979 = vpop.permute.xlu0 %3978
  %3980 = vrot.lane.b32.xlu0 %v2601, 17
  %v3981 = vpop.permute.xlu0 %3980
  %3982 = vrot.lane.b32.xlu0 %v2602, 17
  %v3983 = vpop.permute.xlu0 %3982
  %3984 = vrot.lane.b32.xlu0 %v2603, 17
  %v3985 = vpop.permute.xlu0 %3984
  %3986 = vrot.lane.b32.xlu0 %v2604, 17
  %v3987 = vpop.permute.xlu0 %3986
  %3988 = vrot.lane.b32.xlu0 %v2605, 17
  %v3989 = vpop.permute.xlu0 %3988
  %3990 = vrot.lane.b32.xlu0 %v2606, 17
  %v3991 = vpop.permute.xlu0 %3990
  %3992 = vrot.lane.b32.xlu0 %v2607, 17
  %v3993 = vpop.permute.xlu0 %3992
  %3994 = vrot.lane.b32.xlu0 %v2608, 17
  %v3995 = vpop.permute.xlu0 %3994
  %v3996 = vsel %vm1457, %v3993, %v3995
  %v3997 = vsel %vm1457, %v3991, %v3993
  %v3998 = vsel %vm1457, %v3989, %v3991
  %v3999 = vsel %vm1457, %v3987, %v3989
  %v4000 = vsel %vm1457, %v3985, %v3987
  %v4001 = vsel %vm1457, %v3983, %v3985
  %v4002 = vsel %vm1457, %v3981, %v3983
  %v4003 = vsel %vm1457, %v3979, %v3981
  %v4004 = vsel %vm1457, %v3977, %v3979
  %v4005 = vsel %vm1457, %v3975, %v3977
  %v4006 = vsel %vm1457, %v3973, %v3975
  %v4007 = vsel %vm1457, %v3971, %v3973
  %v4008 = vsel %vm1457, %v3969, %v3971
  %v4009 = vsel %vm1457, %v3967, %v3969
  %v4010 = vsel %vm1457, %v3965, %v3967
  %v4011 = vsel %vm1457, %v3963, %v3965
  %v4012 = vsel %vm1457, %v3961, %v3963
  %v4013 = vsel %vm1457, %v3995, %v3961
  %v4014 = vpack.c.bf16 %v2717, %v2663
  %v4015 = vpack.c.bf16 %v2716, %v2662
  %v4016 = vpack.c.bf16 %v2715, %v2661
  %v4017 = vpack.c.bf16 %v2714, %v2660
  %v4018 = vpack.c.bf16 %v2713, %v2659
  %v4019 = vpack.c.bf16 %v2712, %v2658
  %v4020 = vpack.c.bf16 %v2711, %v2657
  %v4021 = vpack.c.bf16 %v2710, %v2656
  %v4022 = vpack.c.bf16 %v2709, %v2655
  %v4023 = vpack.c.bf16 %v2708, %v2654
  %v4024 = vpack.c.bf16 %v2707, %v2653
  %v4025 = vpack.c.bf16 %v2706, %v2652
  %v4026 = vpack.c.bf16 %v2705, %v2651
  %v4027 = vpack.c.bf16 %v2704, %v2650
  %v4028 = vpack.c.bf16 %v2703, %v2649
  %v4029 = vpack.c.bf16 %v2702, %v2648
  %v4030 = vpack.c.bf16 %v2701, %v2647
  %v4031 = vpack.c.bf16 %v2700, %v2646
  %v4032 = vpack.c.bf16 %v2825, %v2771
  %v4033 = vpack.c.bf16 %v2824, %v2770
  %v4034 = vpack.c.bf16 %v2823, %v2769
  %v4035 = vpack.c.bf16 %v2822, %v2768
  %v4036 = vpack.c.bf16 %v2821, %v2767
  %v4037 = vpack.c.bf16 %v2820, %v2766
  %v4038 = vpack.c.bf16 %v2819, %v2765
  %v4039 = vpack.c.bf16 %v2818, %v2764
  %v4040 = vpack.c.bf16 %v2817, %v2763
  %v4041 = vpack.c.bf16 %v2816, %v2762
  %v4042 = vpack.c.bf16 %v2815, %v2761
  %v4043 = vpack.c.bf16 %v2814, %v2760
  %v4044 = vpack.c.bf16 %v2813, %v2759
  %v4045 = vpack.c.bf16 %v2812, %v2758
  %v4046 = vpack.c.bf16 %v2811, %v2757
  %v4047 = vpack.c.bf16 %v2810, %v2756
  %v4048 = vpack.c.bf16 %v2809, %v2755
  %v4049 = vpack.c.bf16 %v2808, %v2754
  %v4050 = vpack.c.bf16 %v2933, %v2879
  %v4051 = vpack.c.bf16 %v2932, %v2878
  %v4052 = vpack.c.bf16 %v2931, %v2877
  %v4053 = vpack.c.bf16 %v2930, %v2876
  %v4054 = vpack.c.bf16 %v2929, %v2875
  %v4055 = vpack.c.bf16 %v2928, %v2874
  %v4056 = vpack.c.bf16 %v2927, %v2873
  %v4057 = vpack.c.bf16 %v2926, %v2872
  %v4058 = vpack.c.bf16 %v2925, %v2871
  %v4059 = vpack.c.bf16 %v2924, %v2870
  %v4060 = vpack.c.bf16 %v2923, %v2869
  %v4061 = vpack.c.bf16 %v2922, %v2868
  %v4062 = vpack.c.bf16 %v2921, %v2867
  %v4063 = vpack.c.bf16 %v2920, %v2866
  %v4064 = vpack.c.bf16 %v2919, %v2865
  %v4065 = vpack.c.bf16 %v2918, %v2864
  %v4066 = vpack.c.bf16 %v2917, %v2863
  %v4067 = vpack.c.bf16 %v2916, %v2862
  %v4068 = vpack.c.bf16 %v3041, %v2987
  %v4069 = vpack.c.bf16 %v3040, %v2986
  %v4070 = vpack.c.bf16 %v3039, %v2985
  %v4071 = vpack.c.bf16 %v3038, %v2984
  %v4072 = vpack.c.bf16 %v3037, %v2983
  %v4073 = vpack.c.bf16 %v3036, %v2982
  %v4074 = vpack.c.bf16 %v3035, %v2981
  %v4075 = vpack.c.bf16 %v3034, %v2980
  %v4076 = vpack.c.bf16 %v3033, %v2979
  %v4077 = vpack.c.bf16 %v3032, %v2978
  %v4078 = vpack.c.bf16 %v3031, %v2977
  %v4079 = vpack.c.bf16 %v3030, %v2976
  %v4080 = vpack.c.bf16 %v3029, %v2975
  %v4081 = vpack.c.bf16 %v3028, %v2974
  %v4082 = vpack.c.bf16 %v3027, %v2973
  %v4083 = vpack.c.bf16 %v3026, %v2972
  %v4084 = vpack.c.bf16 %v3025, %v2971
  %v4085 = vpack.c.bf16 %v3024, %v2970
  %v4086 = vpack.c.bf16 %v3149, %v3095
  %v4087 = vpack.c.bf16 %v3148, %v3094
  %v4088 = vpack.c.bf16 %v3147, %v3093
  %v4089 = vpack.c.bf16 %v3146, %v3092
  %v4090 = vpack.c.bf16 %v3145, %v3091
  %v4091 = vpack.c.bf16 %v3144, %v3090
  %v4092 = vpack.c.bf16 %v3143, %v3089
  %v4093 = vpack.c.bf16 %v3142, %v3088
  %v4094 = vpack.c.bf16 %v3141, %v3087
  %v4095 = vpack.c.bf16 %v3140, %v3086
  %v4096 = vpack.c.bf16 %v3139, %v3085
  %v4097 = vpack.c.bf16 %v3138, %v3084
  %v4098 = vpack.c.bf16 %v3137, %v3083
  %v4099 = vpack.c.bf16 %v3136, %v3082
  %v4100 = vpack.c.bf16 %v3135, %v3081
  %v4101 = vpack.c.bf16 %v3134, %v3080
  %v4102 = vpack.c.bf16 %v3133, %v3079
  %v4103 = vpack.c.bf16 %v3132, %v3078
  %v4104 = vpack.c.bf16 %v3257, %v3203
  %v4105 = vpack.c.bf16 %v3256, %v3202
  %v4106 = vpack.c.bf16 %v3255, %v3201
  %v4107 = vpack.c.bf16 %v3254, %v3200
  %v4108 = vpack.c.bf16 %v3253, %v3199
  %v4109 = vpack.c.bf16 %v3252, %v3198
  %v4110 = vpack.c.bf16 %v3251, %v3197
  %v4111 = vpack.c.bf16 %v3250, %v3196
  %v4112 = vpack.c.bf16 %v3249, %v3195
  %v4113 = vpack.c.bf16 %v3248, %v3194
  %v4114 = vpack.c.bf16 %v3247, %v3193
  %v4115 = vpack.c.bf16 %v3246, %v3192
  %v4116 = vpack.c.bf16 %v3245, %v3191
  %v4117 = vpack.c.bf16 %v3244, %v3190
  %v4118 = vpack.c.bf16 %v3243, %v3189
  %v4119 = vpack.c.bf16 %v3242, %v3188
  %v4120 = vpack.c.bf16 %v3241, %v3187
  %v4121 = vpack.c.bf16 %v3240, %v3186
  %v4122 = vpack.c.bf16 %v2591, %v3311
  %v4123 = vpack.c.bf16 %v2592, %v3310
  %v4124 = vpack.c.bf16 %v2593, %v3309
  %v4125 = vpack.c.bf16 %v2594, %v3308
  %v4126 = vpack.c.bf16 %v2595, %v3307
  %v4127 = vpack.c.bf16 %v2596, %v3306
  %v4128 = vpack.c.bf16 %v2597, %v3305
  %v4129 = vpack.c.bf16 %v2598, %v3304
  %v4130 = vpack.c.bf16 %v2599, %v3303
  %v4131 = vpack.c.bf16 %v2600, %v3302
  %v4132 = vpack.c.bf16 %v2601, %v3301
  %v4133 = vpack.c.bf16 %v2602, %v3300
  %v4134 = vpack.c.bf16 %v2603, %v3299
  %v4135 = vpack.c.bf16 %v2604, %v3298
  %v4136 = vpack.c.bf16 %v2605, %v3297
  %v4137 = vpack.c.bf16 %v2606, %v3296
  %v4138 = vpack.c.bf16 %v2607, %v3295
  %v4139 = vpack.c.bf16 %v2608, %v3294
  %v4140 = vpack.c.bf16 %v3418, %v3364
  %v4141 = vpack.c.bf16 %v3417, %v3363
  %v4142 = vpack.c.bf16 %v3416, %v3362
  %v4143 = vpack.c.bf16 %v3415, %v3361
  %v4144 = vpack.c.bf16 %v3414, %v3360
  %v4145 = vpack.c.bf16 %v3413, %v3359
  %v4146 = vpack.c.bf16 %v3412, %v3358
  %v4147 = vpack.c.bf16 %v3411, %v3357
  %v4148 = vpack.c.bf16 %v3410, %v3356
  %v4149 = vpack.c.bf16 %v3409, %v3355
  %v4150 = vpack.c.bf16 %v3408, %v3354
  %v4151 = vpack.c.bf16 %v3407, %v3353
  %v4152 = vpack.c.bf16 %v3406, %v3352
  %v4153 = vpack.c.bf16 %v3405, %v3351
  %v4154 = vpack.c.bf16 %v3404, %v3350
  %v4155 = vpack.c.bf16 %v3403, %v3349
  %v4156 = vpack.c.bf16 %v3402, %v3348
  %v4157 = vpack.c.bf16 %v3419, %v3365
  %v4158 = vpack.c.bf16 %v3526, %v3472
  %v4159 = vpack.c.bf16 %v3525, %v3471
  %v4160 = vpack.c.bf16 %v3524, %v3470
  %v4161 = vpack.c.bf16 %v3523, %v3469
  %v4162 = vpack.c.bf16 %v3522, %v3468
  %v4163 = vpack.c.bf16 %v3521, %v3467
  %v4164 = vpack.c.bf16 %v3520, %v3466
  %v4165 = vpack.c.bf16 %v3519, %v3465
  %v4166 = vpack.c.bf16 %v3518, %v3464
  %v4167 = vpack.c.bf16 %v3517, %v3463
  %v4168 = vpack.c.bf16 %v3516, %v3462
  %v4169 = vpack.c.bf16 %v3515, %v3461
  %v4170 = vpack.c.bf16 %v3514, %v3460
  %v4171 = vpack.c.bf16 %v3513, %v3459
  %v4172 = vpack.c.bf16 %v3512, %v3458
  %v4173 = vpack.c.bf16 %v3511, %v3457
  %v4174 = vpack.c.bf16 %v3510, %v3456
  %v4175 = vpack.c.bf16 %v3527, %v3473
  %v4176 = vpack.c.bf16 %v3634, %v3580
  %v4177 = vpack.c.bf16 %v3633, %v3579
  %v4178 = vpack.c.bf16 %v3632, %v3578
  %v4179 = vpack.c.bf16 %v3631, %v3577
  %v4180 = vpack.c.bf16 %v3630, %v3576
  %v4181 = vpack.c.bf16 %v3629, %v3575
  %v4182 = vpack.c.bf16 %v3628, %v3574
  %v4183 = vpack.c.bf16 %v3627, %v3573
  %v4184 = vpack.c.bf16 %v3626, %v3572
  %v4185 = vpack.c.bf16 %v3625, %v3571
  %v4186 = vpack.c.bf16 %v3624, %v3570
  %v4187 = vpack.c.bf16 %v3623, %v3569
  %v4188 = vpack.c.bf16 %v3622, %v3568
  %v4189 = vpack.c.bf16 %v3621, %v3567
  %v4190 = vpack.c.bf16 %v3620, %v3566
  %v4191 = vpack.c.bf16 %v3619, %v3565
  %v4192 = vpack.c.bf16 %v3618, %v3564
  %v4193 = vpack.c.bf16 %v3635, %v3581
  %v4194 = vpack.c.bf16 %v3742, %v3688
  %v4195 = vpack.c.bf16 %v3741, %v3687
  %v4196 = vpack.c.bf16 %v3740, %v3686
  %v4197 = vpack.c.bf16 %v3739, %v3685
  %v4198 = vpack.c.bf16 %v3738, %v3684
  %v4199 = vpack.c.bf16 %v3737, %v3683
  %v4200 = vpack.c.bf16 %v3736, %v3682
  %v4201 = vpack.c.bf16 %v3735, %v3681
  %v4202 = vpack.c.bf16 %v3734, %v3680
  %v4203 = vpack.c.bf16 %v3733, %v3679
  %v4204 = vpack.c.bf16 %v3732, %v3678
  %v4205 = vpack.c.bf16 %v3731, %v3677
  %v4206 = vpack.c.bf16 %v3730, %v3676
  %v4207 = vpack.c.bf16 %v3729, %v3675
  %v4208 = vpack.c.bf16 %v3728, %v3674
  %v4209 = vpack.c.bf16 %v3727, %v3673
  %v4210 = vpack.c.bf16 %v3726, %v3672
  %v4211 = vpack.c.bf16 %v3743, %v3689
  %v4212 = vpack.c.bf16 %v3850, %v3796
  %v4213 = vpack.c.bf16 %v3849, %v3795
  %v4214 = vpack.c.bf16 %v3848, %v3794
  %v4215 = vpack.c.bf16 %v3847, %v3793
  %v4216 = vpack.c.bf16 %v3846, %v3792
  %v4217 = vpack.c.bf16 %v3845, %v3791
  %v4218 = vpack.c.bf16 %v3844, %v3790
  %v4219 = vpack.c.bf16 %v3843, %v3789
  %v4220 = vpack.c.bf16 %v3842, %v3788
  %v4221 = vpack.c.bf16 %v3841, %v3787
  %v4222 = vpack.c.bf16 %v3840, %v3786
  %v4223 = vpack.c.bf16 %v3839, %v3785
  %v4224 = vpack.c.bf16 %v3838, %v3784
  %v4225 = vpack.c.bf16 %v3837, %v3783
  %v4226 = vpack.c.bf16 %v3836, %v3782
  %v4227 = vpack.c.bf16 %v3835, %v3781
  %v4228 = vpack.c.bf16 %v3834, %v3780
  %v4229 = vpack.c.bf16 %v3851, %v3797
  %v4230 = vpack.c.bf16 %v3958, %v3904
  %v4231 = vpack.c.bf16 %v3957, %v3903
  %v4232 = vpack.c.bf16 %v3956, %v3902
  %v4233 = vpack.c.bf16 %v3955, %v3901
  %v4234 = vpack.c.bf16 %v3954, %v3900
  %v4235 = vpack.c.bf16 %v3953, %v3899
  %v4236 = vpack.c.bf16 %v3952, %v3898
  %v4237 = vpack.c.bf16 %v3951, %v3897
  %v4238 = vpack.c.bf16 %v3950, %v3896
  %v4239 = vpack.c.bf16 %v3949, %v3895
  %v4240 = vpack.c.bf16 %v3948, %v3894
  %v4241 = vpack.c.bf16 %v3947, %v3893
  %v4242 = vpack.c.bf16 %v3946, %v3892
  %v4243 = vpack.c.bf16 %v3945, %v3891
  %v4244 = vpack.c.bf16 %v3944, %v3890
  %v4245 = vpack.c.bf16 %v3943, %v3889
  %v4246 = vpack.c.bf16 %v3942, %v3888
  %v4247 = vpack.c.bf16 %v3959, %v3905
  %v4248 = vpack.c.bf16 %v4012, %v4012
  %v4249 = vpack.c.bf16 %v4011, %v4011
  %v4250 = vpack.c.bf16 %v4010, %v4010
  %v4251 = vpack.c.bf16 %v4009, %v4009
  %v4252 = vpack.c.bf16 %v4008, %v4008
  %v4253 = vpack.c.bf16 %v4007, %v4007
  %v4254 = vpack.c.bf16 %v4006, %v4006
  %v4255 = vpack.c.bf16 %v4005, %v4005
  %v4256 = vpack.c.bf16 %v4004, %v4004
  %v4257 = vpack.c.bf16 %v4003, %v4003
  %v4258 = vpack.c.bf16 %v4002, %v4002
  %v4259 = vpack.c.bf16 %v4001, %v4001
  %v4260 = vpack.c.bf16 %v4000, %v4000
  %v4261 = vpack.c.bf16 %v3999, %v3999
  %v4262 = vpack.c.bf16 %v3998, %v3998
  %v4263 = vpack.c.bf16 %v3997, %v3997
  %v4264 = vpack.c.bf16 %v3996, %v3996
  %v4265 = vpack.c.bf16 %v4013, %v4013
  %v4267 = vunpack.c.l.b16 %v2609
  %v4268 = vunpack.c.h.b16 %v2609
  %v4269 = vpack.c.b16 %v4267, %v4267
  %v4270 = vpack.c.b16 %v4268, %v4268
  %v4273 = vsel %vm1737, %v4270, 0
  %v4276 = vsel %vm1741, %v4248, 0
  %v4279 = vsel %vm1741, %v4249, 0
  %v4282 = vsel %vm1741, %v4250, 0
  %v4285 = vsel %vm1741, %v4251, 0
  %v4288 = vsel %vm1741, %v4252, 0
  %v4291 = vsel %vm1741, %v4253, 0
  %v4294 = vsel %vm1741, %v4254, 0
  %v4297 = vsel %vm1741, %v4255, 0
  %v4300 = vsel %vm1741, %v4256, 0
  %v4303 = vsel %vm1741, %v4257, 0
  %v4306 = vsel %vm1741, %v4258, 0
  %v4309 = vsel %vm1741, %v4259, 0
  %v4312 = vsel %vm1741, %v4260, 0
  %v4315 = vsel %vm1741, %v4261, 0
  %v4318 = vsel %vm1741, %v4262, 0
  %v4321 = vsel %vm1741, %v4263, 0
  %v4324 = vsel %vm1741, %v4264, 0
  %v4327 = vsel %vm1741, %v4265, 0
  %4329 = vmatprep.subr.bf16.mxu0 %v4141
  %4330 = vmatpush1.bf16.msra.mxu0 %v4140
  %4331 = vmatprep.subr.bf16.mxu0 %v4123
  %4332 = vmatpush1.bf16.msra.mxu0 %v4122
  %4333 = vmatprep.subr.bf16.mxu0 %v4105
  %4334 = vmatpush1.bf16.msra.mxu0 %v4104
  %4335 = vmatprep.subr.bf16.mxu0 %v4087
  %4336 = vmatpush1.bf16.msra.mxu0 %v4086
  %4337 = vmatprep.subr.bf16.mxu0 %v4069
  %4338 = vmatpush1.bf16.msra.mxu0 %v4068
  %4339 = vmatprep.subr.bf16.mxu0 %v4051
  %4340 = vmatpush1.bf16.msra.mxu0 %v4050
  %4341 = vmatprep.subr.bf16.mxu0 %v4033
  %4342 = vmatpush1.bf16.msra.mxu0 %v4032
  %4343 = vmatprep.subr.bf16.mxu0 %v4015
  %4344 = vmatpush1.bf16.msra.mxu0 %v4014
  %4345 = vmatprep.subr.bf16.mxu0 0
  %4346 = vmatpush2.bf16.msra.mxu0 0
  %4347 = vmatprep.subr.bf16.mxu0 0
  %4348 = vmatpush2.bf16.msra.mxu0 0
  %4349 = vmatprep.subr.bf16.mxu0 %v4279
  %4350 = vmatpush2.bf16.msra.mxu0 %v4276
  %4351 = vmatprep.subr.bf16.mxu0 %v4231
  %4352 = vmatpush2.bf16.msra.mxu0 %v4230
  %4353 = vmatprep.subr.bf16.mxu0 %v4213
  %4354 = vmatpush2.bf16.msra.mxu0 %v4212
  %4355 = vmatprep.subr.bf16.mxu0 %v4195
  %4356 = vmatpush2.bf16.msra.mxu0 %v4194
  %4357 = vmatprep.subr.bf16.mxu0 %v4177
  %4358 = vmatpush2.bf16.msra.mxu0 %v4176
  %4359 = vmatprep.subr.bf16.mxu0 %v4159
  %4360 = vmatpush2.bf16.msra.mxu0 %v4158
  %4361 = vmatprep.mubr.bf16.mxu0 %v4273
  %4362 = vmatmul.mubr.bf16.gmra.mxu0 %v4269
  %v4363 = vpop.f32.mrf.mxu0
  %v4364 = vadd.f32 0.0, %v4363
  %v4365 = vpop.f32.mrf.mxu0
  %v4366 = vadd.f32 0.0, %v4365
  %v4367 = vpop.f32.mrf.mxu0
  %v4368 = vpop.f32.mrf.mxu0
  %4369 = vdwg.mxu0
  %4370 = vmatprep.subr.bf16.mxu0 %v4143
  %4371 = vmatpush1.bf16.msra.mxu0 %v4142
  %4372 = vmatprep.subr.bf16.mxu0 %v4125
  %4373 = vmatpush1.bf16.msra.mxu0 %v4124
  %4374 = vmatprep.subr.bf16.mxu0 %v4107
  %4375 = vmatpush1.bf16.msra.mxu0 %v4106
  %4376 = vmatprep.subr.bf16.mxu0 %v4089
  %4377 = vmatpush1.bf16.msra.mxu0 %v4088
  %4378 = vmatprep.subr.bf16.mxu0 %v4071
  %4379 = vmatpush1.bf16.msra.mxu0 %v4070
  %4380 = vmatprep.subr.bf16.mxu0 %v4053
  %4381 = vmatpush1.bf16.msra.mxu0 %v4052
  %4382 = vmatprep.subr.bf16.mxu0 %v4035
  %4383 = vmatpush1.bf16.msra.mxu0 %v4034
  %4384 = vmatprep.subr.bf16.mxu0 %v4017
  %4385 = vmatpush1.bf16.msra.mxu0 %v4016
  %4386 = vmatprep.subr.bf16.mxu0 0
  %4387 = vmatpush2.bf16.msra.mxu0 0
  %4388 = vmatprep.subr.bf16.mxu0 0
  %4389 = vmatpush2.bf16.msra.mxu0 0
  %4390 = vmatprep.subr.bf16.mxu0 %v4285
  %4391 = vmatpush2.bf16.msra.mxu0 %v4282
  %4392 = vmatprep.subr.bf16.mxu0 %v4233
  %4393 = vmatpush2.bf16.msra.mxu0 %v4232
  %4394 = vmatprep.subr.bf16.mxu0 %v4215
  %4395 = vmatpush2.bf16.msra.mxu0 %v4214
  %4396 = vmatprep.subr.bf16.mxu0 %v4197
  %4397 = vmatpush2.bf16.msra.mxu0 %v4196
  %4398 = vmatprep.subr.bf16.mxu0 %v4179
  %4399 = vmatpush2.bf16.msra.mxu0 %v4178
  %4400 = vmatprep.subr.bf16.mxu0 %v4161
  %4401 = vmatpush2.bf16.msra.mxu0 %v4160
  %4402 = vmatprep.mubr.bf16.mxu0 %v4273
  %4403 = vmatmul.mubr.bf16.gmra.mxu0 %v4269
  %v4404 = vpop.f32.mrf.mxu0
  %v4405 = vadd.f32 0.0, %v4404
  %v4406 = vpop.f32.mrf.mxu0
  %v4407 = vadd.f32 0.0, %v4406
  %v4408 = vpop.f32.mrf.mxu0
  %v4409 = vpop.f32.mrf.mxu0
  %4410 = vdwg.mxu0
  %4411 = vmatprep.subr.bf16.mxu0 %v4145
  %4412 = vmatpush1.bf16.msra.mxu0 %v4144
  %4413 = vmatprep.subr.bf16.mxu0 %v4127
  %4414 = vmatpush1.bf16.msra.mxu0 %v4126
  %4415 = vmatprep.subr.bf16.mxu0 %v4109
  %4416 = vmatpush1.bf16.msra.mxu0 %v4108
  %4417 = vmatprep.subr.bf16.mxu0 %v4091
  %4418 = vmatpush1.bf16.msra.mxu0 %v4090
  %4419 = vmatprep.subr.bf16.mxu0 %v4073
  %4420 = vmatpush1.bf16.msra.mxu0 %v4072
  %4421 = vmatprep.subr.bf16.mxu0 %v4055
  %4422 = vmatpush1.bf16.msra.mxu0 %v4054
  %4423 = vmatprep.subr.bf16.mxu0 %v4037
  %4424 = vmatpush1.bf16.msra.mxu0 %v4036
  %4425 = vmatprep.subr.bf16.mxu0 %v4019
  %4426 = vmatpush1.bf16.msra.mxu0 %v4018
  %4427 = vmatprep.subr.bf16.mxu0 0
  %4428 = vmatpush2.bf16.msra.mxu0 0
  %4429 = vmatprep.subr.bf16.mxu0 0
  %4430 = vmatpush2.bf16.msra.mxu0 0
  %4431 = vmatprep.subr.bf16.mxu0 %v4291
  %4432 = vmatpush2.bf16.msra.mxu0 %v4288
  %4433 = vmatprep.subr.bf16.mxu0 %v4235
  %4434 = vmatpush2.bf16.msra.mxu0 %v4234
  %4435 = vmatprep.subr.bf16.mxu0 %v4217
  %4436 = vmatpush2.bf16.msra.mxu0 %v4216
  %4437 = vmatprep.subr.bf16.mxu0 %v4199
  %4438 = vmatpush2.bf16.msra.mxu0 %v4198
  %4439 = vmatprep.subr.bf16.mxu0 %v4181
  %4440 = vmatpush2.bf16.msra.mxu0 %v4180
  %4441 = vmatprep.subr.bf16.mxu0 %v4163
  %4442 = vmatpush2.bf16.msra.mxu0 %v4162
  %4443 = vmatprep.mubr.bf16.mxu0 %v4273
  %4444 = vmatmul.mubr.bf16.gmra.mxu0 %v4269
  %v4445 = vpop.f32.mrf.mxu0
  %v4446 = vadd.f32 0.0, %v4445
  %v4447 = vpop.f32.mrf.mxu0
  %v4448 = vadd.f32 0.0, %v4447
  %v4449 = vpop.f32.mrf.mxu0
  %v4450 = vpop.f32.mrf.mxu0
  %4451 = vdwg.mxu0
  %4452 = vmatprep.subr.bf16.mxu0 %v4147
  %4453 = vmatpush1.bf16.msra.mxu0 %v4146
  %4454 = vmatprep.subr.bf16.mxu0 %v4129
  %4455 = vmatpush1.bf16.msra.mxu0 %v4128
  %4456 = vmatprep.subr.bf16.mxu0 %v4111
  %4457 = vmatpush1.bf16.msra.mxu0 %v4110
  %4458 = vmatprep.subr.bf16.mxu0 %v4093
  %4459 = vmatpush1.bf16.msra.mxu0 %v4092
  %4460 = vmatprep.subr.bf16.mxu0 %v4075
  %4461 = vmatpush1.bf16.msra.mxu0 %v4074
  %4462 = vmatprep.subr.bf16.mxu0 %v4057
  %4463 = vmatpush1.bf16.msra.mxu0 %v4056
  %4464 = vmatprep.subr.bf16.mxu0 %v4039
  %4465 = vmatpush1.bf16.msra.mxu0 %v4038
  %4466 = vmatprep.subr.bf16.mxu0 %v4021
  %4467 = vmatpush1.bf16.msra.mxu0 %v4020
  %4468 = vmatprep.subr.bf16.mxu0 0
  %4469 = vmatpush2.bf16.msra.mxu0 0
  %4470 = vmatprep.subr.bf16.mxu0 0
  %4471 = vmatpush2.bf16.msra.mxu0 0
  %4472 = vmatprep.subr.bf16.mxu0 %v4297
  %4473 = vmatpush2.bf16.msra.mxu0 %v4294
  %4474 = vmatprep.subr.bf16.mxu0 %v4237
  %4475 = vmatpush2.bf16.msra.mxu0 %v4236
  %4476 = vmatprep.subr.bf16.mxu0 %v4219
  %4477 = vmatpush2.bf16.msra.mxu0 %v4218
  %4478 = vmatprep.subr.bf16.mxu0 %v4201
  %4479 = vmatpush2.bf16.msra.mxu0 %v4200
  %4480 = vmatprep.subr.bf16.mxu0 %v4183
  %4481 = vmatpush2.bf16.msra.mxu0 %v4182
  %4482 = vmatprep.subr.bf16.mxu0 %v4165
  %4483 = vmatpush2.bf16.msra.mxu0 %v4164
  %4484 = vmatprep.mubr.bf16.mxu0 %v4273
  %4485 = vmatmul.mubr.bf16.gmra.mxu0 %v4269
  %v4486 = vpop.f32.mrf.mxu0
  %v4487 = vadd.f32 0.0, %v4486
  %v4488 = vpop.f32.mrf.mxu0
  %v4489 = vadd.f32 0.0, %v4488
  %v4490 = vpop.f32.mrf.mxu0
  %v4491 = vpop.f32.mrf.mxu0
  %4492 = vdwg.mxu0
  %4493 = vmatprep.subr.bf16.mxu0 %v4149
  %4494 = vmatpush1.bf16.msra.mxu0 %v4148
  %4495 = vmatprep.subr.bf16.mxu0 %v4131
  %4496 = vmatpush1.bf16.msra.mxu0 %v4130
  %4497 = vmatprep.subr.bf16.mxu0 %v4113
  %4498 = vmatpush1.bf16.msra.mxu0 %v4112
  %4499 = vmatprep.subr.bf16.mxu0 %v4095
  %4500 = vmatpush1.bf16.msra.mxu0 %v4094
  %4501 = vmatprep.subr.bf16.mxu0 %v4077
  %4502 = vmatpush1.bf16.msra.mxu0 %v4076
  %4503 = vmatprep.subr.bf16.mxu0 %v4059
  %4504 = vmatpush1.bf16.msra.mxu0 %v4058
  %4505 = vmatprep.subr.bf16.mxu0 %v4041
  %4506 = vmatpush1.bf16.msra.mxu0 %v4040
  %4507 = vmatprep.subr.bf16.mxu0 %v4023
  %4508 = vmatpush1.bf16.msra.mxu0 %v4022
  %4509 = vmatprep.subr.bf16.mxu0 0
  %4510 = vmatpush2.bf16.msra.mxu0 0
  %4511 = vmatprep.subr.bf16.mxu0 0
  %4512 = vmatpush2.bf16.msra.mxu0 0
  %4513 = vmatprep.subr.bf16.mxu0 %v4303
  %4514 = vmatpush2.bf16.msra.mxu0 %v4300
  %4515 = vmatprep.subr.bf16.mxu0 %v4239
  %4516 = vmatpush2.bf16.msra.mxu0 %v4238
  %4517 = vmatprep.subr.bf16.mxu0 %v4221
  %4518 = vmatpush2.bf16.msra.mxu0 %v4220
  %4519 = vmatprep.subr.bf16.mxu0 %v4203
  %4520 = vmatpush2.bf16.msra.mxu0 %v4202
  %4521 = vmatprep.subr.bf16.mxu0 %v4185
  %4522 = vmatpush2.bf16.msra.mxu0 %v4184
  %4523 = vmatprep.subr.bf16.mxu0 %v4167
  %4524 = vmatpush2.bf16.msra.mxu0 %v4166
  %4525 = vmatprep.mubr.bf16.mxu0 %v4273
  %4526 = vmatmul.mubr.bf16.gmra.mxu0 %v4269
  %v4527 = vpop.f32.mrf.mxu0
  %v4528 = vadd.f32 0.0, %v4527
  %v4529 = vpop.f32.mrf.mxu0
  %v4530 = vadd.f32 0.0, %v4529
  %v4531 = vpop.f32.mrf.mxu0
  %v4532 = vpop.f32.mrf.mxu0
  %4533 = vdwg.mxu0
  %4534 = vmatprep.subr.bf16.mxu0 %v4151
  %4535 = vmatpush1.bf16.msra.mxu0 %v4150
  %4536 = vmatprep.subr.bf16.mxu0 %v4133
  %4537 = vmatpush1.bf16.msra.mxu0 %v4132
  %4538 = vmatprep.subr.bf16.mxu0 %v4115
  %4539 = vmatpush1.bf16.msra.mxu0 %v4114
  %4540 = vmatprep.subr.bf16.mxu0 %v4097
  %4541 = vmatpush1.bf16.msra.mxu0 %v4096
  %4542 = vmatprep.subr.bf16.mxu0 %v4079
  %4543 = vmatpush1.bf16.msra.mxu0 %v4078
  %4544 = vmatprep.subr.bf16.mxu0 %v4061
  %4545 = vmatpush1.bf16.msra.mxu0 %v4060
  %4546 = vmatprep.subr.bf16.mxu0 %v4043
  %4547 = vmatpush1.bf16.msra.mxu0 %v4042
  %4548 = vmatprep.subr.bf16.mxu0 %v4025
  %4549 = vmatpush1.bf16.msra.mxu0 %v4024
  %4550 = vmatprep.subr.bf16.mxu0 0
  %4551 = vmatpush2.bf16.msra.mxu0 0
  %4552 = vmatprep.subr.bf16.mxu0 0
  %4553 = vmatpush2.bf16.msra.mxu0 0
  %4554 = vmatprep.subr.bf16.mxu0 %v4309
  %4555 = vmatpush2.bf16.msra.mxu0 %v4306
  %4556 = vmatprep.subr.bf16.mxu0 %v4241
  %4557 = vmatpush2.bf16.msra.mxu0 %v4240
  %4558 = vmatprep.subr.bf16.mxu0 %v4223
  %4559 = vmatpush2.bf16.msra.mxu0 %v4222
  %4560 = vmatprep.subr.bf16.mxu0 %v4205
  %4561 = vmatpush2.bf16.msra.mxu0 %v4204
  %4562 = vmatprep.subr.bf16.mxu0 %v4187
  %4563 = vmatpush2.bf16.msra.mxu0 %v4186
  %4564 = vmatprep.subr.bf16.mxu0 %v4169
  %4565 = vmatpush2.bf16.msra.mxu0 %v4168
  %4566 = vmatprep.mubr.bf16.mxu0 %v4273
  %4567 = vmatmul.mubr.bf16.gmra.mxu0 %v4269
  %v4568 = vpop.f32.mrf.mxu0
  %v4569 = vadd.f32 0.0, %v4568
  %v4570 = vpop.f32.mrf.mxu0
  %v4571 = vadd.f32 0.0, %v4570
  %v4572 = vpop.f32.mrf.mxu0
  %v4573 = vpop.f32.mrf.mxu0
  %4574 = vdwg.mxu0
  %4575 = vmatprep.subr.bf16.mxu0 %v4153
  %4576 = vmatpush1.bf16.msra.mxu0 %v4152
  %4577 = vmatprep.subr.bf16.mxu0 %v4135
  %4578 = vmatpush1.bf16.msra.mxu0 %v4134
  %4579 = vmatprep.subr.bf16.mxu0 %v4117
  %4580 = vmatpush1.bf16.msra.mxu0 %v4116
  %4581 = vmatprep.subr.bf16.mxu0 %v4099
  %4582 = vmatpush1.bf16.msra.mxu0 %v4098
  %4583 = vmatprep.subr.bf16.mxu0 %v4081
  %4584 = vmatpush1.bf16.msra.mxu0 %v4080
  %4585 = vmatprep.subr.bf16.mxu0 %v4063
  %4586 = vmatpush1.bf16.msra.mxu0 %v4062
  %4587 = vmatprep.subr.bf16.mxu0 %v4045
  %4588 = vmatpush1.bf16.msra.mxu0 %v4044
  %4589 = vmatprep.subr.bf16.mxu0 %v4027
  %4590 = vmatpush1.bf16.msra.mxu0 %v4026
  %4591 = vmatprep.subr.bf16.mxu0 0
  %4592 = vmatpush2.bf16.msra.mxu0 0
  %4593 = vmatprep.subr.bf16.mxu0 0
  %4594 = vmatpush2.bf16.msra.mxu0 0
  %4595 = vmatprep.subr.bf16.mxu0 %v4315
  %4596 = vmatpush2.bf16.msra.mxu0 %v4312
  %4597 = vmatprep.subr.bf16.mxu0 %v4243
  %4598 = vmatpush2.bf16.msra.mxu0 %v4242
  %4599 = vmatprep.subr.bf16.mxu0 %v4225
  %4600 = vmatpush2.bf16.msra.mxu0 %v4224
  %4601 = vmatprep.subr.bf16.mxu0 %v4207
  %4602 = vmatpush2.bf16.msra.mxu0 %v4206
  %4603 = vmatprep.subr.bf16.mxu0 %v4189
  %4604 = vmatpush2.bf16.msra.mxu0 %v4188
  %4605 = vmatprep.subr.bf16.mxu0 %v4171
  %4606 = vmatpush2.bf16.msra.mxu0 %v4170
  %4607 = vmatprep.mubr.bf16.mxu0 %v4273
  %4608 = vmatmul.mubr.bf16.gmra.mxu0 %v4269
  %v4609 = vpop.f32.mrf.mxu0
  %v4610 = vadd.f32 0.0, %v4609
  %v4611 = vpop.f32.mrf.mxu0
  %v4612 = vadd.f32 0.0, %v4611
  %v4613 = vpop.f32.mrf.mxu0
  %v4614 = vpop.f32.mrf.mxu0
  %4615 = vdwg.mxu0
  %4616 = vmatprep.subr.bf16.mxu0 %v4155
  %4617 = vmatpush1.bf16.msra.mxu0 %v4154
  %4618 = vmatprep.subr.bf16.mxu0 %v4137
  %4619 = vmatpush1.bf16.msra.mxu0 %v4136
  %4620 = vmatprep.subr.bf16.mxu0 %v4119
  %4621 = vmatpush1.bf16.msra.mxu0 %v4118
  %4622 = vmatprep.subr.bf16.mxu0 %v4101
  %4623 = vmatpush1.bf16.msra.mxu0 %v4100
  %4624 = vmatprep.subr.bf16.mxu0 %v4083
  %4625 = vmatpush1.bf16.msra.mxu0 %v4082
  %4626 = vmatprep.subr.bf16.mxu0 %v4065
  %4627 = vmatpush1.bf16.msra.mxu0 %v4064
  %4628 = vmatprep.subr.bf16.mxu0 %v4047
  %4629 = vmatpush1.bf16.msra.mxu0 %v4046
  %4630 = vmatprep.subr.bf16.mxu0 %v4029
  %4631 = vmatpush1.bf16.msra.mxu0 %v4028
  %4632 = vmatprep.subr.bf16.mxu0 0
  %4633 = vmatpush2.bf16.msra.mxu0 0
  %4634 = vmatprep.subr.bf16.mxu0 0
  %4635 = vmatpush2.bf16.msra.mxu0 0
  %4636 = vmatprep.subr.bf16.mxu0 %v4321
  %4637 = vmatpush2.bf16.msra.mxu0 %v4318
  %4638 = vmatprep.subr.bf16.mxu0 %v4245
  %4639 = vmatpush2.bf16.msra.mxu0 %v4244
  %4640 = vmatprep.subr.bf16.mxu0 %v4227
  %4641 = vmatpush2.bf16.msra.mxu0 %v4226
  %4642 = vmatprep.subr.bf16.mxu0 %v4209
  %4643 = vmatpush2.bf16.msra.mxu0 %v4208
  %4644 = vmatprep.subr.bf16.mxu0 %v4191
  %4645 = vmatpush2.bf16.msra.mxu0 %v4190
  %4646 = vmatprep.subr.bf16.mxu0 %v4173
  %4647 = vmatpush2.bf16.msra.mxu0 %v4172
  %4648 = vmatprep.mubr.bf16.mxu0 %v4273
  %4649 = vmatmul.mubr.bf16.gmra.mxu0 %v4269
  %v4650 = vpop.f32.mrf.mxu0
  %v4651 = vadd.f32 0.0, %v4650
  %v4652 = vpop.f32.mrf.mxu0
  %v4653 = vadd.f32 0.0, %v4652
  %v4654 = vpop.f32.mrf.mxu0
  %v4655 = vpop.f32.mrf.mxu0
  %4656 = vdwg.mxu0
  %4657 = vmatprep.subr.bf16.mxu0 %v4157
  %4658 = vmatpush1.bf16.msra.mxu0 %v4156
  %4659 = vmatprep.subr.bf16.mxu0 %v4139
  %4660 = vmatpush1.bf16.msra.mxu0 %v4138
  %4661 = vmatprep.subr.bf16.mxu0 %v4121
  %4662 = vmatpush1.bf16.msra.mxu0 %v4120
  %4663 = vmatprep.subr.bf16.mxu0 %v4103
  %4664 = vmatpush1.bf16.msra.mxu0 %v4102
  %4665 = vmatprep.subr.bf16.mxu0 %v4085
  %4666 = vmatpush1.bf16.msra.mxu0 %v4084
  %4667 = vmatprep.subr.bf16.mxu0 %v4067
  %4668 = vmatpush1.bf16.msra.mxu0 %v4066
  %4669 = vmatprep.subr.bf16.mxu0 %v4049
  %4670 = vmatpush1.bf16.msra.mxu0 %v4048
  %4671 = vmatprep.subr.bf16.mxu0 %v4031
  %4672 = vmatpush1.bf16.msra.mxu0 %v4030
  %4673 = vmatprep.subr.bf16.mxu0 0
  %4674 = vmatpush2.bf16.msra.mxu0 0
  %4675 = vmatprep.subr.bf16.mxu0 0
  %4676 = vmatpush2.bf16.msra.mxu0 0
  %4677 = vmatprep.subr.bf16.mxu0 %v4327
  %4678 = vmatpush2.bf16.msra.mxu0 %v4324
  %4679 = vmatprep.subr.bf16.mxu0 %v4247
  %4680 = vmatpush2.bf16.msra.mxu0 %v4246
  %4681 = vmatprep.subr.bf16.mxu0 %v4229
  %4682 = vmatpush2.bf16.msra.mxu0 %v4228
  %4683 = vmatprep.subr.bf16.mxu0 %v4211
  %4684 = vmatpush2.bf16.msra.mxu0 %v4210
  %4685 = vmatprep.subr.bf16.mxu0 %v4193
  %4686 = vmatpush2.bf16.msra.mxu0 %v4192
  %4687 = vmatprep.subr.bf16.mxu0 %v4175
  %4688 = vmatpush2.bf16.msra.mxu0 %v4174
  %4689 = vmatprep.mubr.bf16.mxu0 %v4273
  %4690 = vmatmul.mubr.bf16.gmra.mxu0 %v4269
  %v4691 = vpop.f32.mrf.mxu0
  %v4692 = vadd.f32 0.0, %v4691
  %v4693 = vpop.f32.mrf.mxu0
  %v4694 = vadd.f32 0.0, %v4693
  %v4695 = vpop.f32.mrf.mxu0
  %v4696 = vpop.f32.mrf.mxu0
  %4697 = vdwg.mxu0
  %s4698 = scalar_lea.vmem %s4, 16
  %v4699 = vld [vmem:[%s4698] sm:$0xff]
  %s4700 = scalar_lea.vmem %s4, 24
  %v4701 = vld [vmem:[%s4700] sm:$0xff]
  %v4702 = vmul.f32 %v4364, %v2193
  %v4703 = vmul.f32 %v4366, %v2197
  %v4704 = vmul.f32 %v4405, %v2201
  %v4705 = vmul.f32 %v4407, %v2205
  %v4706 = vmul.f32 %v4446, %v2209
  %v4707 = vmul.f32 %v4448, %v2213
  %v4708 = vmul.f32 %v4487, %v2217
  %v4709 = vmul.f32 %v4489, %v2221
  %v4710 = vmul.f32 %v4528, %v2225
  %v4711 = vmul.f32 %v4530, %v2229
  %v4712 = vmul.f32 %v4569, %v2233
  %v4713 = vmul.f32 %v4571, %v2237
  %v4714 = vmul.f32 %v4610, %v2241
  %v4715 = vmul.f32 %v4612, %v2245
  %v4716 = vmul.f32 %v4651, %v2249
  %v4717 = vmul.f32 %v4653, %v2253
  %v4718 = vmul.f32 %v4692, %v2257
  %v4719 = vmul.f32 %v4694, %v2261
  %v4720 = vadd.f32 %v4702, %v4703
  %v4721 = vadd.f32 %v4720, %v4704
  %v4722 = vadd.f32 %v4721, %v4705
  %v4723 = vadd.f32 %v4722, %v4706
  %v4724 = vadd.f32 %v4723, %v4707
  %v4725 = vadd.f32 %v4724, %v4708
  %v4726 = vadd.f32 %v4725, %v4709
  %v4727 = vadd.f32 %v4726, %v4710
  %v4728 = vadd.f32 %v4727, %v4711
  %v4729 = vadd.f32 %v4728, %v4712
  %v4730 = vadd.f32 %v4729, %v4713
  %v4731 = vadd.f32 %v4730, %v4714
  %v4732 = vadd.f32 %v4731, %v4715
  %v4733 = vadd.f32 %v4732, %v4716
  %v4734 = vadd.f32 %v4733, %v4717
  %v4735 = vadd.f32 %v4734, %v4718
  %v4736 = vadd.f32 %v4735, %v4719
  %4737 = vadd.xlane.f32.xlu0 %v4736
  %v4738 = vpop.xlane.xlu0 %4737
  %v4739 = vmul.f32 %v4738, 0.0009765625
  %v4740 = vmul.f32 %v4702, %v4364
  %v4741 = vmul.f32 %v4703, %v4366
  %v4742 = vmul.f32 %v4704, %v4405
  %v4743 = vmul.f32 %v4705, %v4407
  %v4744 = vmul.f32 %v4706, %v4446
  %v4745 = vmul.f32 %v4707, %v4448
  %v4746 = vmul.f32 %v4708, %v4487
  %v4747 = vmul.f32 %v4709, %v4489
  %v4748 = vmul.f32 %v4710, %v4528
  %v4749 = vmul.f32 %v4711, %v4530
  %v4750 = vmul.f32 %v4712, %v4569
  %v4751 = vmul.f32 %v4713, %v4571
  %v4752 = vmul.f32 %v4714, %v4610
  %v4753 = vmul.f32 %v4715, %v4612
  %v4754 = vmul.f32 %v4716, %v4651
  %v4755 = vmul.f32 %v4717, %v4653
  %v4756 = vmul.f32 %v4718, %v4692
  %v4757 = vmul.f32 %v4719, %v4694
  %v4758 = vadd.f32 %v4740, %v4741
  %v4759 = vadd.f32 %v4758, %v4742
  %v4760 = vadd.f32 %v4759, %v4743
  %v4761 = vadd.f32 %v4760, %v4744
  %v4762 = vadd.f32 %v4761, %v4745
  %v4763 = vadd.f32 %v4762, %v4746
  %v4764 = vadd.f32 %v4763, %v4747
  %v4765 = vadd.f32 %v4764, %v4748
  %v4766 = vadd.f32 %v4765, %v4749
  %v4767 = vadd.f32 %v4766, %v4750
  %v4768 = vadd.f32 %v4767, %v4751
  %v4769 = vadd.f32 %v4768, %v4752
  %v4770 = vadd.f32 %v4769, %v4753
  %v4771 = vadd.f32 %v4770, %v4754
  %v4772 = vadd.f32 %v4771, %v4755
  %v4773 = vadd.f32 %v4772, %v4756
  %v4774 = vadd.f32 %v4773, %v4757
  %4775 = vadd.xlane.f32.xlu0 %v4774
  %v4776 = vpop.xlane.xlu0 %4775
  %v4777 = vmul.f32 %v4776, 0.0009765625
  %v4778 = vmul.f32 %v4739, %v4739
  %v4779 = vsub.f32 %v4777, %v4778
  %v4780 = vadd.f32 %v4779, 1e-05
  %v4781 = vrsqrt.pop %v4780
  %v4782 = vsub.f32 %v4364, %v4739
  %v4783 = vsub.f32 %v4366, %v4739
  %v4784 = vsub.f32 %v4405, %v4739
  %v4785 = vsub.f32 %v4407, %v4739
  %v4786 = vsub.f32 %v4446, %v4739
  %v4787 = vsub.f32 %v4448, %v4739
  %v4788 = vsub.f32 %v4487, %v4739
  %v4789 = vsub.f32 %v4489, %v4739
  %v4790 = vsub.f32 %v4528, %v4739
  %v4791 = vsub.f32 %v4530, %v4739
  %v4792 = vsub.f32 %v4569, %v4739
  %v4793 = vsub.f32 %v4571, %v4739
  %v4794 = vsub.f32 %v4610, %v4739
  %v4795 = vsub.f32 %v4612, %v4739
  %v4796 = vsub.f32 %v4651, %v4739
  %v4797 = vsub.f32 %v4653, %v4739
  %v4798 = vsub.f32 %v4692, %v4739
  %v4799 = vsub.f32 %v4694, %v4739
  %v4800 = vmul.f32 %v4699, %v4781
  %4802 = vset.pattern.permute.xlu0 0
  %4803 = vperm.xlu0 %4802, %v4800
  %v4804 = vpop.permute.xlu0 %4803
  %v4806 = vmul.f32 %v4782, %v4804
  %v4807 = vmul.f32 %v4783, %v4804
  %v4808 = vmul.f32 %v4784, %v4804
  %v4809 = vmul.f32 %v4785, %v4804
  %v4810 = vmul.f32 %v4786, %v4804
  %v4811 = vmul.f32 %v4787, %v4804
  %v4812 = vmul.f32 %v4788, %v4804
  %v4813 = vmul.f32 %v4789, %v4804
  %v4814 = vmul.f32 %v4790, %v4804
  %v4815 = vmul.f32 %v4791, %v4804
  %v4816 = vmul.f32 %v4792, %v4804
  %v4817 = vmul.f32 %v4793, %v4804
  %v4818 = vmul.f32 %v4794, %v4804
  %v4819 = vmul.f32 %v4795, %v4804
  %v4820 = vmul.f32 %v4796, %v4804
  %v4821 = vmul.f32 %v4797, %v4804
  %v4822 = vmul.f32 %v4798, %v4804
  %v4823 = vmul.f32 %v4799, %v4804
  %4825 = vset.pattern.permute.xlu0 0
  %4826 = vperm.xlu0 %4825, %v4701
  %v4827 = vpop.permute.xlu0 %4826
  %v4829 = vadd.f32 %v4806, %v4827
  %v4830 = vadd.f32 %v4807, %v4827
  %v4831 = vadd.f32 %v4808, %v4827
  %v4832 = vadd.f32 %v4809, %v4827
  %v4833 = vadd.f32 %v4810, %v4827
  %v4834 = vadd.f32 %v4811, %v4827
  %v4835 = vadd.f32 %v4812, %v4827
  %v4836 = vadd.f32 %v4813, %v4827
  %v4837 = vadd.f32 %v4814, %v4827
  %v4838 = vadd.f32 %v4815, %v4827
  %v4839 = vadd.f32 %v4816, %v4827
  %v4840 = vadd.f32 %v4817, %v4827
  %v4841 = vadd.f32 %v4818, %v4827
  %v4842 = vadd.f32 %v4819, %v4827
  %v4843 = vadd.f32 %v4820, %v4827
  %v4844 = vadd.f32 %v4821, %v4827
  %v4845 = vadd.f32 %v4822, %v4827
  %v4846 = vadd.f32 %v4823, %v4827
  %v4847 = vadd.f32 %v4829, %v2407
  %v4848 = vadd.f32 %v4830, %v2408
  %v4849 = vadd.f32 %v4831, %v2409
  %v4850 = vadd.f32 %v4832, %v2410
  %v4851 = vadd.f32 %v4833, %v2411
  %v4852 = vadd.f32 %v4834, %v2412
  %v4853 = vadd.f32 %v4835, %v2413
  %v4854 = vadd.f32 %v4836, %v2414
  %v4855 = vadd.f32 %v4837, %v2415
  %v4856 = vadd.f32 %v4838, %v2416
  %v4857 = vadd.f32 %v4839, %v2417
  %v4858 = vadd.f32 %v4840, %v2418
  %v4859 = vadd.f32 %v4841, %v2419
  %v4860 = vadd.f32 %v4842, %v2420
  %v4861 = vadd.f32 %v4843, %v2421
  %v4862 = vadd.f32 %v4844, %v2422
  %v4863 = vadd.f32 %v4845, %v2423
  %v4864 = vadd.f32 %v4846, %v2424
  %v4865 = vmax.f32 %v4847, 0.0
  %v4866 = vmax.f32 %v4848, 0.0
  %v4867 = vmax.f32 %v4849, 0.0
  %v4868 = vmax.f32 %v4850, 0.0
  %v4869 = vmax.f32 %v4851, 0.0
  %v4870 = vmax.f32 %v4852, 0.0
  %v4871 = vmax.f32 %v4853, 0.0
  %v4872 = vmax.f32 %v4854, 0.0
  %v4873 = vmax.f32 %v4855, 0.0
  %v4874 = vmax.f32 %v4856, 0.0
  %v4875 = vmax.f32 %v4857, 0.0
  %v4876 = vmax.f32 %v4858, 0.0
  %v4877 = vmax.f32 %v4859, 0.0
  %v4878 = vmax.f32 %v4860, 0.0
  %v4879 = vmax.f32 %v4861, 0.0
  %v4880 = vmax.f32 %v4862, 0.0
  %v4881 = vmax.f32 %v4863, 0.0
  %v4882 = vmax.f32 %v4864, 0.0
  %4883 = vst [vmem:[%s5] sm:$0xff] %v4865
  %4884 = vst [vmem:[%s5 + $0x8] sm:$0xff] %v4866
  %4885 = vst [vmem:[%s5 + $0x10] sm:$0xff] %v4867
  %4886 = vst [vmem:[%s5 + $0x18] sm:$0xff] %v4868
  %4887 = vst [vmem:[%s5 + $0x20] sm:$0xff] %v4869
  %4888 = vst [vmem:[%s5 + $0x28] sm:$0xff] %v4870
  %4889 = vst [vmem:[%s5 + $0x30] sm:$0xff] %v4871
  %4890 = vst [vmem:[%s5 + $0x38] sm:$0xff] %v4872
  %4891 = vst [vmem:[%s5 + $0x40] sm:$0xff] %v4873
  %4892 = vst [vmem:[%s5 + $0x48] sm:$0xff] %v4874
  %4893 = vst [vmem:[%s5 + $0x50] sm:$0xff] %v4875
  %4894 = vst [vmem:[%s5 + $0x58] sm:$0xff] %v4876
  %4895 = vst [vmem:[%s5 + $0x60] sm:$0xff] %v4877
  %4896 = vst [vmem:[%s5 + $0x68] sm:$0xff] %v4878
  %4897 = vst [vmem:[%s5 + $0x70] sm:$0xff] %v4879
  %4898 = vst [vmem:[%s5 + $0x78] sm:$0xff] %v4880
  %4899 = vst [vmem:[%s5 + $0x80] sm:$0xff] %v4881
  %4900 = vst [vmem:[%s5 + $0x88] sm:$0xff] %v4882
  // Predicated region
  $region22: #{residual_block_forward.1} parent=0 // pred_check
    _
  $region23: #{residual_block_forward.1} parent=0 // pred_check_branch
    %4902 = sbr.rel (0) target = $region25
  $region24: #{residual_block_forward.1} parent=0 // pred_region
    _
  $region25: #{residual_block_forward.1} parent=0 // pred_fallthru
    _
  // Predicated region
  $region26: #{residual_block_forward.1} parent=0 // pred_check
    _
  $region27: #{residual_block_forward.1} parent=0 // pred_check_branch
    %4904 = sbr.rel (0) target = $region29
  $region28: #{residual_block_forward.1} parent=0 // pred_region
    _
  $region29: #{residual_block_forward.1} parent=0 // pred_fallthru
    _

</llo_original>
